<compile_context>
chip_gen: v5e
topology: v5e:2x2
jax: 0.10.0
libtpu: 0.0.40
codegen_flags: <defaults>
</compile_context>

<pallas_src>
import functools
import math

import jax
import jax.numpy as jnp
from jax.experimental import pallas as pl
from jax.experimental.pallas import tpu as pltpu

EPS = 1e-5


# ---------------------------------------------------------------------------
# Fully fused PreActBlock kernel (one image per grid step)
# ---------------------------------------------------------------------------
def _preact_block_kernel(x_ref, s1_ref, b1_ref, w1_ref, s2_ref, b2_ref, w2_ref,
                         o_ref,
                         act1_ref, lhs1_ref, act2_ref, lhs2_ref,
                         *, stride, hin, win, hout, wout, has_shortcut):
    s = stride
    ss = s * s
    _, _, hps, wps, cin = x_ref.shape
    planes = o_ref.shape[-1]
    p = hout * wout

    scale1 = s1_ref[...].reshape(1, 1, cin)
    bias1 = b1_ref[...].reshape(1, 1, cin)

    # ---- BN1 + ReLU prologue fused with the conv-padding validity mask ------
    # Input arrives zero-padded and phase-decomposed; the mask (VPU select, no
    # partial stores) kills the ReLU(bias) that BN would inject at pad positions.
    for k in range(ss):
        pr, pc = k // s, k % s
        row = jax.lax.broadcasted_iota(jnp.int32, (hps, wps, cin), 0) * s + pr
        col = jax.lax.broadcasted_iota(jnp.int32, (hps, wps, cin), 1) * s + pc
        valid = (row >= 1) & (row <= hin) & (col >= 1) & (col <= win)
        a = jnp.maximum(x_ref[0, k].astype(jnp.float32) * scale1 + bias1, 0.0)
        act1_ref[k] = jnp.where(valid, a, 0.0).astype(jnp.bfloat16)

    # ---- pack the 9 conv1 taps into one (P, 9*Cin) bf16 lhs -----------------
    for di in range(3):
        for dj in range(3):
            k = (di % s) * s + (dj % s)
            tap = act1_ref[k, di // s: di // s + hout, dj // s: dj // s + wout, :]
            t = di * 3 + dj
            lhs1_ref[:, t * cin:(t + 1) * cin] = tap.reshape(p, cin)

    # ---- conv1 (+ fused 1x1-shortcut columns) as ONE MXU matmul -------------
    big = jnp.dot(lhs1_ref[...], w1_ref[...], preferred_element_type=jnp.float32)
    if has_shortcut:
        h1 = big[:, :planes]
        resid = big[:, planes:]                 # 1x1 shortcut conv output (f32)
    else:
        h1 = big
        # Identity shortcut == raw (pre-BN) input interior; stride is 1 here.
        resid = x_ref[0, 0, 1:1 + hout, 1:1 + wout, :].reshape(p, cin).astype(
            jnp.float32)

    # ---- BN2 + ReLU, stored bf16 into the zero-padded act2 scratch ----------
    scale2 = s2_ref[...].reshape(1, planes)
    bias2 = b2_ref[...].reshape(1, planes)
    h1a = jnp.maximum(h1 * scale2 + bias2, 0.0).astype(jnp.bfloat16)
    # Dense zero each step keeps the pad border correct even when the grid is
    # sharded across TensorCores (scratch is per-core).
    act2_ref[...] = jnp.zeros(act2_ref.shape, act2_ref.dtype)
    act2_ref[1:1 + hout, 1:1 + wout, :] = h1a.reshape(hout, wout, planes)

    # ---- pack the 9 conv2 taps (stride 1) ------------------------------------
    for di in range(3):
        for dj in range(3):
            t = di * 3 + dj
            tap = act2_ref[di:di + hout, dj:dj + wout, :]
            lhs2_ref[:, t * planes:(t + 1) * planes] = tap.reshape(p, planes)

    # ---- conv2 as ONE MXU matmul + fused residual add ------------------------
    out = jnp.dot(lhs2_ref[...], w2_ref[...], preferred_element_type=jnp.float32)
    o_ref[0] = (out + resid).astype(o_ref.dtype)


def _pad_and_phase(x, stride):
    """(N,H,W,C) -> (N, s*s, ceil((H+2)/s), ceil((W+2)/s), C).

    Zero-pads by one pixel (conv padding) and phase-decomposes rows/cols modulo
    the stride so the kernel only needs static contiguous slices.  For stride 1
    this is just the padded input with a leading size-1 phase dim."""
    n, h, w, c = x.shape
    s = stride
    hp2 = -(-(h + 2) // s) * s
    wp2 = -(-(w + 2) // s) * s
    xp = jnp.pad(x, ((0, 0), (1, hp2 - h - 1), (1, wp2 - w - 1), (0, 0)))
    xp = xp.reshape(n, hp2 // s, s, wp2 // s, s, c)
    xp = jnp.transpose(xp, (0, 2, 4, 1, 3, 5))
    return xp.reshape(n, s * s, hp2 // s, wp2 // s, c)


def _fold_bn(bn):
    scale = bn["gamma"] / jnp.sqrt(bn["var"] + EPS)
    bias = bn["beta"] - bn["mean"] * scale
    return scale, bias


# ---------------------------------------------------------------------------
# PreActBlock parameters & forward
# ---------------------------------------------------------------------------
def init_preact_block_params(key, in_planes, planes, stride):
    ks = jax.random.split(key, 12)

    def bnp(k0, k1, k2, k3, c):
        return dict(
            gamma=jax.random.uniform(k0, (c,), jnp.float32, 0.5, 1.5),
            beta=0.1 * jax.random.normal(k1, (c,), jnp.float32),
            mean=0.1 * jax.random.normal(k2, (c,), jnp.float32),
            var=jax.random.uniform(k3, (c,), jnp.float32, 0.5, 1.5),
        )

    params = dict(
        bn1=bnp(ks[0], ks[1], ks[2], ks[3], in_planes),
        bn2=bnp(ks[4], ks[5], ks[6], ks[7], planes),
        conv1_w=jax.random.normal(ks[8], (planes, in_planes, 3, 3), jnp.float32)
        / math.sqrt(9 * in_planes),
        conv2_w=jax.random.normal(ks[9], (planes, planes, 3, 3), jnp.float32)
        / math.sqrt(9 * planes),
    )
    if stride != 1 or in_planes != planes:            # expansion == 1
        params["shortcut_w"] = (
            jax.random.normal(ks[10], (planes, in_planes, 1, 1), jnp.float32)
            / math.sqrt(in_planes))
    return params


def preact_block_forward(x_nchw, params, stride):
    """Pallas implementation of PreActBlock.forward.  x_nchw: (N, C, H, W) f32."""
    x = jnp.transpose(x_nchw, (0, 2, 3, 1))           # NCHW -> NHWC (once)
    n, h, w, cin = x.shape
    planes = params["conv1_w"].shape[0]
    s = stride
    hout = (h - 1) // s + 1
    wout = (w - 1) // s + 1
    p = hout * wout
    has_shortcut = "shortcut_w" in params

    s1, b1 = _fold_bn(params["bn1"])
    s2, b2 = _fold_bn(params["bn2"])

    # Pack conv weights tap-major / channel-minor: row (di*3+dj)*cin + ci.
    w1 = jnp.transpose(params["conv1_w"], (2, 3, 1, 0)).reshape(9 * cin, planes)
    if has_shortcut:
        # Fold the 1x1 shortcut conv into extra output columns of the conv1
        # matmul (only the centre-tap rows are non-zero).
        wsc = jnp.transpose(params["shortcut_w"].reshape(planes, cin), (1, 0))
        wsc_full = jnp.zeros((9 * cin, planes), w1.dtype)
        wsc_full = wsc_full.at[4 * cin:5 * cin, :].set(wsc)
        w1 = jnp.concatenate([w1, wsc_full], axis=1)   # (9*cin, 2*planes)
    w2 = jnp.transpose(params["conv2_w"], (2, 3, 1, 0)).reshape(9 * planes, planes)
    w1 = w1.astype(jnp.bfloat16)
    w2 = w2.astype(jnp.bfloat16)
    couts1 = w1.shape[1]

    xph = _pad_and_phase(x, s)
    hps, wps = xph.shape[2], xph.shape[3]

    kern = functools.partial(
        _preact_block_kernel, stride=s, hin=h, win=w, hout=hout, wout=wout,
        has_shortcut=has_shortcut)

    flops = 2 * n * p * (9 * cin) * couts1 + 2 * n * p * (9 * planes) * planes
    bytes_accessed = (int(xph.size) * 4 + int(w1.size) * 2 + int(w2.size) * 2
                      + n * p * planes * 4 + 2 * (cin + planes) * 4)

    out = pl.pallas_call(
        kern,
        out_shape=jax.ShapeDtypeStruct((n, p, planes), jnp.float32),
        grid=(n,),
        in_specs=[
            pl.BlockSpec((1, s * s, hps, wps, cin), lambda i: (i, 0, 0, 0, 0)),
            pl.BlockSpec((1, cin), lambda i: (0, 0)),
            pl.BlockSpec((1, cin), lambda i: (0, 0)),
            pl.BlockSpec((9 * cin, couts1), lambda i: (0, 0)),
            pl.BlockSpec((1, planes), lambda i: (0, 0)),
            pl.BlockSpec((1, planes), lambda i: (0, 0)),
            pl.BlockSpec((9 * planes, planes), lambda i: (0, 0)),
        ],
        out_specs=pl.BlockSpec((1, p, planes), lambda i: (i, 0, 0)),
        scratch_shapes=[
            pltpu.VMEM((s * s, hps, wps, cin), jnp.bfloat16),        # act1 (bf16)
            pltpu.VMEM((p, 9 * cin), jnp.bfloat16),                  # packed lhs 1
            pltpu.VMEM((hout + 2, wout + 2, planes), jnp.bfloat16),  # act2 padded
            pltpu.VMEM((p, 9 * planes), jnp.bfloat16),               # packed lhs 2
        ],
        compiler_params=pltpu.CompilerParams(
            dimension_semantics=("parallel",)),
        cost_estimate=pl.CostEstimate(flops=int(flops), transcendentals=0,
                                      bytes_accessed=int(bytes_accessed)),
    )(xph, s1.reshape(1, cin), b1.reshape(1, cin), w1,
      s2.reshape(1, planes), b2.reshape(1, planes), w2)

    out = out.reshape(n, hout, wout, planes)
    return jnp.transpose(out, (0, 3, 1, 2))           # NHWC -> NCHW (once)


# ---------------------------------------------------------------------------
# Pure-JAX references (NCHW, mirrors the PyTorch module with inference-mode BN)
# ---------------------------------------------------------------------------
def preact_block_reference(x, params, stride, match_bf16=False):
    def bn(v, prm):
        sh = (1, -1, 1, 1)
        return ((v - prm["mean"].reshape(sh))
                / jnp.sqrt(prm["var"].reshape(sh) + EPS)
                * prm["gamma"].reshape(sh) + prm["beta"].reshape(sh))

    def conv(v, wt, s, pad):
        if match_bf16:
            v = v.astype(jnp.bfloat16)
            wt = wt.astype(jnp.bfloat16)
        return jax.lax.conv_general_dilated(
            v, wt, (s, s), pad, dimension_numbers=("NCHW", "OIHW", "NCHW"),
            preferred_element_type=jnp.float32,
            precision=None if match_bf16 else jax.lax.Precision.HIGHEST)

    out = jax.nn.relu(bn(x, params["bn1"]))
    if "shortcut_w" in params:
        shortcut = conv(out, params["shortcut_w"], stride, "VALID")
    else:
        shortcut = x
    h = conv(out, params["conv1_w"], stride, [(1, 1), (1, 1)])
    h = jax.nn.relu(bn(h, params["bn2"]))
    return conv(h, params["conv2_w"], 1, [(1, 1), (1, 1)]) + shortcut


if __name__ == "__main__":
    key = jax.random.PRNGKey(0)
    kx, kp1, kp2, kx2 = jax.random.split(key, 4)

    fwd = jax.jit(preact_block_forward, static_argnames=("stride",))

    # Config 1: strided transition block with a 1x1-conv shortcut.
    n, in_planes, planes, hh, ww, stride = 2, 64, 128, 16, 16, 2
    x = jax.random.normal(kx, (n, in_planes, hh, ww), jnp.float32)
    params = init_preact_block_params(kp1, in_planes, planes, stride)
    y = jax.block_until_ready(fwd(x, params, stride=stride))
    assert y.shape == (n, planes, hh // stride, ww // stride)
    y_ref_bf = preact_block_reference(x, params, stride, match_bf16=True)
    y_ref_32 = preact_block_reference(x, params, stride)
    assert jnp.allclose(y, y_ref_bf, rtol=5e-3, atol=5e-3), \
        float(jnp.max(jnp.abs(y - y_ref_bf)))
    assert jnp.allclose(y, y_ref_32, rtol=5e-2, atol=5e-2), \
        float(jnp.max(jnp.abs(y - y_ref_32)))

    # Config 2: identity shortcut (stride=1, in_planes == planes).
    n2, planes2, hh2 = 2, 128, 8
    x2 = jax.random.normal(kx2, (n2, planes2, hh2, hh2), jnp.float32)
    params2 = init_preact_block_params(kp2, planes2, planes2, 1)
    y2 = jax.block_until_ready(fwd(x2, params2, stride=1))
    assert y2.shape == (n2, planes2, hh2, hh2)
    y2_ref_bf = preact_block_reference(x2, params2, 1, match_bf16=True)
    y2_ref_32 = preact_block_reference(x2, params2, 1)
    assert jnp.allclose(y2, y2_ref_bf, rtol=5e-3, atol=5e-3), \
        float(jnp.max(jnp.abs(y2 - y2_ref_bf)))
    assert jnp.allclose(y2, y2_ref_32, rtol=5e-2, atol=5e-2), \
        float(jnp.max(jnp.abs(y2 - y2_ref_32)))

    print("KERNEL_OK")
</pallas_src>

<mosaic_0001>
module attributes {stable_mosaic.version = 11 : i64} {
  func.func @_preact_block_kernel(%arg0: i32, %arg1: memref<1x4x9x9x64xf32, #tpu.memory_space<vmem>>, %arg2: memref<1x64xf32, #tpu.memory_space<vmem>>, %arg3: memref<1x64xf32, #tpu.memory_space<vmem>>, %arg4: memref<576x256xbf16, #tpu.memory_space<vmem>>, %arg5: memref<1x128xf32, #tpu.memory_space<vmem>>, %arg6: memref<1x128xf32, #tpu.memory_space<vmem>>, %arg7: memref<1152x128xbf16, #tpu.memory_space<vmem>>, %arg8: memref<1x64x128xf32, #tpu.memory_space<vmem>>, %arg9: memref<4x9x9x64xbf16, #tpu.memory_space<vmem>>, %arg10: memref<64x576xbf16, #tpu.memory_space<vmem>>, %arg11: memref<10x10x128xbf16, #tpu.memory_space<vmem>>, %arg12: memref<64x1152xbf16, #tpu.memory_space<vmem>>) attributes {dimension_semantics = [#tpu.dimension_semantics<parallel>], iteration_bounds = array<i64: 2>, scalar_prefetch = 0 : i64, scratch_operands = 4 : i64, tpu.core_type = #tpu.core_type<tc>, window_params = [{transform_indices = @transform_0, window_bounds = array<i64: 1, 4, 9, 9, 64>}, {pipeline_mode = #tpu.pipeline_mode<synchronous>, transform_indices = @transform_1, window_bounds = array<i64: 1, 64>}, {pipeline_mode = #tpu.pipeline_mode<synchronous>, transform_indices = @transform_2, window_bounds = array<i64: 1, 64>}, {pipeline_mode = #tpu.pipeline_mode<synchronous>, transform_indices = @transform_3, window_bounds = array<i64: 576, 256>}, {pipeline_mode = #tpu.pipeline_mode<synchronous>, transform_indices = @transform_4, window_bounds = array<i64: 1, 128>}, {pipeline_mode = #tpu.pipeline_mode<synchronous>, transform_indices = @transform_5, window_bounds = array<i64: 1, 128>}, {pipeline_mode = #tpu.pipeline_mode<synchronous>, transform_indices = @transform_6, window_bounds = array<i64: 1152, 128>}, {transform_indices = @transform_7, window_bounds = array<i64: 1, 64, 128>}]} {
    %c0 = arith.constant 0 : index
    %c0_0 = arith.constant 0 : index
    %0 = vector.load %arg2[%c0, %c0_0] : memref<1x64xf32, #tpu.memory_space<vmem>>, vector<1x64xf32>
    %1 = vector.shape_cast %0 : vector<1x64xf32> to vector<1x1x64xf32>
    %c0_1 = arith.constant 0 : index
    %c0_2 = arith.constant 0 : index
    %2 = vector.load %arg3[%c0_1, %c0_2] : memref<1x64xf32, #tpu.memory_space<vmem>>, vector<1x64xf32>
    %3 = vector.shape_cast %2 : vector<1x64xf32> to vector<1x1x64xf32>
    %4 = tpu.iota {dimensions = array<i32: 0>} : vector<9x9x64xi32>
    %c2_i32 = arith.constant 2 : i32
    %5 = vector.broadcast %c2_i32 : i32 to vector<9x9x64xi32>
    %6 = arith.muli %4, %5 : vector<9x9x64xi32>
    %c0_i32 = arith.constant 0 : i32
    %7 = vector.broadcast %c0_i32 : i32 to vector<9x9x64xi32>
    %8 = arith.addi %6, %7 : vector<9x9x64xi32>
    %9 = tpu.iota {dimensions = array<i32: 1>} : vector<9x9x64xi32>
    %c2_i32_3 = arith.constant 2 : i32
    %10 = vector.broadcast %c2_i32_3 : i32 to vector<9x9x64xi32>
    %11 = arith.muli %9, %10 : vector<9x9x64xi32>
    %c0_i32_4 = arith.constant 0 : i32
    %12 = vector.broadcast %c0_i32_4 : i32 to vector<9x9x64xi32>
    %13 = arith.addi %11, %12 : vector<9x9x64xi32>
    %c1_i32 = arith.constant 1 : i32
    %14 = vector.broadcast %c1_i32 : i32 to vector<9x9x64xi32>
    %15 = arith.cmpi sge, %8, %14 : vector<9x9x64xi32>
    %c16_i32 = arith.constant 16 : i32
    %16 = vector.broadcast %c16_i32 : i32 to vector<9x9x64xi32>
    %17 = arith.cmpi sle, %8, %16 : vector<9x9x64xi32>
    %18 = arith.andi %15, %17 : vector<9x9x64xi1>
    %c1_i32_5 = arith.constant 1 : i32
    %19 = vector.broadcast %c1_i32_5 : i32 to vector<9x9x64xi32>
    %20 = arith.cmpi sge, %13, %19 : vector<9x9x64xi32>
    %21 = arith.andi %18, %20 : vector<9x9x64xi1>
    %c16_i32_6 = arith.constant 16 : i32
    %22 = vector.broadcast %c16_i32_6 : i32 to vector<9x9x64xi32>
    %23 = arith.cmpi sle, %13, %22 : vector<9x9x64xi32>
    %24 = arith.andi %21, %23 : vector<9x9x64xi1>
    %c0_7 = arith.constant 0 : index
    %c0_8 = arith.constant 0 : index
    %c0_9 = arith.constant 0 : index
    %c0_10 = arith.constant 0 : index
    %c0_11 = arith.constant 0 : index
    %25 = vector.load %arg1[%c0_7, %c0_8, %c0_9, %c0_10, %c0_11] : memref<1x4x9x9x64xf32, #tpu.memory_space<vmem>>, vector<1x1x9x9x64xf32>
    %26 = vector.shape_cast %25 : vector<1x1x9x9x64xf32> to vector<9x9x64xf32>
    %27 = vector.broadcast %1 : vector<1x1x64xf32> to vector<9x9x64xf32>
    %28 = arith.mulf %26, %27 : vector<9x9x64xf32>
    %29 = vector.broadcast %3 : vector<1x1x64xf32> to vector<9x9x64xf32>
    %30 = arith.addf %28, %29 : vector<9x9x64xf32>
    %cst = arith.constant 0.000000e+00 : f32
    %31 = vector.broadcast %cst : f32 to vector<9x9x64xf32>
    %32 = arith.maximumf %30, %31 : vector<9x9x64xf32>
    %cst_12 = arith.constant 0.000000e+00 : f32
    %33 = vector.broadcast %cst_12 : f32 to vector<9x9x64xf32>
    %34 = arith.select %24, %32, %33 : vector<9x9x64xi1>, vector<9x9x64xf32>
    %35 = arith.truncf %34 : vector<9x9x64xf32> to vector<9x9x64xbf16>
    %c0_13 = arith.constant 0 : index
    %c0_14 = arith.constant 0 : index
    %c0_15 = arith.constant 0 : index
    %c0_16 = arith.constant 0 : index
    %36 = vector.load %arg9[%c0_13, %c0_14, %c0_15, %c0_16] : memref<4x9x9x64xbf16, #tpu.memory_space<vmem>>, vector<1x9x9x64xbf16>
    %37 = vector.shape_cast %36 : vector<1x9x9x64xbf16> to vector<9x9x64xbf16>
    %38 = vector.shape_cast %35 : vector<9x9x64xbf16> to vector<1x9x9x64xbf16>
    tpu.vector_store %arg9[%c0_13, %c0_14, %c0_15, %c0_16], %38 {strides = array<i32>} : memref<4x9x9x64xbf16, #tpu.memory_space<vmem>>, vector<1x9x9x64xbf16>,
    %39 = tpu.iota {dimensions = array<i32: 0>} : vector<9x9x64xi32>
    %c2_i32_17 = arith.constant 2 : i32
    %40 = vector.broadcast %c2_i32_17 : i32 to vector<9x9x64xi32>
    %41 = arith.muli %39, %40 : vector<9x9x64xi32>
    %c0_i32_18 = arith.constant 0 : i32
    %42 = vector.broadcast %c0_i32_18 : i32 to vector<9x9x64xi32>
    %43 = arith.addi %41, %42 : vector<9x9x64xi32>
    %44 = tpu.iota {dimensions = array<i32: 1>} : vector<9x9x64xi32>
    %c2_i32_19 = arith.constant 2 : i32
    %45 = vector.broadcast %c2_i32_19 : i32 to vector<9x9x64xi32>
    %46 = arith.muli %44, %45 : vector<9x9x64xi32>
    %c1_i32_20 = arith.constant 1 : i32
    %47 = vector.broadcast %c1_i32_20 : i32 to vector<9x9x64xi32>
    %48 = arith.addi %46, %47 : vector<9x9x64xi32>
    %c1_i32_21 = arith.constant 1 : i32
    %49 = vector.broadcast %c1_i32_21 : i32 to vector<9x9x64xi32>
    %50 = arith.cmpi sge, %43, %49 : vector<9x9x64xi32>
    %c16_i32_22 = arith.constant 16 : i32
    %51 = vector.broadcast %c16_i32_22 : i32 to vector<9x9x64xi32>
    %52 = arith.cmpi sle, %43, %51 : vector<9x9x64xi32>
    %53 = arith.andi %50, %52 : vector<9x9x64xi1>
    %c1_i32_23 = arith.constant 1 : i32
    %54 = vector.broadcast %c1_i32_23 : i32 to vector<9x9x64xi32>
    %55 = arith.cmpi sge, %48, %54 : vector<9x9x64xi32>
    %56 = arith.andi %53, %55 : vector<9x9x64xi1>
    %c16_i32_24 = arith.constant 16 : i32
    %57 = vector.broadcast %c16_i32_24 : i32 to vector<9x9x64xi32>
    %58 = arith.cmpi sle, %48, %57 : vector<9x9x64xi32>
    %59 = arith.andi %56, %58 : vector<9x9x64xi1>
    %c0_25 = arith.constant 0 : index
    %c1 = arith.constant 1 : index
    %c0_26 = arith.constant 0 : index
    %c0_27 = arith.constant 0 : index
    %c0_28 = arith.constant 0 : index
    %60 = vector.load %arg1[%c0_25, %c1, %c0_26, %c0_27, %c0_28] : memref<1x4x9x9x64xf32, #tpu.memory_space<vmem>>, vector<1x1x9x9x64xf32>
    %61 = vector.shape_cast %60 : vector<1x1x9x9x64xf32> to vector<9x9x64xf32>
    %62 = vector.broadcast %1 : vector<1x1x64xf32> to vector<9x9x64xf32>
    %63 = arith.mulf %61, %62 : vector<9x9x64xf32>
    %64 = vector.broadcast %3 : vector<1x1x64xf32> to vector<9x9x64xf32>
    %65 = arith.addf %63, %64 : vector<9x9x64xf32>
    %cst_29 = arith.constant 0.000000e+00 : f32
    %66 = vector.broadcast %cst_29 : f32 to vector<9x9x64xf32>
    %67 = arith.maximumf %65, %66 : vector<9x9x64xf32>
    %cst_30 = arith.constant 0.000000e+00 : f32
    %68 = vector.broadcast %cst_30 : f32 to vector<9x9x64xf32>
    %69 = arith.select %59, %67, %68 : vector<9x9x64xi1>, vector<9x9x64xf32>
    %70 = arith.truncf %69 : vector<9x9x64xf32> to vector<9x9x64xbf16>
    %c1_31 = arith.constant 1 : index
    %c0_32 = arith.constant 0 : index
    %c0_33 = arith.constant 0 : index
    %c0_34 = arith.constant 0 : index
    %71 = vector.load %arg9[%c1_31, %c0_32, %c0_33, %c0_34] : memref<4x9x9x64xbf16, #tpu.memory_space<vmem>>, vector<1x9x9x64xbf16>
    %72 = vector.shape_cast %71 : vector<1x9x9x64xbf16> to vector<9x9x64xbf16>
    %73 = vector.shape_cast %70 : vector<9x9x64xbf16> to vector<1x9x9x64xbf16>
    tpu.vector_store %arg9[%c1_31, %c0_32, %c0_33, %c0_34], %73 {strides = array<i32>} : memref<4x9x9x64xbf16, #tpu.memory_space<vmem>>, vector<1x9x9x64xbf16>,
    %74 = tpu.iota {dimensions = array<i32: 0>} : vector<9x9x64xi32>
    %c2_i32_35 = arith.constant 2 : i32
    %75 = vector.broadcast %c2_i32_35 : i32 to vector<9x9x64xi32>
    %76 = arith.muli %74, %75 : vector<9x9x64xi32>
    %c1_i32_36 = arith.constant 1 : i32
    %77 = vector.broadcast %c1_i32_36 : i32 to vector<9x9x64xi32>
    %78 = arith.addi %76, %77 : vector<9x9x64xi32>
    %79 = tpu.iota {dimensions = array<i32: 1>} : vector<9x9x64xi32>
    %c2_i32_37 = arith.constant 2 : i32
    %80 = vector.broadcast %c2_i32_37 : i32 to vector<9x9x64xi32>
    %81 = arith.muli %79, %80 : vector<9x9x64xi32>
    %c0_i32_38 = arith.constant 0 : i32
    %82 = vector.broadcast %c0_i32_38 : i32 to vector<9x9x64xi32>
    %83 = arith.addi %81, %82 : vector<9x9x64xi32>
    %c1_i32_39 = arith.constant 1 : i32
    %84 = vector.broadcast %c1_i32_39 : i32 to vector<9x9x64xi32>
    %85 = arith.cmpi sge, %78, %84 : vector<9x9x64xi32>
    %c16_i32_40 = arith.constant 16 : i32
    %86 = vector.broadcast %c16_i32_40 : i32 to vector<9x9x64xi32>
    %87 = arith.cmpi sle, %78, %86 : vector<9x9x64xi32>
    %88 = arith.andi %85, %87 : vector<9x9x64xi1>
    %c1_i32_41 = arith.constant 1 : i32
    %89 = vector.broadcast %c1_i32_41 : i32 to vector<9x9x64xi32>
    %90 = arith.cmpi sge, %83, %89 : vector<9x9x64xi32>
    %91 = arith.andi %88, %90 : vector<9x9x64xi1>
    %c16_i32_42 = arith.constant 16 : i32
    %92 = vector.broadcast %c16_i32_42 : i32 to vector<9x9x64xi32>
    %93 = arith.cmpi sle, %83, %92 : vector<9x9x64xi32>
    %94 = arith.andi %91, %93 : vector<9x9x64xi1>
    %c0_43 = arith.constant 0 : index
    %c2 = arith.constant 2 : index
    %c0_44 = arith.constant 0 : index
    %c0_45 = arith.constant 0 : index
    %c0_46 = arith.constant 0 : index
    %95 = vector.load %arg1[%c0_43, %c2, %c0_44, %c0_45, %c0_46] : memref<1x4x9x9x64xf32, #tpu.memory_space<vmem>>, vector<1x1x9x9x64xf32>
    %96 = vector.shape_cast %95 : vector<1x1x9x9x64xf32> to vector<9x9x64xf32>
    %97 = vector.broadcast %1 : vector<1x1x64xf32> to vector<9x9x64xf32>
    %98 = arith.mulf %96, %97 : vector<9x9x64xf32>
    %99 = vector.broadcast %3 : vector<1x1x64xf32> to vector<9x9x64xf32>
    %100 = arith.addf %98, %99 : vector<9x9x64xf32>
    %cst_47 = arith.constant 0.000000e+00 : f32
    %101 = vector.broadcast %cst_47 : f32 to vector<9x9x64xf32>
    %102 = arith.maximumf %100, %101 : vector<9x9x64xf32>
    %cst_48 = arith.constant 0.000000e+00 : f32
    %103 = vector.broadcast %cst_48 : f32 to vector<9x9x64xf32>
    %104 = arith.select %94, %102, %103 : vector<9x9x64xi1>, vector<9x9x64xf32>
    %105 = arith.truncf %104 : vector<9x9x64xf32> to vector<9x9x64xbf16>
    %c2_49 = arith.constant 2 : index
    %c0_50 = arith.constant 0 : index
    %c0_51 = arith.constant 0 : index
    %c0_52 = arith.constant 0 : index
    %106 = vector.load %arg9[%c2_49, %c0_50, %c0_51, %c0_52] : memref<4x9x9x64xbf16, #tpu.memory_space<vmem>>, vector<1x9x9x64xbf16>
    %107 = vector.shape_cast %106 : vector<1x9x9x64xbf16> to vector<9x9x64xbf16>
    %108 = vector.shape_cast %105 : vector<9x9x64xbf16> to vector<1x9x9x64xbf16>
    tpu.vector_store %arg9[%c2_49, %c0_50, %c0_51, %c0_52], %108 {strides = array<i32>} : memref<4x9x9x64xbf16, #tpu.memory_space<vmem>>, vector<1x9x9x64xbf16>,
    %109 = tpu.iota {dimensions = array<i32: 0>} : vector<9x9x64xi32>
    %c2_i32_53 = arith.constant 2 : i32
    %110 = vector.broadcast %c2_i32_53 : i32 to vector<9x9x64xi32>
    %111 = arith.muli %109, %110 : vector<9x9x64xi32>
    %c1_i32_54 = arith.constant 1 : i32
    %112 = vector.broadcast %c1_i32_54 : i32 to vector<9x9x64xi32>
    %113 = arith.addi %111, %112 : vector<9x9x64xi32>
    %114 = tpu.iota {dimensions = array<i32: 1>} : vector<9x9x64xi32>
    %c2_i32_55 = arith.constant 2 : i32
    %115 = vector.broadcast %c2_i32_55 : i32 to vector<9x9x64xi32>
    %116 = arith.muli %114, %115 : vector<9x9x64xi32>
    %c1_i32_56 = arith.constant 1 : i32
    %117 = vector.broadcast %c1_i32_56 : i32 to vector<9x9x64xi32>
    %118 = arith.addi %116, %117 : vector<9x9x64xi32>
    %c1_i32_57 = arith.constant 1 : i32
    %119 = vector.broadcast %c1_i32_57 : i32 to vector<9x9x64xi32>
    %120 = arith.cmpi sge, %113, %119 : vector<9x9x64xi32>
    %c16_i32_58 = arith.constant 16 : i32
    %121 = vector.broadcast %c16_i32_58 : i32 to vector<9x9x64xi32>
    %122 = arith.cmpi sle, %113, %121 : vector<9x9x64xi32>
    %123 = arith.andi %120, %122 : vector<9x9x64xi1>
    %c1_i32_59 = arith.constant 1 : i32
    %124 = vector.broadcast %c1_i32_59 : i32 to vector<9x9x64xi32>
    %125 = arith.cmpi sge, %118, %124 : vector<9x9x64xi32>
    %126 = arith.andi %123, %125 : vector<9x9x64xi1>
    %c16_i32_60 = arith.constant 16 : i32
    %127 = vector.broadcast %c16_i32_60 : i32 to vector<9x9x64xi32>
    %128 = arith.cmpi sle, %118, %127 : vector<9x9x64xi32>
    %129 = arith.andi %126, %128 : vector<9x9x64xi1>
    %c0_61 = arith.constant 0 : index
    %c3 = arith.constant 3 : index
    %c0_62 = arith.constant 0 : index
    %c0_63 = arith.constant 0 : index
    %c0_64 = arith.constant 0 : index
    %130 = vector.load %arg1[%c0_61, %c3, %c0_62, %c0_63, %c0_64] : memref<1x4x9x9x64xf32, #tpu.memory_space<vmem>>, vector<1x1x9x9x64xf32>
    %131 = vector.shape_cast %130 : vector<1x1x9x9x64xf32> to vector<9x9x64xf32>
    %132 = vector.broadcast %1 : vector<1x1x64xf32> to vector<9x9x64xf32>
    %133 = arith.mulf %131, %132 : vector<9x9x64xf32>
    %134 = vector.broadcast %3 : vector<1x1x64xf32> to vector<9x9x64xf32>
    %135 = arith.addf %133, %134 : vector<9x9x64xf32>
    %cst_65 = arith.constant 0.000000e+00 : f32
    %136 = vector.broadcast %cst_65 : f32 to vector<9x9x64xf32>
    %137 = arith.maximumf %135, %136 : vector<9x9x64xf32>
    %cst_66 = arith.constant 0.000000e+00 : f32
    %138 = vector.broadcast %cst_66 : f32 to vector<9x9x64xf32>
    %139 = arith.select %129, %137, %138 : vector<9x9x64xi1>, vector<9x9x64xf32>
    %140 = arith.truncf %139 : vector<9x9x64xf32> to vector<9x9x64xbf16>
    %c3_67 = arith.constant 3 : index
    %c0_68 = arith.constant 0 : index
    %c0_69 = arith.constant 0 : index
    %c0_70 = arith.constant 0 : index
    %141 = vector.load %arg9[%c3_67, %c0_68, %c0_69, %c0_70] : memref<4x9x9x64xbf16, #tpu.memory_space<vmem>>, vector<1x9x9x64xbf16>
    %142 = vector.shape_cast %141 : vector<1x9x9x64xbf16> to vector<9x9x64xbf16>
    %143 = vector.shape_cast %140 : vector<9x9x64xbf16> to vector<1x9x9x64xbf16>
    tpu.vector_store %arg9[%c3_67, %c0_68, %c0_69, %c0_70], %143 {strides = array<i32>} : memref<4x9x9x64xbf16, #tpu.memory_space<vmem>>, vector<1x9x9x64xbf16>,
    %c0_71 = arith.constant 0 : index
    %c0_72 = arith.constant 0 : index
    %c0_73 = arith.constant 0 : index
    %c0_74 = arith.constant 0 : index
    %144 = vector.load %arg9[%c0_71, %c0_72, %c0_73, %c0_74] : memref<4x9x9x64xbf16, #tpu.memory_space<vmem>>, vector<1x8x8x64xbf16>
    %145 = vector.shape_cast %144 : vector<1x8x8x64xbf16> to vector<8x8x64xbf16>
    %146 = vector.shape_cast %145 : vector<8x8x64xbf16> to vector<64x64xbf16>
    %c0_75 = arith.constant 0 : index
    %c0_76 = arith.constant 0 : index
    %147 = vector.load %arg10[%c0_75, %c0_76] : memref<64x576xbf16, #tpu.memory_space<vmem>>, vector<64x64xbf16>
    tpu.vector_store %arg10[%c0_75, %c0_76], %146 {strides = array<i32>} : memref<64x576xbf16, #tpu.memory_space<vmem>>, vector<64x64xbf16>,
    %c1_77 = arith.constant 1 : index
    %c0_78 = arith.constant 0 : index
    %c0_79 = arith.constant 0 : index
    %c0_80 = arith.constant 0 : index
    %148 = vector.load %arg9[%c1_77, %c0_78, %c0_79, %c0_80] : memref<4x9x9x64xbf16, #tpu.memory_space<vmem>>, vector<1x8x8x64xbf16>
    %149 = vector.shape_cast %148 : vector<1x8x8x64xbf16> to vector<8x8x64xbf16>
    %150 = vector.shape_cast %149 : vector<8x8x64xbf16> to vector<64x64xbf16>
    %c0_81 = arith.constant 0 : index
    %c64 = arith.constant 64 : index
    %151 = vector.load %arg10[%c0_81, %c64] : memref<64x576xbf16, #tpu.memory_space<vmem>>, vector<64x64xbf16>
    tpu.vector_store %arg10[%c0_81, %c64], %150 {strides = array<i32>} : memref<64x576xbf16, #tpu.memory_space<vmem>>, vector<64x64xbf16>,
    %c0_82 = arith.constant 0 : index
    %c0_83 = arith.constant 0 : index
    %c1_84 = arith.constant 1 : index
    %c0_85 = arith.constant 0 : index
    %152 = vector.load %arg9[%c0_82, %c0_83, %c1_84, %c0_85] : memref<4x9x9x64xbf16, #tpu.memory_space<vmem>>, vector<1x8x8x64xbf16>
    %153 = vector.shape_cast %152 : vector<1x8x8x64xbf16> to vector<8x8x64xbf16>
    %154 = vector.shape_cast %153 : vector<8x8x64xbf16> to vector<64x64xbf16>
    %c0_86 = arith.constant 0 : index
    %c128 = arith.constant 128 : index
    %155 = vector.load %arg10[%c0_86, %c128] : memref<64x576xbf16, #tpu.memory_space<vmem>>, vector<64x64xbf16>
    tpu.vector_store %arg10[%c0_86, %c128], %154 {strides = array<i32>} : memref<64x576xbf16, #tpu.memory_space<vmem>>, vector<64x64xbf16>,
    %c2_87 = arith.constant 2 : index
    %c0_88 = arith.constant 0 : index
    %c0_89 = arith.constant 0 : index
    %c0_90 = arith.constant 0 : index
    %156 = vector.load %arg9[%c2_87, %c0_88, %c0_89, %c0_90] : memref<4x9x9x64xbf16, #tpu.memory_space<vmem>>, vector<1x8x8x64xbf16>
    %157 = vector.shape_cast %156 : vector<1x8x8x64xbf16> to vector<8x8x64xbf16>
    %158 = vector.shape_cast %157 : vector<8x8x64xbf16> to vector<64x64xbf16>
    %c0_91 = arith.constant 0 : index
    %c192 = arith.constant 192 : index
    %159 = vector.load %arg10[%c0_91, %c192] : memref<64x576xbf16, #tpu.memory_space<vmem>>, vector<64x64xbf16>
    tpu.vector_store %arg10[%c0_91, %c192], %158 {strides = array<i32>} : memref<64x576xbf16, #tpu.memory_space<vmem>>, vector<64x64xbf16>,
    %c3_92 = arith.constant 3 : index
    %c0_93 = arith.constant 0 : index
    %c0_94 = arith.constant 0 : index
    %c0_95 = arith.constant 0 : index
    %160 = vector.load %arg9[%c3_92, %c0_93, %c0_94, %c0_95] : memref<4x9x9x64xbf16, #tpu.memory_space<vmem>>, vector<1x8x8x64xbf16>
    %161 = vector.shape_cast %160 : vector<1x8x8x64xbf16> to vector<8x8x64xbf16>
    %162 = vector.shape_cast %161 : vector<8x8x64xbf16> to vector<64x64xbf16>
    %c0_96 = arith.constant 0 : index
    %c256 = arith.constant 256 : index
    %163 = vector.load %arg10[%c0_96, %c256] : memref<64x576xbf16, #tpu.memory_space<vmem>>, vector<64x64xbf16>
    tpu.vector_store %arg10[%c0_96, %c256], %162 {strides = array<i32>} : memref<64x576xbf16, #tpu.memory_space<vmem>>, vector<64x64xbf16>,
    %c2_97 = arith.constant 2 : index
    %c0_98 = arith.constant 0 : index
    %c1_99 = arith.constant 1 : index
    %c0_100 = arith.constant 0 : index
    %164 = vector.load %arg9[%c2_97, %c0_98, %c1_99, %c0_100] : memref<4x9x9x64xbf16, #tpu.memory_space<vmem>>, vector<1x8x8x64xbf16>
    %165 = vector.shape_cast %164 : vector<1x8x8x64xbf16> to vector<8x8x64xbf16>
    %166 = vector.shape_cast %165 : vector<8x8x64xbf16> to vector<64x64xbf16>
    %c0_101 = arith.constant 0 : index
    %c320 = arith.constant 320 : index
    %167 = vector.load %arg10[%c0_101, %c320] : memref<64x576xbf16, #tpu.memory_space<vmem>>, vector<64x64xbf16>
    tpu.vector_store %arg10[%c0_101, %c320], %166 {strides = array<i32>} : memref<64x576xbf16, #tpu.memory_space<vmem>>, vector<64x64xbf16>,
    %c0_102 = arith.constant 0 : index
    %c1_103 = arith.constant 1 : index
    %c0_104 = arith.constant 0 : index
    %c0_105 = arith.constant 0 : index
    %168 = vector.load %arg9[%c0_102, %c1_103, %c0_104, %c0_105] : memref<4x9x9x64xbf16, #tpu.memory_space<vmem>>, vector<1x8x8x64xbf16>
    %169 = vector.shape_cast %168 : vector<1x8x8x64xbf16> to vector<8x8x64xbf16>
    %170 = vector.shape_cast %169 : vector<8x8x64xbf16> to vector<64x64xbf16>
    %c0_106 = arith.constant 0 : index
    %c384 = arith.constant 384 : index
    %171 = vector.load %arg10[%c0_106, %c384] : memref<64x576xbf16, #tpu.memory_space<vmem>>, vector<64x64xbf16>
    tpu.vector_store %arg10[%c0_106, %c384], %170 {strides = array<i32>} : memref<64x576xbf16, #tpu.memory_space<vmem>>, vector<64x64xbf16>,
    %c1_107 = arith.constant 1 : index
    %c1_108 = arith.constant 1 : index
    %c0_109 = arith.constant 0 : index
    %c0_110 = arith.constant 0 : index
    %172 = vector.load %arg9[%c1_107, %c1_108, %c0_109, %c0_110] : memref<4x9x9x64xbf16, #tpu.memory_space<vmem>>, vector<1x8x8x64xbf16>
    %173 = vector.shape_cast %172 : vector<1x8x8x64xbf16> to vector<8x8x64xbf16>
    %174 = vector.shape_cast %173 : vector<8x8x64xbf16> to vector<64x64xbf16>
    %c0_111 = arith.constant 0 : index
    %c448 = arith.constant 448 : index
    %175 = vector.load %arg10[%c0_111, %c448] : memref<64x576xbf16, #tpu.memory_space<vmem>>, vector<64x64xbf16>
    tpu.vector_store %arg10[%c0_111, %c448], %174 {strides = array<i32>} : memref<64x576xbf16, #tpu.memory_space<vmem>>, vector<64x64xbf16>,
    %c0_112 = arith.constant 0 : index
    %c1_113 = arith.constant 1 : index
    %c1_114 = arith.constant 1 : index
    %c0_115 = arith.constant 0 : index
    %176 = vector.load %arg9[%c0_112, %c1_113, %c1_114, %c0_115] : memref<4x9x9x64xbf16, #tpu.memory_space<vmem>>, vector<1x8x8x64xbf16>
    %177 = vector.shape_cast %176 : vector<1x8x8x64xbf16> to vector<8x8x64xbf16>
    %178 = vector.shape_cast %177 : vector<8x8x64xbf16> to vector<64x64xbf16>
    %c0_116 = arith.constant 0 : index
    %c512 = arith.constant 512 : index
    %179 = vector.load %arg10[%c0_116, %c512] : memref<64x576xbf16, #tpu.memory_space<vmem>>, vector<64x64xbf16>
    tpu.vector_store %arg10[%c0_116, %c512], %178 {strides = array<i32>} : memref<64x576xbf16, #tpu.memory_space<vmem>>, vector<64x64xbf16>,
    %c0_117 = arith.constant 0 : index
    %c0_118 = arith.constant 0 : index
    %180 = vector.load %arg10[%c0_117, %c0_118] : memref<64x576xbf16, #tpu.memory_space<vmem>>, vector<64x576xbf16>
    %c0_119 = arith.constant 0 : index
    %c0_120 = arith.constant 0 : index
    %181 = vector.load %arg4[%c0_119, %c0_120] : memref<576x256xbf16, #tpu.memory_space<vmem>>, vector<576x256xbf16>
    %cst_121 = arith.constant dense<0.000000e+00> : vector<64x256xf32>
    %182 = tpu.matmul %180, %181, %cst_121 {dimension_numbers = #tpu.dot_dimension_numbers<[1], [0], [0], [1], [0, 0, 1, 1], [], []>} : vector<64x576xbf16>, vector<576x256xbf16>, vector<64x256xf32> -> vector<64x256xf32>
    %183 = vector.extract_strided_slice %182 {offsets = [0, 0], sizes = [64, 128], strides = [1, 1]} : vector<64x256xf32> to vector<64x128xf32>
    %184 = vector.extract_strided_slice %182 {offsets = [0, 128], sizes = [64, 128], strides = [1, 1]} : vector<64x256xf32> to vector<64x128xf32>
    %c0_122 = arith.constant 0 : index
    %c0_123 = arith.constant 0 : index
    %185 = vector.load %arg5[%c0_122, %c0_123] : memref<1x128xf32, #tpu.memory_space<vmem>>, vector<1x128xf32>
    %c0_124 = arith.constant 0 : index
    %c0_125 = arith.constant 0 : index
    %186 = vector.load %arg6[%c0_124, %c0_125] : memref<1x128xf32, #tpu.memory_space<vmem>>, vector<1x128xf32>
    %187 = vector.broadcast %185 : vector<1x128xf32> to vector<64x128xf32>
    %188 = arith.mulf %183, %187 : vector<64x128xf32>
    %189 = vector.broadcast %186 : vector<1x128xf32> to vector<64x128xf32>
    %190 = arith.addf %188, %189 : vector<64x128xf32>
    %cst_126 = arith.constant 0.000000e+00 : f32
    %191 = vector.broadcast %cst_126 : f32 to vector<64x128xf32>
    %192 = arith.maximumf %190, %191 : vector<64x128xf32>
    %193 = arith.truncf %192 : vector<64x128xf32> to vector<64x128xbf16>
    %cst_127 = arith.constant 0.000000e+00 : bf16
    %194 = vector.broadcast %cst_127 : bf16 to vector<10x10x128xbf16>
    %c0_128 = arith.constant 0 : index
    %c0_129 = arith.constant 0 : index
    %c0_130 = arith.constant 0 : index
    %195 = vector.load %arg11[%c0_128, %c0_129, %c0_130] : memref<10x10x128xbf16, #tpu.memory_space<vmem>>, vector<10x10x128xbf16>
    tpu.vector_store %arg11[%c0_128, %c0_129, %c0_130], %194 {strides = array<i32>} : memref<10x10x128xbf16, #tpu.memory_space<vmem>>, vector<10x10x128xbf16>,
    %196 = vector.shape_cast %193 : vector<64x128xbf16> to vector<8x8x128xbf16>
    %c1_131 = arith.constant 1 : index
    %c1_132 = arith.constant 1 : index
    %c0_133 = arith.constant 0 : index
    %197 = vector.load %arg11[%c1_131, %c1_132, %c0_133] : memref<10x10x128xbf16, #tpu.memory_space<vmem>>, vector<8x8x128xbf16>
    tpu.vector_store %arg11[%c1_131, %c1_132, %c0_133], %196 {strides = array<i32>} : memref<10x10x128xbf16, #tpu.memory_space<vmem>>, vector<8x8x128xbf16>,
    %c0_134 = arith.constant 0 : index
    %c0_135 = arith.constant 0 : index
    %c0_136 = arith.constant 0 : index
    %198 = vector.load %arg11[%c0_134, %c0_135, %c0_136] : memref<10x10x128xbf16, #tpu.memory_space<vmem>>, vector<8x8x128xbf16>
    %199 = vector.shape_cast %198 : vector<8x8x128xbf16> to vector<64x128xbf16>
    %c0_137 = arith.constant 0 : index
    %c0_138 = arith.constant 0 : index
    %200 = vector.load %arg12[%c0_137, %c0_138] : memref<64x1152xbf16, #tpu.memory_space<vmem>>, vector<64x128xbf16>
    tpu.vector_store %arg12[%c0_137, %c0_138], %199 {strides = array<i32>} : memref<64x1152xbf16, #tpu.memory_space<vmem>>, vector<64x128xbf16>,
    %c0_139 = arith.constant 0 : index
    %c1_140 = arith.constant 1 : index
    %c0_141 = arith.constant 0 : index
    %201 = vector.load %arg11[%c0_139, %c1_140, %c0_141] : memref<10x10x128xbf16, #tpu.memory_space<vmem>>, vector<8x8x128xbf16>
    %202 = vector.shape_cast %201 : vector<8x8x128xbf16> to vector<64x128xbf16>
    %c0_142 = arith.constant 0 : index
    %c128_143 = arith.constant 128 : index
    %203 = vector.load %arg12[%c0_142, %c128_143] : memref<64x1152xbf16, #tpu.memory_space<vmem>>, vector<64x128xbf16>
    tpu.vector_store %arg12[%c0_142, %c128_143], %202 {strides = array<i32>} : memref<64x1152xbf16, #tpu.memory_space<vmem>>, vector<64x128xbf16>,
    %c0_144 = arith.constant 0 : index
    %c2_145 = arith.constant 2 : index
    %c0_146 = arith.constant 0 : index
    %204 = vector.load %arg11[%c0_144, %c2_145, %c0_146] : memref<10x10x128xbf16, #tpu.memory_space<vmem>>, vector<8x8x128xbf16>
    %205 = vector.shape_cast %204 : vector<8x8x128xbf16> to vector<64x128xbf16>
    %c0_147 = arith.constant 0 : index
    %c256_148 = arith.constant 256 : index
    %206 = vector.load %arg12[%c0_147, %c256_148] : memref<64x1152xbf16, #tpu.memory_space<vmem>>, vector<64x128xbf16>
    tpu.vector_store %arg12[%c0_147, %c256_148], %205 {strides = array<i32>} : memref<64x1152xbf16, #tpu.memory_space<vmem>>, vector<64x128xbf16>,
    %c1_149 = arith.constant 1 : index
    %c0_150 = arith.constant 0 : index
    %c0_151 = arith.constant 0 : index
    %207 = vector.load %arg11[%c1_149, %c0_150, %c0_151] : memref<10x10x128xbf16, #tpu.memory_space<vmem>>, vector<8x8x128xbf16>
    %208 = vector.shape_cast %207 : vector<8x8x128xbf16> to vector<64x128xbf16>
    %c0_152 = arith.constant 0 : index
    %c384_153 = arith.constant 384 : index
    %209 = vector.load %arg12[%c0_152, %c384_153] : memref<64x1152xbf16, #tpu.memory_space<vmem>>, vector<64x128xbf16>
    tpu.vector_store %arg12[%c0_152, %c384_153], %208 {strides = array<i32>} : memref<64x1152xbf16, #tpu.memory_space<vmem>>, vector<64x128xbf16>,
    %c1_154 = arith.constant 1 : index
    %c1_155 = arith.constant 1 : index
    %c0_156 = arith.constant 0 : index
    %210 = vector.load %arg11[%c1_154, %c1_155, %c0_156] : memref<10x10x128xbf16, #tpu.memory_space<vmem>>, vector<8x8x128xbf16>
    %211 = vector.shape_cast %210 : vector<8x8x128xbf16> to vector<64x128xbf16>
    %c0_157 = arith.constant 0 : index
    %c512_158 = arith.constant 512 : index
    %212 = vector.load %arg12[%c0_157, %c512_158] : memref<64x1152xbf16, #tpu.memory_space<vmem>>, vector<64x128xbf16>
    tpu.vector_store %arg12[%c0_157, %c512_158], %211 {strides = array<i32>} : memref<64x1152xbf16, #tpu.memory_space<vmem>>, vector<64x128xbf16>,
    %c1_159 = arith.constant 1 : index
    %c2_160 = arith.constant 2 : index
    %c0_161 = arith.constant 0 : index
    %213 = vector.load %arg11[%c1_159, %c2_160, %c0_161] : memref<10x10x128xbf16, #tpu.memory_space<vmem>>, vector<8x8x128xbf16>
    %214 = vector.shape_cast %213 : vector<8x8x128xbf16> to vector<64x128xbf16>
    %c0_162 = arith.constant 0 : index
    %c640 = arith.constant 640 : index
    %215 = vector.load %arg12[%c0_162, %c640] : memref<64x1152xbf16, #tpu.memory_space<vmem>>, vector<64x128xbf16>
    tpu.vector_store %arg12[%c0_162, %c640], %214 {strides = array<i32>} : memref<64x1152xbf16, #tpu.memory_space<vmem>>, vector<64x128xbf16>,
    %c2_163 = arith.constant 2 : index
    %c0_164 = arith.constant 0 : index
    %c0_165 = arith.constant 0 : index
    %216 = vector.load %arg11[%c2_163, %c0_164, %c0_165] : memref<10x10x128xbf16, #tpu.memory_space<vmem>>, vector<8x8x128xbf16>
    %217 = vector.shape_cast %216 : vector<8x8x128xbf16> to vector<64x128xbf16>
    %c0_166 = arith.constant 0 : index
    %c768 = arith.constant 768 : index
    %218 = vector.load %arg12[%c0_166, %c768] : memref<64x1152xbf16, #tpu.memory_space<vmem>>, vector<64x128xbf16>
    tpu.vector_store %arg12[%c0_166, %c768], %217 {strides = array<i32>} : memref<64x1152xbf16, #tpu.memory_space<vmem>>, vector<64x128xbf16>,
    %c2_167 = arith.constant 2 : index
    %c1_168 = arith.constant 1 : index
    %c0_169 = arith.constant 0 : index
    %219 = vector.load %arg11[%c2_167, %c1_168, %c0_169] : memref<10x10x128xbf16, #tpu.memory_space<vmem>>, vector<8x8x128xbf16>
    %220 = vector.shape_cast %219 : vector<8x8x128xbf16> to vector<64x128xbf16>
    %c0_170 = arith.constant 0 : index
    %c896 = arith.constant 896 : index
    %221 = vector.load %arg12[%c0_170, %c896] : memref<64x1152xbf16, #tpu.memory_space<vmem>>, vector<64x128xbf16>
    tpu.vector_store %arg12[%c0_170, %c896], %220 {strides = array<i32>} : memref<64x1152xbf16, #tpu.memory_space<vmem>>, vector<64x128xbf16>,
    %c2_171 = arith.constant 2 : index
    %c2_172 = arith.constant 2 : index
    %c0_173 = arith.constant 0 : index
    %222 = vector.load %arg11[%c2_171, %c2_172, %c0_173] : memref<10x10x128xbf16, #tpu.memory_space<vmem>>, vector<8x8x128xbf16>
    %223 = vector.shape_cast %222 : vector<8x8x128xbf16> to vector<64x128xbf16>
    %c0_174 = arith.constant 0 : index
    %c1024 = arith.constant 1024 : index
    %224 = vector.load %arg12[%c0_174, %c1024] : memref<64x1152xbf16, #tpu.memory_space<vmem>>, vector<64x128xbf16>
    tpu.vector_store %arg12[%c0_174, %c1024], %223 {strides = array<i32>} : memref<64x1152xbf16, #tpu.memory_space<vmem>>, vector<64x128xbf16>,
    %c0_175 = arith.constant 0 : index
    %c0_176 = arith.constant 0 : index
    %225 = vector.load %arg12[%c0_175, %c0_176] : memref<64x1152xbf16, #tpu.memory_space<vmem>>, vector<64x1152xbf16>
    %c0_177 = arith.constant 0 : index
    %c0_178 = arith.constant 0 : index
    %226 = vector.load %arg7[%c0_177, %c0_178] : memref<1152x128xbf16, #tpu.memory_space<vmem>>, vector<1152x128xbf16>
    %cst_179 = arith.constant dense<0.000000e+00> : vector<64x128xf32>
    %227 = tpu.matmul %225, %226, %cst_179 {dimension_numbers = #tpu.dot_dimension_numbers<[1], [0], [0], [1], [0, 0, 1, 1], [], []>} : vector<64x1152xbf16>, vector<1152x128xbf16>, vector<64x128xf32> -> vector<64x128xf32>
    %228 = arith.addf %227, %184 : vector<64x128xf32>
    %c0_180 = arith.constant 0 : index
    %c0_181 = arith.constant 0 : index
    %c0_182 = arith.constant 0 : index
    %229 = vector.load %arg8[%c0_180, %c0_181, %c0_182] : memref<1x64x128xf32, #tpu.memory_space<vmem>>, vector<1x64x128xf32>
    %230 = vector.shape_cast %229 : vector<1x64x128xf32> to vector<64x128xf32>
    %231 = vector.shape_cast %228 : vector<64x128xf32> to vector<1x64x128xf32>
    tpu.vector_store %arg8[%c0_180, %c0_181, %c0_182], %231 {strides = array<i32>} : memref<1x64x128xf32, #tpu.memory_space<vmem>>, vector<1x64x128xf32>,
    return
  }
  func.func @transform_0(%arg0: i32) -> (i32, i32, i32, i32, i32) {
    %c0_i32 = arith.constant 0 : i32
    %c0_i32_0 = arith.constant 0 : i32
    %c0_i32_1 = arith.constant 0 : i32
    %c0_i32_2 = arith.constant 0 : i32
    %c0_i32_3 = arith.constant 0 : i32
    return %arg0, %c0_i32, %c0_i32_0, %c0_i32_1, %c0_i32_2 : i32, i32, i32, i32, i32
  }
  func.func @transform_1(%arg0: i32) -> (i32, i32) {
    %c0_i32 = arith.constant 0 : i32
    %c0_i32_0 = arith.constant 0 : i32
    %c0_i32_1 = arith.constant 0 : i32
    return %c0_i32, %c0_i32_0 : i32, i32
  }
  func.func @transform_2(%arg0: i32) -> (i32, i32) {
    %c0_i32 = arith.constant 0 : i32
    %c0_i32_0 = arith.constant 0 : i32
    %c0_i32_1 = arith.constant 0 : i32
    return %c0_i32, %c0_i32_0 : i32, i32
  }
  func.func @transform_3(%arg0: i32) -> (i32, i32) {
    %c0_i32 = arith.constant 0 : i32
    %c0_i32_0 = arith.constant 0 : i32
    %c0_i32_1 = arith.constant 0 : i32
    return %c0_i32, %c0_i32_0 : i32, i32
  }
  func.func @transform_4(%arg0: i32) -> (i32, i32) {
    %c0_i32 = arith.constant 0 : i32
    %c0_i32_0 = arith.constant 0 : i32
    %c0_i32_1 = arith.constant 0 : i32
    return %c0_i32, %c0_i32_0 : i32, i32
  }
  func.func @transform_5(%arg0: i32) -> (i32, i32) {
    %c0_i32 = arith.constant 0 : i32
    %c0_i32_0 = arith.constant 0 : i32
    %c0_i32_1 = arith.constant 0 : i32
    return %c0_i32, %c0_i32_0 : i32, i32
  }
  func.func @transform_6(%arg0: i32) -> (i32, i32) {
    %c0_i32 = arith.constant 0 : i32
    %c0_i32_0 = arith.constant 0 : i32
    %c0_i32_1 = arith.constant 0 : i32
    return %c0_i32, %c0_i32_0 : i32, i32
  }
  func.func @transform_7(%arg0: i32) -> (i32, i32, i32) {
    %c0_i32 = arith.constant 0 : i32
    %c0_i32_0 = arith.constant 0 : i32
    %c0_i32_1 = arith.constant 0 : i32
    return %arg0, %c0_i32, %c0_i32_0 : i32, i32, i32
  }
}

</mosaic_0001>

<llo_original>
// kernel: preact_block_forward.1
$region0: #{preact_block_forward.1}
  #allocation0 [shape = 'u32[]', space=smem, size = 0x4, offset = 0x4, fixed_abs, tag = 'smem constant byte address 0x4 - core index']
  #allocation1 [shape = 'u32[72,128]{1,0:T(1,128)}', space=vmem, size = 0x9000, scoped, tag = 'internal scratch']
  #allocation2 [shape = 'bf16[4,9,9,64]{3,2,1,0:T(8,128)(2,1)}', space=vmem, size = 0x24000, scoped, tag = 'scratch operand']
  #allocation3 [shape = 'bf16[64,576]{1,0:T(8,128)(2,1)}', space=vmem, size = 0x14000, scoped, tag = 'scratch operand']
  #allocation4 [shape = 'bf16[10,10,128]{2,1,0:T(8,128)(2,1)}', space=vmem, size = 0xa000, scoped, tag = 'scratch operand']
  #allocation5 [shape = 'bf16[64,1152]{1,0:T(8,128)(2,1)}', space=vmem, size = 0x24000, scoped, tag = 'scratch operand']
  %s0 = inlined_call_operand.vmem [shape: f32[2,4,9,9,64], index: 0, kind: input, shape index: {}]
  %s1 = inlined_call_operand.vmem [shape: f32[1,64], index: 1, kind: input, shape index: {}]
  %s2 = inlined_call_operand.vmem [shape: f32[1,64], index: 2, kind: input, shape index: {}]
  %s3 = inlined_call_operand.vmem [shape: bf16[576,256], index: 3, kind: input, shape index: {}]
  %s4 = inlined_call_operand.vmem [shape: f32[1,128], index: 4, kind: input, shape index: {}]
  %s5 = inlined_call_operand.vmem [shape: f32[1,128], index: 5, kind: input, shape index: {}]
  %s6 = inlined_call_operand.vmem [shape: bf16[1152,128], index: 6, kind: input, shape index: {}]
  %s7 = inlined_call_operand.hbm [shape: f32[2,64,128], index: 7, kind: output, shape index: {}]
  %s8 = sld [smem:[#allocation0]]
  $region61: #{preact_block_forward.1} parent=0
    _
  %s10 = ssub.s32 1, %s8
  %s11 = scalar_select 0, %s10, %s8
  $region1: #{preact_block_forward.1} parent=0
    #allocation6 [shape = 'u8[65536]{0}', space=vmem, size = 0x10000, scoped, tag = 'output window, operand 0']
    #allocation7 [shape = 's32[2]{0}', space=sflag, size = 0x8, scoped, tag = 'scoped memory for preact_block_forward.1']
    %12 = vsyncpa [#allocation7], 0
    %s13 = scalar_lea.sflag [#allocation7], 1
    %14 = vsyncpa %s13, 0
    loop: start=0, step=1, limit=4
    $region2: #{preact_block_forward.1} parent=1 // loop_pre_header
      _
    $region3: #{preact_block_forward.1} parent=1 // loop_header
      %s16 = sphi 0, %s20
      %p17 = scmp.ge.s32.totalorder %s16, 4
      %s26 = sphi 0, %s28
      %s29 = sphi 0, %s26
      %s30 = sphi 0, %s29
      %s46 = sphi 0, %s30
      %s50 = sphi 0, %s50
      %s52 = sphi 0, %s50
      %s53 = sphi 0, %s52
      %s67 = sphi 0, %s53
      %s71 = sphi 0, %s71
      %s73 = sphi 0, %s71
      %s74 = sphi 0, %s73
      %s88 = sphi 0, %s74
      %s92 = sphi 0, %s92
      %s94 = sphi 0, %s92
      %s95 = sphi 0, %s94
      %s109 = sphi 0, %s95
      %s113 = sphi 0, %s113
      %s115 = sphi 0, %s113
      %s116 = sphi 0, %s115
      %s130 = sphi 0, %s116
      %s134 = sphi 0, %s134
      %s136 = sphi 0, %s134
      %s137 = sphi 0, %s136
      %s151 = sphi 0, %s137
      %s155 = sphi 0, %s155
      %s157 = sphi 0, %s155
      %s158 = sphi 0, %s157
      %s172 = sphi 0, %s158
      %s178 = sphi 0, %s180
      %s181 = sphi 0, %s178
      %s182 = sphi 0, %s181
      %s198 = sphi 0, %s182
    $region4: #{preact_block_forward.1} parent=1 // loop_header_branch
      %19 = sbr.rel (%p17) target = $region8
    $region5: #{preact_block_forward.1} parent=1 // loop_body
      %s21 = ssub.s32 %s16, 1
      %s22 = ssub.s32 %s16, 2
      %s23 = sadd.s32 %s16, 1
      %s24 = ssub.s32 %s16, %s23
      %p25 = scmp.eq.s32.totalorder %s24, 0
      %s27 = sadd.s32 %s26, 1
      %s28 = scalar_select %p25, %s26, %s27
      %p31 = pneg %p25
      %p32 = scmp.eq.s32.totalorder %s16, 1
      %p33 = por %p31, %p32
      %p34 = scmp.ne.s32.totalorder %s26, %s29
      %p35 = scmp.eq.s32.totalorder %s16, 0
      %p36 = por %p34, %p35
      %p37 = scmp.ne.s32.totalorder %s26, %s29
      %p38 = scmp.eq.s32.totalorder %s21, 1
      %p39 = por %p37, %p38
      %p40 = scmp.ne.s32.totalorder %s29, %s30
      %p41 = scmp.eq.s32.totalorder %s21, 0
      %p42 = por %p40, %p41
      %p43 = scmp.ne.s32.totalorder %s29, %s30
      %p44 = scmp.eq.s32.totalorder %s22, 1
      %p45 = por %p43, %p44
      %p47 = scmp.ne.s32.totalorder %s30, %s46
      %p48 = scmp.eq.s32.totalorder %s22, 0
      %p49 = por %p47, %p48
      %s51 = sadd.s32 %s50, 1
      %p54 = scmp.eq.s32.totalorder %s16, 1
      %p55 = scmp.ne.s32.totalorder %s50, %s52
      %p56 = scmp.eq.s32.totalorder %s16, 0
      %p57 = por %p55, %p56
      %p58 = scmp.ne.s32.totalorder %s50, %s52
      %p59 = scmp.eq.s32.totalorder %s21, 1
      %p60 = por %p58, %p59
      %p61 = scmp.ne.s32.totalorder %s52, %s53
      %p62 = scmp.eq.s32.totalorder %s21, 0
      %p63 = por %p61, %p62
      %p64 = scmp.ne.s32.totalorder %s52, %s53
      %p65 = scmp.eq.s32.totalorder %s22, 1
      %p66 = por %p64, %p65
      %p68 = scmp.ne.s32.totalorder %s53, %s67
      %p69 = scmp.eq.s32.totalorder %s22, 0
      %p70 = por %p68, %p69
      %s72 = sadd.s32 %s71, 1
      %p75 = scmp.eq.s32.totalorder %s16, 1
      %p76 = scmp.ne.s32.totalorder %s71, %s73
      %p77 = scmp.eq.s32.totalorder %s16, 0
      %p78 = por %p76, %p77
      %p79 = scmp.ne.s32.totalorder %s71, %s73
      %p80 = scmp.eq.s32.totalorder %s21, 1
      %p81 = por %p79, %p80
      %p82 = scmp.ne.s32.totalorder %s73, %s74
      %p83 = scmp.eq.s32.totalorder %s21, 0
      %p84 = por %p82, %p83
      %p85 = scmp.ne.s32.totalorder %s73, %s74
      %p86 = scmp.eq.s32.totalorder %s22, 1
      %p87 = por %p85, %p86
      %p89 = scmp.ne.s32.totalorder %s74, %s88
      %p90 = scmp.eq.s32.totalorder %s22, 0
      %p91 = por %p89, %p90
      %s93 = sadd.s32 %s92, 1
      %p96 = scmp.eq.s32.totalorder %s16, 1
      %p97 = scmp.ne.s32.totalorder %s92, %s94
      %p98 = scmp.eq.s32.totalorder %s16, 0
      %p99 = por %p97, %p98
      %p100 = scmp.ne.s32.totalorder %s92, %s94
      %p101 = scmp.eq.s32.totalorder %s21, 1
      %p102 = por %p100, %p101
      %p103 = scmp.ne.s32.totalorder %s94, %s95
      %p104 = scmp.eq.s32.totalorder %s21, 0
      %p105 = por %p103, %p104
      %p106 = scmp.ne.s32.totalorder %s94, %s95
      %p107 = scmp.eq.s32.totalorder %s22, 1
      %p108 = por %p106, %p107
      %p110 = scmp.ne.s32.totalorder %s95, %s109
      %p111 = scmp.eq.s32.totalorder %s22, 0
      %p112 = por %p110, %p111
      %s114 = sadd.s32 %s113, 1
      %p117 = scmp.eq.s32.totalorder %s16, 1
      %p118 = scmp.ne.s32.totalorder %s113, %s115
      %p119 = scmp.eq.s32.totalorder %s16, 0
      %p120 = por %p118, %p119
      %p121 = scmp.ne.s32.totalorder %s113, %s115
      %p122 = scmp.eq.s32.totalorder %s21, 1
      %p123 = por %p121, %p122
      %p124 = scmp.ne.s32.totalorder %s115, %s116
      %p125 = scmp.eq.s32.totalorder %s21, 0
      %p126 = por %p124, %p125
      %p127 = scmp.ne.s32.totalorder %s115, %s116
      %p128 = scmp.eq.s32.totalorder %s22, 1
      %p129 = por %p127, %p128
      %p131 = scmp.ne.s32.totalorder %s116, %s130
      %p132 = scmp.eq.s32.totalorder %s22, 0
      %p133 = por %p131, %p132
      %s135 = sadd.s32 %s134, 1
      %p138 = scmp.eq.s32.totalorder %s16, 1
      %p139 = scmp.ne.s32.totalorder %s134, %s136
      %p140 = scmp.eq.s32.totalorder %s16, 0
      %p141 = por %p139, %p140
      %p142 = scmp.ne.s32.totalorder %s134, %s136
      %p143 = scmp.eq.s32.totalorder %s21, 1
      %p144 = por %p142, %p143
      %p145 = scmp.ne.s32.totalorder %s136, %s137
      %p146 = scmp.eq.s32.totalorder %s21, 0
      %p147 = por %p145, %p146
      %p148 = scmp.ne.s32.totalorder %s136, %s137
      %p149 = scmp.eq.s32.totalorder %s22, 1
      %p150 = por %p148, %p149
      %p152 = scmp.ne.s32.totalorder %s137, %s151
      %p153 = scmp.eq.s32.totalorder %s22, 0
      %p154 = por %p152, %p153
      %s156 = sadd.s32 %s155, 1
      %p159 = scmp.eq.s32.totalorder %s16, 1
      %p160 = scmp.ne.s32.totalorder %s155, %s157
      %p161 = scmp.eq.s32.totalorder %s16, 0
      %p162 = por %p160, %p161
      %p163 = scmp.ne.s32.totalorder %s155, %s157
      %p164 = scmp.eq.s32.totalorder %s21, 1
      %p165 = por %p163, %p164
      %p166 = scmp.ne.s32.totalorder %s157, %s158
      %p167 = scmp.eq.s32.totalorder %s21, 0
      %p168 = por %p166, %p167
      %p169 = scmp.ne.s32.totalorder %s157, %s158
      %p170 = scmp.eq.s32.totalorder %s22, 1
      %p171 = por %p169, %p170
      %p173 = scmp.ne.s32.totalorder %s158, %s172
      %p174 = scmp.eq.s32.totalorder %s22, 0
      %p175 = por %p173, %p174
      %s176 = ssub.s32 %s16, %s23
      %p177 = scmp.eq.s32.totalorder %s176, 0
      %s179 = sadd.s32 %s178, 1
      %s180 = scalar_select %p177, %s178, %s179
      %p183 = pneg %p177
      %p184 = scmp.eq.s32.totalorder %s16, 1
      %p185 = por %p183, %p184
      %p186 = scmp.ne.s32.totalorder %s178, %s181
      %p187 = scmp.eq.s32.totalorder %s16, 0
      %p188 = por %p186, %p187
      %p189 = scmp.ne.s32.totalorder %s178, %s181
      %p190 = scmp.eq.s32.totalorder %s21, 1
      %p191 = por %p189, %p190
      %p192 = scmp.ne.s32.totalorder %s181, %s182
      %p193 = scmp.eq.s32.totalorder %s21, 0
      %p194 = por %p192, %p193
      %p195 = scmp.ne.s32.totalorder %s181, %s182
      %p196 = scmp.eq.s32.totalorder %s22, 1
      %p197 = por %p195, %p196
      %p199 = scmp.ne.s32.totalorder %s182, %s198
      %p200 = scmp.eq.s32.totalorder %s22, 0
      %p201 = por %p199, %p200
      %p202 = scmp.le.s32.totalorder 1, %s16
      %p203 = scmp.lt.s32.totalorder %s16, 3
      %p204 = pnand %p202, %p203
      %p205 = pneg %p204
      // Predicated region
      $region9: #{preact_block_forward.1} parent=5 // pred_check
        _
      $region10: #{preact_block_forward.1} parent=5 // pred_check_branch
        %207 = sbr.rel (%p204) target = $region12
      $region11: #{preact_block_forward.1} parent=5 // pred_region
        %s208 = ssub.s32 %s16, 1
        // Predicated region
        $region13: #{preact_block_forward.1} parent=11 // pred_check
          %p209 = pneg %p63
        $region14: #{preact_block_forward.1} parent=11 // pred_check_branch
          %211 = sbr.rel (%p209) target = $region16
        $region15: #{preact_block_forward.1} parent=11 // pred_region
          _
        $region16: #{preact_block_forward.1} parent=11 // pred_fallthru
          _
        // Predicated region
        $region17: #{preact_block_forward.1} parent=11 // pred_check
          %p212 = pneg %p84
        $region18: #{preact_block_forward.1} parent=11 // pred_check_branch
          %214 = sbr.rel (%p212) target = $region20
        $region19: #{preact_block_forward.1} parent=11 // pred_region
          _
        $region20: #{preact_block_forward.1} parent=11 // pred_fallthru
          _
        // Predicated region
        $region21: #{preact_block_forward.1} parent=11 // pred_check
          %p215 = pneg %p105
        $region22: #{preact_block_forward.1} parent=11 // pred_check_branch
          %217 = sbr.rel (%p215) target = $region24
        $region23: #{preact_block_forward.1} parent=11 // pred_region
          _
        $region24: #{preact_block_forward.1} parent=11 // pred_fallthru
          _
        // Predicated region
        $region25: #{preact_block_forward.1} parent=11 // pred_check
          %p218 = pneg %p126
        $region26: #{preact_block_forward.1} parent=11 // pred_check_branch
          %220 = sbr.rel (%p218) target = $region28
        $region27: #{preact_block_forward.1} parent=11 // pred_region
          _
        $region28: #{preact_block_forward.1} parent=11 // pred_fallthru
          _
        // Predicated region
        $region29: #{preact_block_forward.1} parent=11 // pred_check
          %p221 = pneg %p147
        $region30: #{preact_block_forward.1} parent=11 // pred_check_branch
          %223 = sbr.rel (%p221) target = $region32
        $region31: #{preact_block_forward.1} parent=11 // pred_region
          _
        $region32: #{preact_block_forward.1} parent=11 // pred_fallthru
          _
        // Predicated region
        $region33: #{preact_block_forward.1} parent=11 // pred_check
          %p224 = pneg %p168
        $region34: #{preact_block_forward.1} parent=11 // pred_check_branch
          %226 = sbr.rel (%p224) target = $region36
        $region35: #{preact_block_forward.1} parent=11 // pred_region
          _
        $region36: #{preact_block_forward.1} parent=11 // pred_fallthru
          _
      $region12: #{preact_block_forward.1} parent=5 // pred_fallthru
        _
      %p227 = scmp.lt.s32.totalorder %s16, 2
      // Predicated region
      $region37: #{preact_block_forward.1} parent=5 // pred_check
        %p228 = pneg %p227
      $region38: #{preact_block_forward.1} parent=5 // pred_check_branch
        %230 = sbr.rel (%p228) target = $region40
      $region39: #{preact_block_forward.1} parent=5 // pred_region
        // Predicated region
        $region41: #{preact_block_forward.1} parent=39 // pred_check
          %p231 = pneg %p36
        $region42: #{preact_block_forward.1} parent=39 // pred_check_branch
          %233 = sbr.rel (%p231) target = $region44
        $region43: #{preact_block_forward.1} parent=39 // pred_region
          %p234 = scmp.lt.s32.totalorder %s16, 1
          %s235 = scalar_select %p234, %s16, 1
          %s236 = smul.addr %s235, 72
          %s237 = smul.addr %s236, 8
          %s238 = scalar_lea.vmem %s0, %s237
        $region44: #{preact_block_forward.1} parent=39 // pred_fallthru
          _
      $region40: #{preact_block_forward.1} parent=5 // pred_fallthru
        _
      %p239 = scmp.le.s32.totalorder 1, %s16
      %p240 = scmp.lt.s32.totalorder %s16, 3
      %p241 = pnand %p239, %p240
      %p242 = pneg %p241
      // Predicated region
      $region45: #{preact_block_forward.1} parent=5 // pred_check
        _
      $region46: #{preact_block_forward.1} parent=5 // pred_check_branch
        %244 = sbr.rel (%p241) target = $region48
      $region47: #{preact_block_forward.1} parent=5 // pred_region
        %s245 = ssub.s32 %s16, 1
        %p246 = scmp.lt.s32.totalorder %s21, 1
        %s247 = scalar_select %p246, %s21, 1
        %s248 = smul.addr %s247, 72
        %s249 = smul.addr %s248, 8
        %s250 = scalar_lea.vmem %s0, %s249
        %p251 = pneg %p42
        %p252 = pneg %p39
        %p253 = pneg %p63
        %p254 = pneg %p60
        %p255 = pneg %p84
        %p256 = pneg %p81
        %p257 = pneg %p105
        %p258 = pneg %p102
        %p259 = pneg %p126
        %p260 = pneg %p123
        %p261 = pneg %p147
        %p262 = pneg %p144
        %p263 = pneg %p168
        %p264 = pneg %p165
        %p265 = pneg %p194
        %p266 = pneg %p191
        %s267 = sand.u32 %s181, 1
        %s268 = scalar_lea.sflag [#allocation7], %s267
        %s269 = sand.u32 %s181, 1
        %s270 = smul.addr %s269, 64
        %s271 = scalar_lea.vmem [#allocation6], %s270
        %p272 = scmp.lt.s32.totalorder %s21, 1
        %s273 = scalar_select %p272, %s21, 1
        %s274 = smul.addr %s273, 72
        %s275 = smul.addr %s274, 8
        %s276 = scalar_lea.vmem %s0, %s275
        %v278 = vld [vmem:[%s1] sm:$0x1]
        %v279 = vld [vmem:[%s2] sm:$0x1]
        %v280 = vlaneseq
        %v281 = vshrl.u32 %v280, 7
        %v282 = vadd.s32 %v281, 8
        %v283 = vmul.u32 %v281, 2
        %v284 = vmul.u32 %v282, 2
        %vm285 = vcmp.ge.s32.totalorder %v283, 1
        %vm286 = vcmp.ge.s32.totalorder %v284, 1
        %vm287 = vmand 0, %vm285
        %vm288 = vmand 0, %vm286
        %vm289 = vmand 1, %vm285
        %vm290 = vmand 1, %vm286
        %vm291 = vcmp.le.s32.totalorder %v283, 16
        %vm292 = vcmp.le.s32.totalorder %v284, 16
        %vm293 = vmand %vm287, %vm291
        %vm294 = vmand %vm288, %vm292
        %vm295 = vmand %vm289, %vm291
        %vm296 = vmand %vm290, %vm292
        %v297 = vld [vmem:[%s276] sm:$0xff]
        %v298 = vld [vmem:[%s276 + $0x8] sm:$0x1]
        %v299 = vld [vmem:[%s276 + $0x10] sm:$0xff]
        %v300 = vld [vmem:[%s276 + $0x18] sm:$0x1]
        %v301 = vld [vmem:[%s276 + $0x20] sm:$0xff]
        %v302 = vld [vmem:[%s276 + $0x28] sm:$0x1]
        %v303 = vld [vmem:[%s276 + $0x30] sm:$0xff]
        %v304 = vld [vmem:[%s276 + $0x38] sm:$0x1]
        %v305 = vld [vmem:[%s276 + $0x40] sm:$0xff]
        %v306 = vld [vmem:[%s276 + $0x48] sm:$0x1]
        %v307 = vld [vmem:[%s276 + $0x50] sm:$0xff]
        %v308 = vld [vmem:[%s276 + $0x58] sm:$0x1]
        %v309 = vld [vmem:[%s276 + $0x60] sm:$0xff]
        %v310 = vld [vmem:[%s276 + $0x68] sm:$0x1]
        %v311 = vld [vmem:[%s276 + $0x70] sm:$0xff]
        %v312 = vld [vmem:[%s276 + $0x78] sm:$0x1]
        %v313 = vld [vmem:[%s276 + $0x80] sm:$0xff]
        %v314 = vld [vmem:[%s276 + $0x88] sm:$0x1]
        %v316 = vperm.slane %v278, 0
        %v318 = vmul.f32 %v297, %v316
        %v319 = vmul.f32 %v298, %v316
        %v320 = vmul.f32 %v299, %v316
        %v321 = vmul.f32 %v300, %v316
        %v322 = vmul.f32 %v301, %v316
        %v323 = vmul.f32 %v302, %v316
        %v324 = vmul.f32 %v303, %v316
        %v325 = vmul.f32 %v304, %v316
        %v326 = vmul.f32 %v305, %v316
        %v327 = vmul.f32 %v306, %v316
        %v328 = vmul.f32 %v307, %v316
        %v329 = vmul.f32 %v308, %v316
        %v330 = vmul.f32 %v309, %v316
        %v331 = vmul.f32 %v310, %v316
        %v332 = vmul.f32 %v311, %v316
        %v333 = vmul.f32 %v312, %v316
        %v334 = vmul.f32 %v313, %v316
        %v335 = vmul.f32 %v314, %v316
        %v337 = vperm.slane %v279, 0
        %v339 = vadd.f32 %v318, %v337
        %v340 = vadd.f32 %v319, %v337
        %v341 = vadd.f32 %v320, %v337
        %v342 = vadd.f32 %v321, %v337
        %v343 = vadd.f32 %v322, %v337
        %v344 = vadd.f32 %v323, %v337
        %v345 = vadd.f32 %v324, %v337
        %v346 = vadd.f32 %v325, %v337
        %v347 = vadd.f32 %v326, %v337
        %v348 = vadd.f32 %v327, %v337
        %v349 = vadd.f32 %v328, %v337
        %v350 = vadd.f32 %v329, %v337
        %v351 = vadd.f32 %v330, %v337
        %v352 = vadd.f32 %v331, %v337
        %v353 = vadd.f32 %v332, %v337
        %v354 = vadd.f32 %v333, %v337
        %v355 = vadd.f32 %v334, %v337
        %v356 = vadd.f32 %v335, %v337
        %v357 = vmax.f32 %v339, 0.0
        %v358 = vmax.f32 %v340, 0.0
        %v359 = vmax.f32 %v341, 0.0
        %v360 = vmax.f32 %v342, 0.0
        %v361 = vmax.f32 %v343, 0.0
        %v362 = vmax.f32 %v344, 0.0
        %v363 = vmax.f32 %v345, 0.0
        %v364 = vmax.f32 %v346, 0.0
        %v365 = vmax.f32 %v347, 0.0
        %v366 = vmax.f32 %v348, 0.0
        %v367 = vmax.f32 %v349, 0.0
        %v368 = vmax.f32 %v350, 0.0
        %v369 = vmax.f32 %v351, 0.0
        %v370 = vmax.f32 %v352, 0.0
        %v371 = vmax.f32 %v353, 0.0
        %v372 = vmax.f32 %v354, 0.0
        %v373 = vmax.f32 %v355, 0.0
        %v374 = vmax.f32 %v356, 0.0
        %v375 = vsel %vm293, %v357, 0.0
        %v376 = vsel %vm294, %v358, 0.0
        %v377 = vsel %vm295, %v359, 0.0
        %v378 = vsel %vm296, %v360, 0.0
        %v379 = vsel %vm295, %v361, 0.0
        %v380 = vsel %vm296, %v362, 0.0
        %v381 = vsel %vm295, %v363, 0.0
        %v382 = vsel %vm296, %v364, 0.0
        %v383 = vsel %vm295, %v365, 0.0
        %v384 = vsel %vm296, %v366, 0.0
        %v385 = vsel %vm295, %v367, 0.0
        %v386 = vsel %vm296, %v368, 0.0
        %v387 = vsel %vm295, %v369, 0.0
        %v388 = vsel %vm296, %v370, 0.0
        %v389 = vsel %vm295, %v371, 0.0
        %v390 = vsel %vm296, %v372, 0.0
        %v391 = vsel %vm295, %v373, 0.0
        %v392 = vsel %vm296, %v374, 0.0
        %v393 = vpack.c.bf16 %v375, %v375
        %v394 = vpack.c.bf16 %v376, %v376
        %v395 = vpack.c.bf16 %v377, %v377
        %v396 = vpack.c.bf16 %v378, %v378
        %v397 = vpack.c.bf16 %v379, %v379
        %v398 = vpack.c.bf16 %v380, %v380
        %v399 = vpack.c.bf16 %v381, %v381
        %v400 = vpack.c.bf16 %v382, %v382
        %v401 = vpack.c.bf16 %v383, %v383
        %v402 = vpack.c.bf16 %v384, %v384
        %v403 = vpack.c.bf16 %v385, %v385
        %v404 = vpack.c.bf16 %v386, %v386
        %v405 = vpack.c.bf16 %v387, %v387
        %v406 = vpack.c.bf16 %v388, %v388
        %v407 = vpack.c.bf16 %v389, %v389
        %v408 = vpack.c.bf16 %v390, %v390
        %v409 = vpack.c.bf16 %v391, %v391
        %v410 = vpack.c.bf16 %v392, %v392
        %vm411 = vcmask 519168
        %412 = vst.msk [vmem:[#allocation2] sm:$0xf] %vm411, %v393
        %vm413 = vcmask 516096
        %vm414 = vsmask.f32 256
        %vm415 = vmand %vm413, %vm414
        %v416 = vld [vmem:[#allocation2 + $0x4] sm:$0x1]
        %v417 = vsel %vm415, %v394, %v416
        %418 = vst [vmem:[#allocation2 + $0x4] sm:$0x1] %v417
        %419 = vst.msk [vmem:[#allocation2 + $0x8] sm:$0xf] %vm411, %v395
        %v420 = vld [vmem:[#allocation2 + $0xc] sm:$0x1]
        %v421 = vsel %vm415, %v396, %v420
        %422 = vst [vmem:[#allocation2 + $0xc] sm:$0x1] %v421
        %423 = vst.msk [vmem:[#allocation2 + $0x10] sm:$0xf] %vm411, %v397
        %v424 = vld [vmem:[#allocation2 + $0x14] sm:$0x1]
        %v425 = vsel %vm415, %v398, %v424
        %426 = vst [vmem:[#allocation2 + $0x14] sm:$0x1] %v425
        %427 = vst.msk [vmem:[#allocation2 + $0x18] sm:$0xf] %vm411, %v399
        %v428 = vld [vmem:[#allocation2 + $0x1c] sm:$0x1]
        %v429 = vsel %vm415, %v400, %v428
        %430 = vst [vmem:[#allocation2 + $0x1c] sm:$0x1] %v429
        %431 = vst.msk [vmem:[#allocation2 + $0x20] sm:$0xf] %vm411, %v401
        %v432 = vld [vmem:[#allocation2 + $0x24] sm:$0x1]
        %v433 = vsel %vm415, %v402, %v432
        %434 = vst [vmem:[#allocation2 + $0x24] sm:$0x1] %v433
        %435 = vst.msk [vmem:[#allocation2 + $0x28] sm:$0xf] %vm411, %v403
        %v436 = vld [vmem:[#allocation2 + $0x2c] sm:$0x1]
        %v437 = vsel %vm415, %v404, %v436
        %438 = vst [vmem:[#allocation2 + $0x2c] sm:$0x1] %v437
        %439 = vst.msk [vmem:[#allocation2 + $0x30] sm:$0xf] %vm411, %v405
        %v440 = vld [vmem:[#allocation2 + $0x34] sm:$0x1]
        %v441 = vsel %vm415, %v406, %v440
        %442 = vst [vmem:[#allocation2 + $0x34] sm:$0x1] %v441
        %443 = vst.msk [vmem:[#allocation2 + $0x38] sm:$0xf] %vm411, %v407
        %v444 = vld [vmem:[#allocation2 + $0x3c] sm:$0x1]
        %v445 = vsel %vm415, %v408, %v444
        %446 = vst [vmem:[#allocation2 + $0x3c] sm:$0x1] %v445
        %447 = vst.msk [vmem:[#allocation2 + $0x40] sm:$0xf] %vm411, %v409
        %v448 = vld [vmem:[#allocation2 + $0x44] sm:$0x1]
        %v449 = vsel %vm415, %v410, %v448
        %450 = vst [vmem:[#allocation2 + $0x44] sm:$0x1] %v449
        %v451 = vadd.s32 %v283, 1
        %v452 = vadd.s32 %v284, 1
        %vm453 = vcmp.ge.s32.totalorder %v451, 1
        %vm454 = vcmp.ge.s32.totalorder %v452, 1
        %vm455 = vmand 0, %vm453
        %vm456 = vmand 0, %vm454
        %vm457 = vmand 1, %vm453
        %vm458 = vmand 1, %vm454
        %vm459 = vcmp.le.s32.totalorder %v451, 16
        %vm460 = vcmp.le.s32.totalorder %v452, 16
        %vm461 = vmand %vm455, %vm459
        %vm462 = vmand %vm456, %vm460
        %vm463 = vmand %vm457, %vm459
        %vm464 = vmand %vm458, %vm460
        %s465 = scalar_lea.vmem %s276, 144
        %v466 = vld [vmem:[%s465] sm:$0xff]
        %v467 = vld [vmem:[%s465 + $0x8] sm:$0x1]
        %v468 = vld [vmem:[%s465 + $0x10] sm:$0xff]
        %v469 = vld [vmem:[%s465 + $0x18] sm:$0x1]
        %v470 = vld [vmem:[%s465 + $0x20] sm:$0xff]
        %v471 = vld [vmem:[%s465 + $0x28] sm:$0x1]
        %v472 = vld [vmem:[%s465 + $0x30] sm:$0xff]
        %v473 = vld [vmem:[%s465 + $0x38] sm:$0x1]
        %v474 = vld [vmem:[%s465 + $0x40] sm:$0xff]
        %v475 = vld [vmem:[%s465 + $0x48] sm:$0x1]
        %v476 = vld [vmem:[%s465 + $0x50] sm:$0xff]
        %v477 = vld [vmem:[%s465 + $0x58] sm:$0x1]
        %v478 = vld [vmem:[%s465 + $0x60] sm:$0xff]
        %v479 = vld [vmem:[%s465 + $0x68] sm:$0x1]
        %v480 = vld [vmem:[%s465 + $0x70] sm:$0xff]
        %v481 = vld [vmem:[%s465 + $0x78] sm:$0x1]
        %v482 = vld [vmem:[%s465 + $0x80] sm:$0xff]
        %v483 = vld [vmem:[%s465 + $0x88] sm:$0x1]
        %v484 = vmul.f32 %v466, %v316
        %v485 = vmul.f32 %v467, %v316
        %v486 = vmul.f32 %v468, %v316
        %v487 = vmul.f32 %v469, %v316
        %v488 = vmul.f32 %v470, %v316
        %v489 = vmul.f32 %v471, %v316
        %v490 = vmul.f32 %v472, %v316
        %v491 = vmul.f32 %v473, %v316
        %v492 = vmul.f32 %v474, %v316
        %v493 = vmul.f32 %v475, %v316
        %v494 = vmul.f32 %v476, %v316
        %v495 = vmul.f32 %v477, %v316
        %v496 = vmul.f32 %v478, %v316
        %v497 = vmul.f32 %v479, %v316
        %v498 = vmul.f32 %v480, %v316
        %v499 = vmul.f32 %v481, %v316
        %v500 = vmul.f32 %v482, %v316
        %v501 = vmul.f32 %v483, %v316
        %v502 = vadd.f32 %v484, %v337
        %v503 = vadd.f32 %v485, %v337
        %v504 = vadd.f32 %v486, %v337
        %v505 = vadd.f32 %v487, %v337
        %v506 = vadd.f32 %v488, %v337
        %v507 = vadd.f32 %v489, %v337
        %v508 = vadd.f32 %v490, %v337
        %v509 = vadd.f32 %v491, %v337
        %v510 = vadd.f32 %v492, %v337
        %v511 = vadd.f32 %v493, %v337
        %v512 = vadd.f32 %v494, %v337
        %v513 = vadd.f32 %v495, %v337
        %v514 = vadd.f32 %v496, %v337
        %v515 = vadd.f32 %v497, %v337
        %v516 = vadd.f32 %v498, %v337
        %v517 = vadd.f32 %v499, %v337
        %v518 = vadd.f32 %v500, %v337
        %v519 = vadd.f32 %v501, %v337
        %v520 = vmax.f32 %v502, 0.0
        %v521 = vmax.f32 %v503, 0.0
        %v522 = vmax.f32 %v504, 0.0
        %v523 = vmax.f32 %v505, 0.0
        %v524 = vmax.f32 %v506, 0.0
        %v525 = vmax.f32 %v507, 0.0
        %v526 = vmax.f32 %v508, 0.0
        %v527 = vmax.f32 %v509, 0.0
        %v528 = vmax.f32 %v510, 0.0
        %v529 = vmax.f32 %v511, 0.0
        %v530 = vmax.f32 %v512, 0.0
        %v531 = vmax.f32 %v513, 0.0
        %v532 = vmax.f32 %v514, 0.0
        %v533 = vmax.f32 %v515, 0.0
        %v534 = vmax.f32 %v516, 0.0
        %v535 = vmax.f32 %v517, 0.0
        %v536 = vmax.f32 %v518, 0.0
        %v537 = vmax.f32 %v519, 0.0
        %v538 = vsel %vm461, %v520, 0.0
        %v539 = vsel %vm462, %v521, 0.0
        %v540 = vsel %vm463, %v522, 0.0
        %v541 = vsel %vm464, %v523, 0.0
        %v542 = vsel %vm463, %v524, 0.0
        %v543 = vsel %vm464, %v525, 0.0
        %v544 = vsel %vm463, %v526, 0.0
        %v545 = vsel %vm464, %v527, 0.0
        %v546 = vsel %vm463, %v528, 0.0
        %v547 = vsel %vm464, %v529, 0.0
        %v548 = vsel %vm463, %v530, 0.0
        %v549 = vsel %vm464, %v531, 0.0
        %v550 = vsel %vm463, %v532, 0.0
        %v551 = vsel %vm464, %v533, 0.0
        %v552 = vsel %vm463, %v534, 0.0
        %v553 = vsel %vm464, %v535, 0.0
        %v554 = vsel %vm463, %v536, 0.0
        %v555 = vsel %vm464, %v537, 0.0
        %v556 = vpack.c.bf16 %v538, %v538
        %v557 = vpack.c.bf16 %v539, %v539
        %v558 = vpack.c.bf16 %v540, %v540
        %v559 = vpack.c.bf16 %v541, %v541
        %v560 = vpack.c.bf16 %v542, %v542
        %v561 = vpack.c.bf16 %v543, %v543
        %v562 = vpack.c.bf16 %v544, %v544
        %v563 = vpack.c.bf16 %v545, %v545
        %v564 = vpack.c.bf16 %v546, %v546
        %v565 = vpack.c.bf16 %v547, %v547
        %v566 = vpack.c.bf16 %v548, %v548
        %v567 = vpack.c.bf16 %v549, %v549
        %v568 = vpack.c.bf16 %v550, %v550
        %v569 = vpack.c.bf16 %v551, %v551
        %v570 = vpack.c.bf16 %v552, %v552
        %v571 = vpack.c.bf16 %v553, %v553
        %v572 = vpack.c.bf16 %v554, %v554
        %v573 = vpack.c.bf16 %v555, %v555
        %s574 = scalar_lea.vmem [#allocation2], 72
        %575 = vst.msk [vmem:[%s574] sm:$0xf] %vm411, %v556
        %v576 = vld [vmem:[%s574 + $0x4] sm:$0x1]
        %v577 = vsel %vm415, %v557, %v576
        %578 = vst [vmem:[%s574 + $0x4] sm:$0x1] %v577
        %579 = vst.msk [vmem:[%s574 + $0x8] sm:$0xf] %vm411, %v558
        %v580 = vld [vmem:[%s574 + $0xc] sm:$0x1]
        %v581 = vsel %vm415, %v559, %v580
        %582 = vst [vmem:[%s574 + $0xc] sm:$0x1] %v581
        %583 = vst.msk [vmem:[%s574 + $0x10] sm:$0xf] %vm411, %v560
        %v584 = vld [vmem:[%s574 + $0x14] sm:$0x1]
        %v585 = vsel %vm415, %v561, %v584
        %586 = vst [vmem:[%s574 + $0x14] sm:$0x1] %v585
        %587 = vst.msk [vmem:[%s574 + $0x18] sm:$0xf] %vm411, %v562
        %v588 = vld [vmem:[%s574 + $0x1c] sm:$0x1]
        %v589 = vsel %vm415, %v563, %v588
        %590 = vst [vmem:[%s574 + $0x1c] sm:$0x1] %v589
        %591 = vst.msk [vmem:[%s574 + $0x20] sm:$0xf] %vm411, %v564
        %v592 = vld [vmem:[%s574 + $0x24] sm:$0x1]
        %v593 = vsel %vm415, %v565, %v592
        %594 = vst [vmem:[%s574 + $0x24] sm:$0x1] %v593
        %595 = vst.msk [vmem:[%s574 + $0x28] sm:$0xf] %vm411, %v566
        %v596 = vld [vmem:[%s574 + $0x2c] sm:$0x1]
        %v597 = vsel %vm415, %v567, %v596
        %598 = vst [vmem:[%s574 + $0x2c] sm:$0x1] %v597
        %599 = vst.msk [vmem:[%s574 + $0x30] sm:$0xf] %vm411, %v568
        %v600 = vld [vmem:[%s574 + $0x34] sm:$0x1]
        %v601 = vsel %vm415, %v569, %v600
        %602 = vst [vmem:[%s574 + $0x34] sm:$0x1] %v601
        %603 = vst.msk [vmem:[%s574 + $0x38] sm:$0xf] %vm411, %v570
        %v604 = vld [vmem:[%s574 + $0x3c] sm:$0x1]
        %v605 = vsel %vm415, %v571, %v604
        %606 = vst [vmem:[%s574 + $0x3c] sm:$0x1] %v605
        %607 = vst.msk [vmem:[%s574 + $0x40] sm:$0xf] %vm411, %v572
        %v608 = vld [vmem:[%s574 + $0x44] sm:$0x1]
        %v609 = vsel %vm415, %v573, %v608
        %610 = vst [vmem:[%s574 + $0x44] sm:$0x1] %v609
        %s611 = scalar_lea.vmem %s276, 288
        %v612 = vld [vmem:[%s611] sm:$0xff]
        %v613 = vld [vmem:[%s611 + $0x8] sm:$0x1]
        %v614 = vld [vmem:[%s611 + $0x10] sm:$0xff]
        %v615 = vld [vmem:[%s611 + $0x18] sm:$0x1]
        %v616 = vld [vmem:[%s611 + $0x20] sm:$0xff]
        %v617 = vld [vmem:[%s611 + $0x28] sm:$0x1]
        %v618 = vld [vmem:[%s611 + $0x30] sm:$0xff]
        %v619 = vld [vmem:[%s611 + $0x38] sm:$0x1]
        %v620 = vld [vmem:[%s611 + $0x40] sm:$0xff]
        %v621 = vld [vmem:[%s611 + $0x48] sm:$0x1]
        %v622 = vld [vmem:[%s611 + $0x50] sm:$0xff]
        %v623 = vld [vmem:[%s611 + $0x58] sm:$0x1]
        %v624 = vld [vmem:[%s611 + $0x60] sm:$0xff]
        %v625 = vld [vmem:[%s611 + $0x68] sm:$0x1]
        %v626 = vld [vmem:[%s611 + $0x70] sm:$0xff]
        %v627 = vld [vmem:[%s611 + $0x78] sm:$0x1]
        %v628 = vld [vmem:[%s611 + $0x80] sm:$0xff]
        %v629 = vld [vmem:[%s611 + $0x88] sm:$0x1]
        %v630 = vmul.f32 %v612, %v316
        %v631 = vmul.f32 %v613, %v316
        %v632 = vmul.f32 %v614, %v316
        %v633 = vmul.f32 %v615, %v316
        %v634 = vmul.f32 %v616, %v316
        %v635 = vmul.f32 %v617, %v316
        %v636 = vmul.f32 %v618, %v316
        %v637 = vmul.f32 %v619, %v316
        %v638 = vmul.f32 %v620, %v316
        %v639 = vmul.f32 %v621, %v316
        %v640 = vmul.f32 %v622, %v316
        %v641 = vmul.f32 %v623, %v316
        %v642 = vmul.f32 %v624, %v316
        %v643 = vmul.f32 %v625, %v316
        %v644 = vmul.f32 %v626, %v316
        %v645 = vmul.f32 %v627, %v316
        %v646 = vmul.f32 %v628, %v316
        %v647 = vmul.f32 %v629, %v316
        %v648 = vadd.f32 %v630, %v337
        %v649 = vadd.f32 %v631, %v337
        %v650 = vadd.f32 %v632, %v337
        %v651 = vadd.f32 %v633, %v337
        %v652 = vadd.f32 %v634, %v337
        %v653 = vadd.f32 %v635, %v337
        %v654 = vadd.f32 %v636, %v337
        %v655 = vadd.f32 %v637, %v337
        %v656 = vadd.f32 %v638, %v337
        %v657 = vadd.f32 %v639, %v337
        %v658 = vadd.f32 %v640, %v337
        %v659 = vadd.f32 %v641, %v337
        %v660 = vadd.f32 %v642, %v337
        %v661 = vadd.f32 %v643, %v337
        %v662 = vadd.f32 %v644, %v337
        %v663 = vadd.f32 %v645, %v337
        %v664 = vadd.f32 %v646, %v337
        %v665 = vadd.f32 %v647, %v337
        %v666 = vmax.f32 %v648, 0.0
        %v667 = vmax.f32 %v649, 0.0
        %v668 = vmax.f32 %v650, 0.0
        %v669 = vmax.f32 %v651, 0.0
        %v670 = vmax.f32 %v652, 0.0
        %v671 = vmax.f32 %v653, 0.0
        %v672 = vmax.f32 %v654, 0.0
        %v673 = vmax.f32 %v655, 0.0
        %v674 = vmax.f32 %v656, 0.0
        %v675 = vmax.f32 %v657, 0.0
        %v676 = vmax.f32 %v658, 0.0
        %v677 = vmax.f32 %v659, 0.0
        %v678 = vmax.f32 %v660, 0.0
        %v679 = vmax.f32 %v661, 0.0
        %v680 = vmax.f32 %v662, 0.0
        %v681 = vmax.f32 %v663, 0.0
        %v682 = vmax.f32 %v664, 0.0
        %v683 = vmax.f32 %v665, 0.0
        %v684 = vsel %vm295, %v666, 0.0
        %v685 = vsel %vm296, %v667, 0.0
        %v686 = vsel %vm295, %v668, 0.0
        %v687 = vsel %vm296, %v669, 0.0
        %v688 = vsel %vm295, %v670, 0.0
        %v689 = vsel %vm296, %v671, 0.0
        %v690 = vsel %vm295, %v672, 0.0
        %v691 = vsel %vm296, %v673, 0.0
        %v692 = vsel %vm295, %v674, 0.0
        %v693 = vsel %vm296, %v675, 0.0
        %v694 = vsel %vm295, %v676, 0.0
        %v695 = vsel %vm296, %v677, 0.0
        %v696 = vsel %vm295, %v678, 0.0
        %v697 = vsel %vm296, %v679, 0.0
        %v698 = vsel %vm295, %v680, 0.0
        %v699 = vsel %vm296, %v681, 0.0
        %v700 = vsel %vm293, %v682, 0.0
        %v701 = vsel %vm294, %v683, 0.0
        %v702 = vpack.c.bf16 %v684, %v684
        %v703 = vpack.c.bf16 %v685, %v685
        %v704 = vpack.c.bf16 %v686, %v686
        %v705 = vpack.c.bf16 %v687, %v687
        %v706 = vpack.c.bf16 %v688, %v688
        %v707 = vpack.c.bf16 %v689, %v689
        %v708 = vpack.c.bf16 %v690, %v690
        %v709 = vpack.c.bf16 %v691, %v691
        %v710 = vpack.c.bf16 %v692, %v692
        %v711 = vpack.c.bf16 %v693, %v693
        %v712 = vpack.c.bf16 %v694, %v694
        %v713 = vpack.c.bf16 %v695, %v695
        %v714 = vpack.c.bf16 %v696, %v696
        %v715 = vpack.c.bf16 %v697, %v697
        %v716 = vpack.c.bf16 %v698, %v698
        %v717 = vpack.c.bf16 %v699, %v699
        %v718 = vpack.c.bf16 %v700, %v700
        %v719 = vpack.c.bf16 %v701, %v701
        %s720 = scalar_lea.vmem [#allocation2], 144
        %721 = vst.msk [vmem:[%s720] sm:$0xf] %vm411, %v702
        %v722 = vld [vmem:[%s720 + $0x4] sm:$0x1]
        %v723 = vsel %vm415, %v703, %v722
        %724 = vst [vmem:[%s720 + $0x4] sm:$0x1] %v723
        %725 = vst.msk [vmem:[%s720 + $0x8] sm:$0xf] %vm411, %v704
        %v726 = vld [vmem:[%s720 + $0xc] sm:$0x1]
        %v727 = vsel %vm415, %v705, %v726
        %728 = vst [vmem:[%s720 + $0xc] sm:$0x1] %v727
        %729 = vst.msk [vmem:[%s720 + $0x10] sm:$0xf] %vm411, %v706
        %v730 = vld [vmem:[%s720 + $0x14] sm:$0x1]
        %v731 = vsel %vm415, %v707, %v730
        %732 = vst [vmem:[%s720 + $0x14] sm:$0x1] %v731
        %733 = vst.msk [vmem:[%s720 + $0x18] sm:$0xf] %vm411, %v708
        %v734 = vld [vmem:[%s720 + $0x1c] sm:$0x1]
        %v735 = vsel %vm415, %v709, %v734
        %736 = vst [vmem:[%s720 + $0x1c] sm:$0x1] %v735
        %737 = vst.msk [vmem:[%s720 + $0x20] sm:$0xf] %vm411, %v710
        %v738 = vld [vmem:[%s720 + $0x24] sm:$0x1]
        %v739 = vsel %vm415, %v711, %v738
        %740 = vst [vmem:[%s720 + $0x24] sm:$0x1] %v739
        %741 = vst.msk [vmem:[%s720 + $0x28] sm:$0xf] %vm411, %v712
        %v742 = vld [vmem:[%s720 + $0x2c] sm:$0x1]
        %v743 = vsel %vm415, %v713, %v742
        %744 = vst [vmem:[%s720 + $0x2c] sm:$0x1] %v743
        %745 = vst.msk [vmem:[%s720 + $0x30] sm:$0xf] %vm411, %v714
        %v746 = vld [vmem:[%s720 + $0x34] sm:$0x1]
        %v747 = vsel %vm415, %v715, %v746
        %748 = vst [vmem:[%s720 + $0x34] sm:$0x1] %v747
        %749 = vst.msk [vmem:[%s720 + $0x38] sm:$0xf] %vm411, %v716
        %v750 = vld [vmem:[%s720 + $0x3c] sm:$0x1]
        %v751 = vsel %vm415, %v717, %v750
        %752 = vst [vmem:[%s720 + $0x3c] sm:$0x1] %v751
        %753 = vst.msk [vmem:[%s720 + $0x40] sm:$0xf] %vm411, %v718
        %v754 = vld [vmem:[%s720 + $0x44] sm:$0x1]
        %v755 = vsel %vm415, %v719, %v754
        %756 = vst [vmem:[%s720 + $0x44] sm:$0x1] %v755
        %s757 = scalar_lea.vmem %s276, 432
        %v758 = vld [vmem:[%s757] sm:$0xff]
        %v759 = vld [vmem:[%s757 + $0x8] sm:$0x1]
        %v760 = vld [vmem:[%s757 + $0x10] sm:$0xff]
        %v761 = vld [vmem:[%s757 + $0x18] sm:$0x1]
        %v762 = vld [vmem:[%s757 + $0x20] sm:$0xff]
        %v763 = vld [vmem:[%s757 + $0x28] sm:$0x1]
        %v764 = vld [vmem:[%s757 + $0x30] sm:$0xff]
        %v765 = vld [vmem:[%s757 + $0x38] sm:$0x1]
        %v766 = vld [vmem:[%s757 + $0x40] sm:$0xff]
        %v767 = vld [vmem:[%s757 + $0x48] sm:$0x1]
        %v768 = vld [vmem:[%s757 + $0x50] sm:$0xff]
        %v769 = vld [vmem:[%s757 + $0x58] sm:$0x1]
        %v770 = vld [vmem:[%s757 + $0x60] sm:$0xff]
        %v771 = vld [vmem:[%s757 + $0x68] sm:$0x1]
        %v772 = vld [vmem:[%s757 + $0x70] sm:$0xff]
        %v773 = vld [vmem:[%s757 + $0x78] sm:$0x1]
        %v774 = vld [vmem:[%s757 + $0x80] sm:$0xff]
        %v775 = vld [vmem:[%s757 + $0x88] sm:$0x1]
        %v776 = vmul.f32 %v758, %v316
        %v777 = vmul.f32 %v759, %v316
        %v778 = vmul.f32 %v760, %v316
        %v779 = vmul.f32 %v761, %v316
        %v780 = vmul.f32 %v762, %v316
        %v781 = vmul.f32 %v763, %v316
        %v782 = vmul.f32 %v764, %v316
        %v783 = vmul.f32 %v765, %v316
        %v784 = vmul.f32 %v766, %v316
        %v785 = vmul.f32 %v767, %v316
        %v786 = vmul.f32 %v768, %v316
        %v787 = vmul.f32 %v769, %v316
        %v788 = vmul.f32 %v770, %v316
        %v789 = vmul.f32 %v771, %v316
        %v790 = vmul.f32 %v772, %v316
        %v791 = vmul.f32 %v773, %v316
        %v792 = vmul.f32 %v774, %v316
        %v793 = vmul.f32 %v775, %v316
        %v794 = vadd.f32 %v776, %v337
        %v795 = vadd.f32 %v777, %v337
        %v796 = vadd.f32 %v778, %v337
        %v797 = vadd.f32 %v779, %v337
        %v798 = vadd.f32 %v780, %v337
        %v799 = vadd.f32 %v781, %v337
        %v800 = vadd.f32 %v782, %v337
        %v801 = vadd.f32 %v783, %v337
        %v802 = vadd.f32 %v784, %v337
        %v803 = vadd.f32 %v785, %v337
        %v804 = vadd.f32 %v786, %v337
        %v805 = vadd.f32 %v787, %v337
        %v806 = vadd.f32 %v788, %v337
        %v807 = vadd.f32 %v789, %v337
        %v808 = vadd.f32 %v790, %v337
        %v809 = vadd.f32 %v791, %v337
        %v810 = vadd.f32 %v792, %v337
        %v811 = vadd.f32 %v793, %v337
        %v812 = vmax.f32 %v794, 0.0
        %v813 = vmax.f32 %v795, 0.0
        %v814 = vmax.f32 %v796, 0.0
        %v815 = vmax.f32 %v797, 0.0
        %v816 = vmax.f32 %v798, 0.0
        %v817 = vmax.f32 %v799, 0.0
        %v818 = vmax.f32 %v800, 0.0
        %v819 = vmax.f32 %v801, 0.0
        %v820 = vmax.f32 %v802, 0.0
        %v821 = vmax.f32 %v803, 0.0
        %v822 = vmax.f32 %v804, 0.0
        %v823 = vmax.f32 %v805, 0.0
        %v824 = vmax.f32 %v806, 0.0
        %v825 = vmax.f32 %v807, 0.0
        %v826 = vmax.f32 %v808, 0.0
        %v827 = vmax.f32 %v809, 0.0
        %v828 = vmax.f32 %v810, 0.0
        %v829 = vmax.f32 %v811, 0.0
        %v830 = vsel %vm463, %v812, 0.0
        %v831 = vsel %vm464, %v813, 0.0
        %v832 = vsel %vm463, %v814, 0.0
        %v833 = vsel %vm464, %v815, 0.0
        %v834 = vsel %vm463, %v816, 0.0
        %v835 = vsel %vm464, %v817, 0.0
        %v836 = vsel %vm463, %v818, 0.0
        %v837 = vsel %vm464, %v819, 0.0
        %v838 = vsel %vm463, %v820, 0.0
        %v839 = vsel %vm464, %v821, 0.0
        %v840 = vsel %vm463, %v822, 0.0
        %v841 = vsel %vm464, %v823, 0.0
        %v842 = vsel %vm463, %v824, 0.0
        %v843 = vsel %vm464, %v825, 0.0
        %v844 = vsel %vm463, %v826, 0.0
        %v845 = vsel %vm464, %v827, 0.0
        %v846 = vsel %vm461, %v828, 0.0
        %v847 = vsel %vm462, %v829, 0.0
        %v848 = vpack.c.bf16 %v830, %v830
        %v849 = vpack.c.bf16 %v831, %v831
        %v850 = vpack.c.bf16 %v832, %v832
        %v851 = vpack.c.bf16 %v833, %v833
        %v852 = vpack.c.bf16 %v834, %v834
        %v853 = vpack.c.bf16 %v835, %v835
        %v854 = vpack.c.bf16 %v836, %v836
        %v855 = vpack.c.bf16 %v837, %v837
        %v856 = vpack.c.bf16 %v838, %v838
        %v857 = vpack.c.bf16 %v839, %v839
        %v858 = vpack.c.bf16 %v840, %v840
        %v859 = vpack.c.bf16 %v841, %v841
        %v860 = vpack.c.bf16 %v842, %v842
        %v861 = vpack.c.bf16 %v843, %v843
        %v862 = vpack.c.bf16 %v844, %v844
        %v863 = vpack.c.bf16 %v845, %v845
        %v864 = vpack.c.bf16 %v846, %v846
        %v865 = vpack.c.bf16 %v847, %v847
        %s866 = scalar_lea.vmem [#allocation2], 216
        %867 = vst.msk [vmem:[%s866] sm:$0xf] %vm411, %v848
        %v868 = vld [vmem:[%s866 + $0x4] sm:$0x1]
        %v869 = vsel %vm415, %v849, %v868
        %870 = vst [vmem:[%s866 + $0x4] sm:$0x1] %v869
        %871 = vst.msk [vmem:[%s866 + $0x8] sm:$0xf] %vm411, %v850
        %v872 = vld [vmem:[%s866 + $0xc] sm:$0x1]
        %v873 = vsel %vm415, %v851, %v872
        %874 = vst [vmem:[%s866 + $0xc] sm:$0x1] %v873
        %875 = vst.msk [vmem:[%s866 + $0x10] sm:$0xf] %vm411, %v852
        %v876 = vld [vmem:[%s866 + $0x14] sm:$0x1]
        %v877 = vsel %vm415, %v853, %v876
        %878 = vst [vmem:[%s866 + $0x14] sm:$0x1] %v877
        %879 = vst.msk [vmem:[%s866 + $0x18] sm:$0xf] %vm411, %v854
        %v880 = vld [vmem:[%s866 + $0x1c] sm:$0x1]
        %v881 = vsel %vm415, %v855, %v880
        %882 = vst [vmem:[%s866 + $0x1c] sm:$0x1] %v881
        %883 = vst.msk [vmem:[%s866 + $0x20] sm:$0xf] %vm411, %v856
        %v884 = vld [vmem:[%s866 + $0x24] sm:$0x1]
        %v885 = vsel %vm415, %v857, %v884
        %886 = vst [vmem:[%s866 + $0x24] sm:$0x1] %v885
        %887 = vst.msk [vmem:[%s866 + $0x28] sm:$0xf] %vm411, %v858
        %v888 = vld [vmem:[%s866 + $0x2c] sm:$0x1]
        %v889 = vsel %vm415, %v859, %v888
        %890 = vst [vmem:[%s866 + $0x2c] sm:$0x1] %v889
        %891 = vst.msk [vmem:[%s866 + $0x30] sm:$0xf] %vm411, %v860
        %v892 = vld [vmem:[%s866 + $0x34] sm:$0x1]
        %v893 = vsel %vm415, %v861, %v892
        %894 = vst [vmem:[%s866 + $0x34] sm:$0x1] %v893
        %895 = vst.msk [vmem:[%s866 + $0x38] sm:$0xf] %vm411, %v862
        %v896 = vld [vmem:[%s866 + $0x3c] sm:$0x1]
        %v897 = vsel %vm415, %v863, %v896
        %898 = vst [vmem:[%s866 + $0x3c] sm:$0x1] %v897
        %899 = vst.msk [vmem:[%s866 + $0x40] sm:$0xf] %vm411, %v864
        %v900 = vld [vmem:[%s866 + $0x44] sm:$0x1]
        %v901 = vsel %vm415, %v865, %v900
        %902 = vst [vmem:[%s866 + $0x44] sm:$0x1] %v901
        %v903 = vld [vmem:[#allocation2] sm:$0xf]
        %v904 = vld [vmem:[#allocation2 + $0x8] sm:$0xf]
        %v905 = vld [vmem:[#allocation2 + $0x10] sm:$0xf]
        %v906 = vld [vmem:[#allocation2 + $0x18] sm:$0xf]
        %v907 = vld [vmem:[#allocation2 + $0x20] sm:$0xf]
        %v908 = vld [vmem:[#allocation2 + $0x28] sm:$0xf]
        %v909 = vld [vmem:[#allocation2 + $0x30] sm:$0xf]
        %v910 = vld [vmem:[#allocation2 + $0x38] sm:$0xf]
        %911 = vst.msk [vmem:[#allocation3] sm:$0xf] %vm411, %v903
        %912 = vst.msk [vmem:[#allocation3 + $0x14] sm:$0xf] %vm411, %v904
        %913 = vst.msk [vmem:[#allocation3 + $0x28] sm:$0xf] %vm411, %v905
        %914 = vst.msk [vmem:[#allocation3 + $0x3c] sm:$0xf] %vm411, %v906
        %915 = vst.msk [vmem:[#allocation3 + $0x50] sm:$0xf] %vm411, %v907
        %916 = vst.msk [vmem:[#allocation3 + $0x64] sm:$0xf] %vm411, %v908
        %917 = vst.msk [vmem:[#allocation3 + $0x78] sm:$0xf] %vm411, %v909
        %918 = vst.msk [vmem:[#allocation3 + $0x8c] sm:$0xf] %vm411, %v910
        %v919 = vld [vmem:[%s574] sm:$0xf]
        %v920 = vld [vmem:[%s574 + $0x8] sm:$0xf]
        %v921 = vld [vmem:[%s574 + $0x10] sm:$0xf]
        %v922 = vld [vmem:[%s574 + $0x18] sm:$0xf]
        %v923 = vld [vmem:[%s574 + $0x20] sm:$0xf]
        %v924 = vld [vmem:[%s574 + $0x28] sm:$0xf]
        %v925 = vld [vmem:[%s574 + $0x30] sm:$0xf]
        %v926 = vld [vmem:[%s574 + $0x38] sm:$0xf]
        %935 = vrot.lane.b32.xlu0 %v919, 64
        %v936 = vpop.permute.xlu0 %935
        %937 = vrot.lane.b32.xlu0 %v920, 64
        %v938 = vpop.permute.xlu0 %937
        %939 = vrot.lane.b32.xlu0 %v921, 64
        %v940 = vpop.permute.xlu0 %939
        %941 = vrot.lane.b32.xlu0 %v922, 64
        %v942 = vpop.permute.xlu0 %941
        %943 = vrot.lane.b32.xlu0 %v923, 64
        %v944 = vpop.permute.xlu0 %943
        %945 = vrot.lane.b32.xlu0 %v924, 64
        %v946 = vpop.permute.xlu0 %945
        %947 = vrot.lane.b32.xlu0 %v925, 64
        %v948 = vpop.permute.xlu0 %947
        %949 = vrot.lane.b32.xlu0 %v926, 64
        %v950 = vpop.permute.xlu0 %949
        %vm959 = vcmask 1043968
        %960 = vst.msk [vmem:[#allocation3] sm:$0xf] %vm959, %v936
        %961 = vst.msk [vmem:[#allocation3 + $0x14] sm:$0xf] %vm959, %v938
        %962 = vst.msk [vmem:[#allocation3 + $0x28] sm:$0xf] %vm959, %v940
        %963 = vst.msk [vmem:[#allocation3 + $0x3c] sm:$0xf] %vm959, %v942
        %964 = vst.msk [vmem:[#allocation3 + $0x50] sm:$0xf] %vm959, %v944
        %965 = vst.msk [vmem:[#allocation3 + $0x64] sm:$0xf] %vm959, %v946
        %966 = vst.msk [vmem:[#allocation3 + $0x78] sm:$0xf] %vm959, %v948
        %967 = vst.msk [vmem:[#allocation3 + $0x8c] sm:$0xf] %vm959, %v950
        %v968 = vld [vmem:[#allocation2] sm:$0xf]
        %v969 = vld [vmem:[#allocation2 + $0x4] sm:$0x1]
        %v970 = vld [vmem:[#allocation2 + $0x8] sm:$0xf]
        %v971 = vld [vmem:[#allocation2 + $0xc] sm:$0x1]
        %v972 = vld [vmem:[#allocation2 + $0x10] sm:$0xf]
        %v973 = vld [vmem:[#allocation2 + $0x14] sm:$0x1]
        %v974 = vld [vmem:[#allocation2 + $0x18] sm:$0xf]
        %v975 = vld [vmem:[#allocation2 + $0x1c] sm:$0x1]
        %v976 = vld [vmem:[#allocation2 + $0x20] sm:$0xf]
        %v977 = vld [vmem:[#allocation2 + $0x24] sm:$0x1]
        %v978 = vld [vmem:[#allocation2 + $0x28] sm:$0xf]
        %v979 = vld [vmem:[#allocation2 + $0x2c] sm:$0x1]
        %v980 = vld [vmem:[#allocation2 + $0x30] sm:$0xf]
        %v981 = vld [vmem:[#allocation2 + $0x34] sm:$0x1]
        %v982 = vld [vmem:[#allocation2 + $0x38] sm:$0xf]
        %v983 = vld [vmem:[#allocation2 + $0x3c] sm:$0x1]
        %vm984 = vsmask.f32 3328
        %vm985 = vsmask.f32 7440
        %vm986 = vmor %vm984, %vm985
        %v988 = vshrl.u32 %v968, 16
        %v990 = vrot.slane %v988, 4
        %v991 = vshll.u32 %v968, 16
        %v993 = vrot.slane %v991, 5
        %v994 = vor.u32 %v990, %v993
        %v995 = vrot.slane %v994, 4
        %v997 = vshll.u32 %v969, 16
        %v999 = vrot.slane %v997, 5
        %v1000 = vsel %vm986, %v995, %v999
        %v1002 = vshrl.u32 %v970, 16
        %v1004 = vrot.slane %v1002, 4
        %v1005 = vshll.u32 %v970, 16
        %v1007 = vrot.slane %v1005, 5
        %v1008 = vor.u32 %v1004, %v1007
        %v1009 = vrot.slane %v1008, 4
        %v1011 = vshll.u32 %v971, 16
        %v1013 = vrot.slane %v1011, 5
        %v1014 = vsel %vm986, %v1009, %v1013
        %v1016 = vshrl.u32 %v972, 16
        %v1018 = vrot.slane %v1016, 4
        %v1019 = vshll.u32 %v972, 16
        %v1021 = vrot.slane %v1019, 5
        %v1022 = vor.u32 %v1018, %v1021
        %v1023 = vrot.slane %v1022, 4
        %v1025 = vshll.u32 %v973, 16
        %v1027 = vrot.slane %v1025, 5
        %v1028 = vsel %vm986, %v1023, %v1027
        %v1030 = vshrl.u32 %v974, 16
        %v1032 = vrot.slane %v1030, 4
        %v1033 = vshll.u32 %v974, 16
        %v1035 = vrot.slane %v1033, 5
        %v1036 = vor.u32 %v1032, %v1035
        %v1037 = vrot.slane %v1036, 4
        %v1039 = vshll.u32 %v975, 16
        %v1041 = vrot.slane %v1039, 5
        %v1042 = vsel %vm986, %v1037, %v1041
        %v1044 = vshrl.u32 %v976, 16
        %v1046 = vrot.slane %v1044, 4
        %v1047 = vshll.u32 %v976, 16
        %v1049 = vrot.slane %v1047, 5
        %v1050 = vor.u32 %v1046, %v1049
        %v1051 = vrot.slane %v1050, 4
        %v1053 = vshll.u32 %v977, 16
        %v1055 = vrot.slane %v1053, 5
        %v1056 = vsel %vm986, %v1051, %v1055
        %v1058 = vshrl.u32 %v978, 16
        %v1060 = vrot.slane %v1058, 4
        %v1061 = vshll.u32 %v978, 16
        %v1063 = vrot.slane %v1061, 5
        %v1064 = vor.u32 %v1060, %v1063
        %v1065 = vrot.slane %v1064, 4
        %v1067 = vshll.u32 %v979, 16
        %v1069 = vrot.slane %v1067, 5
        %v1070 = vsel %vm986, %v1065, %v1069
        %v1072 = vshrl.u32 %v980, 16
        %v1074 = vrot.slane %v1072, 4
        %v1075 = vshll.u32 %v980, 16
        %v1077 = vrot.slane %v1075, 5
        %v1078 = vor.u32 %v1074, %v1077
        %v1079 = vrot.slane %v1078, 4
        %v1081 = vshll.u32 %v981, 16
        %v1083 = vrot.slane %v1081, 5
        %v1084 = vsel %vm986, %v1079, %v1083
        %v1086 = vshrl.u32 %v982, 16
        %v1088 = vrot.slane %v1086, 4
        %v1089 = vshll.u32 %v982, 16
        %v1091 = vrot.slane %v1089, 5
        %v1092 = vor.u32 %v1088, %v1091
        %v1093 = vrot.slane %v1092, 4
        %v1095 = vshll.u32 %v983, 16
        %v1097 = vrot.slane %v1095, 5
        %v1098 = vsel %vm986, %v1093, %v1097
        %1107 = vst.msk [vmem:[#allocation3 + $0x4] sm:$0xf] %vm411, %v1000
        %1108 = vst.msk [vmem:[#allocation3 + $0x18] sm:$0xf] %vm411, %v1014
        %1109 = vst.msk [vmem:[#allocation3 + $0x2c] sm:$0xf] %vm411, %v1028
        %1110 = vst.msk [vmem:[#allocation3 + $0x40] sm:$0xf] %vm411, %v1042
        %1111 = vst.msk [vmem:[#allocation3 + $0x54] sm:$0xf] %vm411, %v1056
        %1112 = vst.msk [vmem:[#allocation3 + $0x68] sm:$0xf] %vm411, %v1070
        %1113 = vst.msk [vmem:[#allocation3 + $0x7c] sm:$0xf] %vm411, %v1084
        %1114 = vst.msk [vmem:[#allocation3 + $0x90] sm:$0xf] %vm411, %v1098
        %v1115 = vld [vmem:[%s720] sm:$0xf]
        %v1116 = vld [vmem:[%s720 + $0x8] sm:$0xf]
        %v1117 = vld [vmem:[%s720 + $0x10] sm:$0xf]
        %v1118 = vld [vmem:[%s720 + $0x18] sm:$0xf]
        %v1119 = vld [vmem:[%s720 + $0x20] sm:$0xf]
        %v1120 = vld [vmem:[%s720 + $0x28] sm:$0xf]
        %v1121 = vld [vmem:[%s720 + $0x30] sm:$0xf]
        %v1122 = vld [vmem:[%s720 + $0x38] sm:$0xf]
        %1131 = vrot.lane.b32.xlu0 %v1115, 64
        %v1132 = vpop.permute.xlu0 %1131
        %1133 = vrot.lane.b32.xlu0 %v1116, 64
        %v1134 = vpop.permute.xlu0 %1133
        %1135 = vrot.lane.b32.xlu0 %v1117, 64
        %v1136 = vpop.permute.xlu0 %1135
        %1137 = vrot.lane.b32.xlu0 %v1118, 64
        %v1138 = vpop.permute.xlu0 %1137
        %1139 = vrot.lane.b32.xlu0 %v1119, 64
        %v1140 = vpop.permute.xlu0 %1139
        %1141 = vrot.lane.b32.xlu0 %v1120, 64
        %v1142 = vpop.permute.xlu0 %1141
        %1143 = vrot.lane.b32.xlu0 %v1121, 64
        %v1144 = vpop.permute.xlu0 %1143
        %1145 = vrot.lane.b32.xlu0 %v1122, 64
        %v1146 = vpop.permute.xlu0 %1145
        %1155 = vst.msk [vmem:[#allocation3 + $0x4] sm:$0xf] %vm959, %v1132
        %1156 = vst.msk [vmem:[#allocation3 + $0x18] sm:$0xf] %vm959, %v1134
        %1157 = vst.msk [vmem:[#allocation3 + $0x2c] sm:$0xf] %vm959, %v1136
        %1158 = vst.msk [vmem:[#allocation3 + $0x40] sm:$0xf] %vm959, %v1138
        %1159 = vst.msk [vmem:[#allocation3 + $0x54] sm:$0xf] %vm959, %v1140
        %1160 = vst.msk [vmem:[#allocation3 + $0x68] sm:$0xf] %vm959, %v1142
        %1161 = vst.msk [vmem:[#allocation3 + $0x7c] sm:$0xf] %vm959, %v1144
        %1162 = vst.msk [vmem:[#allocation3 + $0x90] sm:$0xf] %vm959, %v1146
        %v1163 = vld [vmem:[%s866] sm:$0xf]
        %v1164 = vld [vmem:[%s866 + $0x8] sm:$0xf]
        %v1165 = vld [vmem:[%s866 + $0x10] sm:$0xf]
        %v1166 = vld [vmem:[%s866 + $0x18] sm:$0xf]
        %v1167 = vld [vmem:[%s866 + $0x20] sm:$0xf]
        %v1168 = vld [vmem:[%s866 + $0x28] sm:$0xf]
        %v1169 = vld [vmem:[%s866 + $0x30] sm:$0xf]
        %v1170 = vld [vmem:[%s866 + $0x38] sm:$0xf]
        %1171 = vst.msk [vmem:[#allocation3 + $0x8] sm:$0xf] %vm411, %v1163
        %1172 = vst.msk [vmem:[#allocation3 + $0x1c] sm:$0xf] %vm411, %v1164
        %1173 = vst.msk [vmem:[#allocation3 + $0x30] sm:$0xf] %vm411, %v1165
        %1174 = vst.msk [vmem:[#allocation3 + $0x44] sm:$0xf] %vm411, %v1166
        %1175 = vst.msk [vmem:[#allocation3 + $0x58] sm:$0xf] %vm411, %v1167
        %1176 = vst.msk [vmem:[#allocation3 + $0x6c] sm:$0xf] %vm411, %v1168
        %1177 = vst.msk [vmem:[#allocation3 + $0x80] sm:$0xf] %vm411, %v1169
        %1178 = vst.msk [vmem:[#allocation3 + $0x94] sm:$0xf] %vm411, %v1170
        %v1179 = vld [vmem:[%s720] sm:$0xf]
        %v1180 = vld [vmem:[%s720 + $0x4] sm:$0x1]
        %v1181 = vld [vmem:[%s720 + $0x8] sm:$0xf]
        %v1182 = vld [vmem:[%s720 + $0xc] sm:$0x1]
        %v1183 = vld [vmem:[%s720 + $0x10] sm:$0xf]
        %v1184 = vld [vmem:[%s720 + $0x14] sm:$0x1]
        %v1185 = vld [vmem:[%s720 + $0x18] sm:$0xf]
        %v1186 = vld [vmem:[%s720 + $0x1c] sm:$0x1]
        %v1187 = vld [vmem:[%s720 + $0x20] sm:$0xf]
        %v1188 = vld [vmem:[%s720 + $0x24] sm:$0x1]
        %v1189 = vld [vmem:[%s720 + $0x28] sm:$0xf]
        %v1190 = vld [vmem:[%s720 + $0x2c] sm:$0x1]
        %v1191 = vld [vmem:[%s720 + $0x30] sm:$0xf]
        %v1192 = vld [vmem:[%s720 + $0x34] sm:$0x1]
        %v1193 = vld [vmem:[%s720 + $0x38] sm:$0xf]
        %v1194 = vld [vmem:[%s720 + $0x3c] sm:$0x1]
        %v1196 = vshrl.u32 %v1179, 16
        %v1198 = vrot.slane %v1196, 4
        %v1199 = vshll.u32 %v1179, 16
        %v1201 = vrot.slane %v1199, 5
        %v1202 = vor.u32 %v1198, %v1201
        %v1203 = vrot.slane %v1202, 4
        %v1205 = vshll.u32 %v1180, 16
        %v1207 = vrot.slane %v1205, 5
        %v1208 = vsel %vm986, %v1203, %v1207
        %v1210 = vshrl.u32 %v1181, 16
        %v1212 = vrot.slane %v1210, 4
        %v1213 = vshll.u32 %v1181, 16
        %v1215 = vrot.slane %v1213, 5
        %v1216 = vor.u32 %v1212, %v1215
        %v1217 = vrot.slane %v1216, 4
        %v1219 = vshll.u32 %v1182, 16
        %v1221 = vrot.slane %v1219, 5
        %v1222 = vsel %vm986, %v1217, %v1221
        %v1224 = vshrl.u32 %v1183, 16
        %v1226 = vrot.slane %v1224, 4
        %v1227 = vshll.u32 %v1183, 16
        %v1229 = vrot.slane %v1227, 5
        %v1230 = vor.u32 %v1226, %v1229
        %v1231 = vrot.slane %v1230, 4
        %v1233 = vshll.u32 %v1184, 16
        %v1235 = vrot.slane %v1233, 5
        %v1236 = vsel %vm986, %v1231, %v1235
        %v1238 = vshrl.u32 %v1185, 16
        %v1240 = vrot.slane %v1238, 4
        %v1241 = vshll.u32 %v1185, 16
        %v1243 = vrot.slane %v1241, 5
        %v1244 = vor.u32 %v1240, %v1243
        %v1245 = vrot.slane %v1244, 4
        %v1247 = vshll.u32 %v1186, 16
        %v1249 = vrot.slane %v1247, 5
        %v1250 = vsel %vm986, %v1245, %v1249
        %v1252 = vshrl.u32 %v1187, 16
        %v1254 = vrot.slane %v1252, 4
        %v1255 = vshll.u32 %v1187, 16
        %v1257 = vrot.slane %v1255, 5
        %v1258 = vor.u32 %v1254, %v1257
        %v1259 = vrot.slane %v1258, 4
        %v1261 = vshll.u32 %v1188, 16
        %v1263 = vrot.slane %v1261, 5
        %v1264 = vsel %vm986, %v1259, %v1263
        %v1266 = vshrl.u32 %v1189, 16
        %v1268 = vrot.slane %v1266, 4
        %v1269 = vshll.u32 %v1189, 16
        %v1271 = vrot.slane %v1269, 5
        %v1272 = vor.u32 %v1268, %v1271
        %v1273 = vrot.slane %v1272, 4
        %v1275 = vshll.u32 %v1190, 16
        %v1277 = vrot.slane %v1275, 5
        %v1278 = vsel %vm986, %v1273, %v1277
        %v1280 = vshrl.u32 %v1191, 16
        %v1282 = vrot.slane %v1280, 4
        %v1283 = vshll.u32 %v1191, 16
        %v1285 = vrot.slane %v1283, 5
        %v1286 = vor.u32 %v1282, %v1285
        %v1287 = vrot.slane %v1286, 4
        %v1289 = vshll.u32 %v1192, 16
        %v1291 = vrot.slane %v1289, 5
        %v1292 = vsel %vm986, %v1287, %v1291
        %v1294 = vshrl.u32 %v1193, 16
        %v1296 = vrot.slane %v1294, 4
        %v1297 = vshll.u32 %v1193, 16
        %v1299 = vrot.slane %v1297, 5
        %v1300 = vor.u32 %v1296, %v1299
        %v1301 = vrot.slane %v1300, 4
        %v1303 = vshll.u32 %v1194, 16
        %v1305 = vrot.slane %v1303, 5
        %v1306 = vsel %vm986, %v1301, %v1305
        %1307 = vrot.lane.b32.xlu0 %v1208, 64
        %v1308 = vpop.permute.xlu0 %1307
        %1309 = vrot.lane.b32.xlu0 %v1222, 64
        %v1310 = vpop.permute.xlu0 %1309
        %1311 = vrot.lane.b32.xlu0 %v1236, 64
        %v1312 = vpop.permute.xlu0 %1311
        %1313 = vrot.lane.b32.xlu0 %v1250, 64
        %v1314 = vpop.permute.xlu0 %1313
        %1315 = vrot.lane.b32.xlu0 %v1264, 64
        %v1316 = vpop.permute.xlu0 %1315
        %1317 = vrot.lane.b32.xlu0 %v1278, 64
        %v1318 = vpop.permute.xlu0 %1317
        %1319 = vrot.lane.b32.xlu0 %v1292, 64
        %v1320 = vpop.permute.xlu0 %1319
        %1321 = vrot.lane.b32.xlu0 %v1306, 64
        %v1322 = vpop.permute.xlu0 %1321
        %1331 = vst.msk [vmem:[#allocation3 + $0x8] sm:$0xf] %vm959, %v1308
        %1332 = vst.msk [vmem:[#allocation3 + $0x1c] sm:$0xf] %vm959, %v1310
        %1333 = vst.msk [vmem:[#allocation3 + $0x30] sm:$0xf] %vm959, %v1312
        %1334 = vst.msk [vmem:[#allocation3 + $0x44] sm:$0xf] %vm959, %v1314
        %1335 = vst.msk [vmem:[#allocation3 + $0x58] sm:$0xf] %vm959, %v1316
        %1336 = vst.msk [vmem:[#allocation3 + $0x6c] sm:$0xf] %vm959, %v1318
        %1337 = vst.msk [vmem:[#allocation3 + $0x80] sm:$0xf] %vm959, %v1320
        %1338 = vst.msk [vmem:[#allocation3 + $0x94] sm:$0xf] %vm959, %v1322
        %s1339 = scalar_lea.vmem [#allocation2], 8
        %v1340 = vld [vmem:[%s1339] sm:$0xf]
        %v1341 = vld [vmem:[%s1339 + $0x8] sm:$0xf]
        %v1342 = vld [vmem:[%s1339 + $0x10] sm:$0xf]
        %v1343 = vld [vmem:[%s1339 + $0x18] sm:$0xf]
        %v1344 = vld [vmem:[%s1339 + $0x20] sm:$0xf]
        %v1345 = vld [vmem:[%s1339 + $0x28] sm:$0xf]
        %v1346 = vld [vmem:[%s1339 + $0x30] sm:$0xf]
        %v1347 = vld [vmem:[%s1339 + $0x38] sm:$0xf]
        %1348 = vst.msk [vmem:[#allocation3 + $0xc] sm:$0xf] %vm411, %v1340
        %1349 = vst.msk [vmem:[#allocation3 + $0x20] sm:$0xf] %vm411, %v1341
        %1350 = vst.msk [vmem:[#allocation3 + $0x34] sm:$0xf] %vm411, %v1342
        %1351 = vst.msk [vmem:[#allocation3 + $0x48] sm:$0xf] %vm411, %v1343
        %1352 = vst.msk [vmem:[#allocation3 + $0x5c] sm:$0xf] %vm411, %v1344
        %1353 = vst.msk [vmem:[#allocation3 + $0x70] sm:$0xf] %vm411, %v1345
        %1354 = vst.msk [vmem:[#allocation3 + $0x84] sm:$0xf] %vm411, %v1346
        %1355 = vst.msk [vmem:[#allocation3 + $0x98] sm:$0xf] %vm411, %v1347
        %s1356 = scalar_lea.vmem [#allocation2], 80
        %v1357 = vld [vmem:[%s1356] sm:$0xf]
        %v1358 = vld [vmem:[%s1356 + $0x8] sm:$0xf]
        %v1359 = vld [vmem:[%s1356 + $0x10] sm:$0xf]
        %v1360 = vld [vmem:[%s1356 + $0x18] sm:$0xf]
        %v1361 = vld [vmem:[%s1356 + $0x20] sm:$0xf]
        %v1362 = vld [vmem:[%s1356 + $0x28] sm:$0xf]
        %v1363 = vld [vmem:[%s1356 + $0x30] sm:$0xf]
        %v1364 = vld [vmem:[%s1356 + $0x38] sm:$0xf]
        %1373 = vrot.lane.b32.xlu0 %v1357, 64
        %v1374 = vpop.permute.xlu0 %1373
        %1375 = vrot.lane.b32.xlu0 %v1358, 64
        %v1376 = vpop.permute.xlu0 %1375
        %1377 = vrot.lane.b32.xlu0 %v1359, 64
        %v1378 = vpop.permute.xlu0 %1377
        %1379 = vrot.lane.b32.xlu0 %v1360, 64
        %v1380 = vpop.permute.xlu0 %1379
        %1381 = vrot.lane.b32.xlu0 %v1361, 64
        %v1382 = vpop.permute.xlu0 %1381
        %1383 = vrot.lane.b32.xlu0 %v1362, 64
        %v1384 = vpop.permute.xlu0 %1383
        %1385 = vrot.lane.b32.xlu0 %v1363, 64
        %v1386 = vpop.permute.xlu0 %1385
        %1387 = vrot.lane.b32.xlu0 %v1364, 64
        %v1388 = vpop.permute.xlu0 %1387
        %1397 = vst.msk [vmem:[#allocation3 + $0xc] sm:$0xf] %vm959, %v1374
        %1398 = vst.msk [vmem:[#allocation3 + $0x20] sm:$0xf] %vm959, %v1376
        %1399 = vst.msk [vmem:[#allocation3 + $0x34] sm:$0xf] %vm959, %v1378
        %1400 = vst.msk [vmem:[#allocation3 + $0x48] sm:$0xf] %vm959, %v1380
        %1401 = vst.msk [vmem:[#allocation3 + $0x5c] sm:$0xf] %vm959, %v1382
        %1402 = vst.msk [vmem:[#allocation3 + $0x70] sm:$0xf] %vm959, %v1384
        %1403 = vst.msk [vmem:[#allocation3 + $0x84] sm:$0xf] %vm959, %v1386
        %1404 = vst.msk [vmem:[#allocation3 + $0x98] sm:$0xf] %vm959, %v1388
        %v1405 = vld [vmem:[%s1339] sm:$0xf]
        %v1406 = vld [vmem:[%s1339 + $0x4] sm:$0x1]
        %v1407 = vld [vmem:[%s1339 + $0x8] sm:$0xf]
        %v1408 = vld [vmem:[%s1339 + $0xc] sm:$0x1]
        %v1409 = vld [vmem:[%s1339 + $0x10] sm:$0xf]
        %v1410 = vld [vmem:[%s1339 + $0x14] sm:$0x1]
        %v1411 = vld [vmem:[%s1339 + $0x18] sm:$0xf]
        %v1412 = vld [vmem:[%s1339 + $0x1c] sm:$0x1]
        %v1413 = vld [vmem:[%s1339 + $0x20] sm:$0xf]
        %v1414 = vld [vmem:[%s1339 + $0x24] sm:$0x1]
        %v1415 = vld [vmem:[%s1339 + $0x28] sm:$0xf]
        %v1416 = vld [vmem:[%s1339 + $0x2c] sm:$0x1]
        %v1417 = vld [vmem:[%s1339 + $0x30] sm:$0xf]
        %v1418 = vld [vmem:[%s1339 + $0x34] sm:$0x1]
        %v1419 = vld [vmem:[%s1339 + $0x38] sm:$0xf]
        %v1420 = vld [vmem:[%s1339 + $0x3c] sm:$0x1]
        %v1422 = vshrl.u32 %v1405, 16
        %v1424 = vrot.slane %v1422, 4
        %v1425 = vshll.u32 %v1405, 16
        %v1427 = vrot.slane %v1425, 5
        %v1428 = vor.u32 %v1424, %v1427
        %v1429 = vrot.slane %v1428, 4
        %v1431 = vshll.u32 %v1406, 16
        %v1433 = vrot.slane %v1431, 5
        %v1434 = vsel %vm986, %v1429, %v1433
        %v1436 = vshrl.u32 %v1407, 16
        %v1438 = vrot.slane %v1436, 4
        %v1439 = vshll.u32 %v1407, 16
        %v1441 = vrot.slane %v1439, 5
        %v1442 = vor.u32 %v1438, %v1441
        %v1443 = vrot.slane %v1442, 4
        %v1445 = vshll.u32 %v1408, 16
        %v1447 = vrot.slane %v1445, 5
        %v1448 = vsel %vm986, %v1443, %v1447
        %v1450 = vshrl.u32 %v1409, 16
        %v1452 = vrot.slane %v1450, 4
        %v1453 = vshll.u32 %v1409, 16
        %v1455 = vrot.slane %v1453, 5
        %v1456 = vor.u32 %v1452, %v1455
        %v1457 = vrot.slane %v1456, 4
        %v1459 = vshll.u32 %v1410, 16
        %v1461 = vrot.slane %v1459, 5
        %v1462 = vsel %vm986, %v1457, %v1461
        %v1464 = vshrl.u32 %v1411, 16
        %v1466 = vrot.slane %v1464, 4
        %v1467 = vshll.u32 %v1411, 16
        %v1469 = vrot.slane %v1467, 5
        %v1470 = vor.u32 %v1466, %v1469
        %v1471 = vrot.slane %v1470, 4
        %v1473 = vshll.u32 %v1412, 16
        %v1475 = vrot.slane %v1473, 5
        %v1476 = vsel %vm986, %v1471, %v1475
        %v1478 = vshrl.u32 %v1413, 16
        %v1480 = vrot.slane %v1478, 4
        %v1481 = vshll.u32 %v1413, 16
        %v1483 = vrot.slane %v1481, 5
        %v1484 = vor.u32 %v1480, %v1483
        %v1485 = vrot.slane %v1484, 4
        %v1487 = vshll.u32 %v1414, 16
        %v1489 = vrot.slane %v1487, 5
        %v1490 = vsel %vm986, %v1485, %v1489
        %v1492 = vshrl.u32 %v1415, 16
        %v1494 = vrot.slane %v1492, 4
        %v1495 = vshll.u32 %v1415, 16
        %v1497 = vrot.slane %v1495, 5
        %v1498 = vor.u32 %v1494, %v1497
        %v1499 = vrot.slane %v1498, 4
        %v1501 = vshll.u32 %v1416, 16
        %v1503 = vrot.slane %v1501, 5
        %v1504 = vsel %vm986, %v1499, %v1503
        %v1506 = vshrl.u32 %v1417, 16
        %v1508 = vrot.slane %v1506, 4
        %v1509 = vshll.u32 %v1417, 16
        %v1511 = vrot.slane %v1509, 5
        %v1512 = vor.u32 %v1508, %v1511
        %v1513 = vrot.slane %v1512, 4
        %v1515 = vshll.u32 %v1418, 16
        %v1517 = vrot.slane %v1515, 5
        %v1518 = vsel %vm986, %v1513, %v1517
        %v1520 = vshrl.u32 %v1419, 16
        %v1522 = vrot.slane %v1520, 4
        %v1523 = vshll.u32 %v1419, 16
        %v1525 = vrot.slane %v1523, 5
        %v1526 = vor.u32 %v1522, %v1525
        %v1527 = vrot.slane %v1526, 4
        %v1529 = vshll.u32 %v1420, 16
        %v1531 = vrot.slane %v1529, 5
        %v1532 = vsel %vm986, %v1527, %v1531
        %1541 = vst.msk [vmem:[#allocation3 + $0x10] sm:$0xf] %vm411, %v1434
        %1542 = vst.msk [vmem:[#allocation3 + $0x24] sm:$0xf] %vm411, %v1448
        %1543 = vst.msk [vmem:[#allocation3 + $0x38] sm:$0xf] %vm411, %v1462
        %1544 = vst.msk [vmem:[#allocation3 + $0x4c] sm:$0xf] %vm411, %v1476
        %1545 = vst.msk [vmem:[#allocation3 + $0x60] sm:$0xf] %vm411, %v1490
        %1546 = vst.msk [vmem:[#allocation3 + $0x74] sm:$0xf] %vm411, %v1504
        %1547 = vst.msk [vmem:[#allocation3 + $0x88] sm:$0xf] %vm411, %v1518
        %1548 = vst.msk [vmem:[#allocation3 + $0x9c] sm:$0xf] %vm411, %v1532
        %v1549 = vld [vmem:[#allocation3] sm:$0xff]
        %v1550 = vld [vmem:[#allocation3 + $0x8] sm:$0xff]
        %v1551 = vld [vmem:[#allocation3 + $0x10] sm:$0xf]
        %v1552 = vld [vmem:[#allocation3 + $0x14] sm:$0xff]
        %v1553 = vld [vmem:[#allocation3 + $0x1c] sm:$0xff]
        %v1554 = vld [vmem:[#allocation3 + $0x24] sm:$0xf]
        %v1555 = vld [vmem:[#allocation3 + $0x28] sm:$0xff]
        %v1556 = vld [vmem:[#allocation3 + $0x30] sm:$0xff]
        %v1557 = vld [vmem:[#allocation3 + $0x38] sm:$0xf]
        %v1558 = vld [vmem:[#allocation3 + $0x3c] sm:$0xff]
        %v1559 = vld [vmem:[#allocation3 + $0x44] sm:$0xff]
        %v1560 = vld [vmem:[#allocation3 + $0x4c] sm:$0xf]
        %v1561 = vld [vmem:[#allocation3 + $0x50] sm:$0xff]
        %v1562 = vld [vmem:[#allocation3 + $0x58] sm:$0xff]
        %v1563 = vld [vmem:[#allocation3 + $0x60] sm:$0xf]
        %v1564 = vld [vmem:[#allocation3 + $0x64] sm:$0xff]
        %v1565 = vld [vmem:[#allocation3 + $0x6c] sm:$0xff]
        %v1566 = vld [vmem:[#allocation3 + $0x74] sm:$0xf]
        %v1567 = vld [vmem:[#allocation3 + $0x78] sm:$0xff]
        %v1568 = vld [vmem:[#allocation3 + $0x80] sm:$0xff]
        %v1569 = vld [vmem:[#allocation3 + $0x88] sm:$0xf]
        %v1570 = vld [vmem:[#allocation3 + $0x8c] sm:$0xff]
        %v1571 = vld [vmem:[#allocation3 + $0x94] sm:$0xff]
        %v1572 = vld [vmem:[#allocation3 + $0x9c] sm:$0xf]
        %v1573 = vld [vmem:[%s3] sm:$0xff]
        %v1574 = vld [vmem:[%s3 + $0x8] sm:$0xff]
        %v1575 = vld [vmem:[%s3 + $0x10] sm:$0xff]
        %v1576 = vld [vmem:[%s3 + $0x18] sm:$0xff]
        %v1577 = vld [vmem:[%s3 + $0x20] sm:$0xff]
        %v1578 = vld [vmem:[%s3 + $0x28] sm:$0xff]
        %v1579 = vld [vmem:[%s3 + $0x30] sm:$0xff]
        %v1580 = vld [vmem:[%s3 + $0x38] sm:$0xff]
        %v1581 = vld [vmem:[%s3 + $0x40] sm:$0xff]
        %v1582 = vld [vmem:[%s3 + $0x48] sm:$0xff]
        %v1583 = vld [vmem:[%s3 + $0x50] sm:$0xff]
        %v1584 = vld [vmem:[%s3 + $0x58] sm:$0xff]
        %v1585 = vld [vmem:[%s3 + $0x60] sm:$0xff]
        %v1586 = vld [vmem:[%s3 + $0x68] sm:$0xff]
        %v1587 = vld [vmem:[%s3 + $0x70] sm:$0xff]
        %v1588 = vld [vmem:[%s3 + $0x78] sm:$0xff]
        %v1589 = vld [vmem:[%s3 + $0x80] sm:$0xff]
        %v1590 = vld [vmem:[%s3 + $0x88] sm:$0xff]
        %v1591 = vld [vmem:[%s3 + $0x90] sm:$0xff]
        %v1592 = vld [vmem:[%s3 + $0x98] sm:$0xff]
        %v1593 = vld [vmem:[%s3 + $0xa0] sm:$0xff]
        %v1594 = vld [vmem:[%s3 + $0xa8] sm:$0xff]
        %v1595 = vld [vmem:[%s3 + $0xb0] sm:$0xff]
        %v1596 = vld [vmem:[%s3 + $0xb8] sm:$0xff]
        %v1597 = vld [vmem:[%s3 + $0xc0] sm:$0xff]
        %v1598 = vld [vmem:[%s3 + $0xc8] sm:$0xff]
        %v1599 = vld [vmem:[%s3 + $0xd0] sm:$0xff]
        %v1600 = vld [vmem:[%s3 + $0xd8] sm:$0xff]
        %v1601 = vld [vmem:[%s3 + $0xe0] sm:$0xff]
        %v1602 = vld [vmem:[%s3 + $0xe8] sm:$0xff]
        %v1603 = vld [vmem:[%s3 + $0xf0] sm:$0xff]
        %v1604 = vld [vmem:[%s3 + $0xf8] sm:$0xff]
        %v1605 = vld [vmem:[%s3 + $0x100] sm:$0xff]
        %v1606 = vld [vmem:[%s3 + $0x108] sm:$0xff]
        %v1607 = vld [vmem:[%s3 + $0x110] sm:$0xff]
        %v1608 = vld [vmem:[%s3 + $0x118] sm:$0xff]
        %v1609 = vld [vmem:[%s3 + $0x120] sm:$0xff]
        %v1610 = vld [vmem:[%s3 + $0x128] sm:$0xff]
        %v1611 = vld [vmem:[%s3 + $0x130] sm:$0xff]
        %v1612 = vld [vmem:[%s3 + $0x138] sm:$0xff]
        %v1613 = vld [vmem:[%s3 + $0x140] sm:$0xff]
        %v1614 = vld [vmem:[%s3 + $0x148] sm:$0xff]
        %v1615 = vld [vmem:[%s3 + $0x150] sm:$0xff]
        %v1616 = vld [vmem:[%s3 + $0x158] sm:$0xff]
        %v1617 = vld [vmem:[%s3 + $0x160] sm:$0xff]
        %v1618 = vld [vmem:[%s3 + $0x168] sm:$0xff]
        %v1619 = vld [vmem:[%s3 + $0x170] sm:$0xff]
        %v1620 = vld [vmem:[%s3 + $0x178] sm:$0xff]
        %v1621 = vld [vmem:[%s3 + $0x180] sm:$0xff]
        %v1622 = vld [vmem:[%s3 + $0x188] sm:$0xff]
        %v1623 = vld [vmem:[%s3 + $0x190] sm:$0xff]
        %v1624 = vld [vmem:[%s3 + $0x198] sm:$0xff]
        %v1625 = vld [vmem:[%s3 + $0x1a0] sm:$0xff]
        %v1626 = vld [vmem:[%s3 + $0x1a8] sm:$0xff]
        %v1627 = vld [vmem:[%s3 + $0x1b0] sm:$0xff]
        %v1628 = vld [vmem:[%s3 + $0x1b8] sm:$0xff]
        %v1629 = vld [vmem:[%s3 + $0x1c0] sm:$0xff]
        %v1630 = vld [vmem:[%s3 + $0x1c8] sm:$0xff]
        %v1631 = vld [vmem:[%s3 + $0x1d0] sm:$0xff]
        %v1632 = vld [vmem:[%s3 + $0x1d8] sm:$0xff]
        %v1633 = vld [vmem:[%s3 + $0x1e0] sm:$0xff]
        %v1634 = vld [vmem:[%s3 + $0x1e8] sm:$0xff]
        %v1635 = vld [vmem:[%s3 + $0x1f0] sm:$0xff]
        %v1636 = vld [vmem:[%s3 + $0x1f8] sm:$0xff]
        %v1637 = vld [vmem:[%s3 + $0x200] sm:$0xff]
        %v1638 = vld [vmem:[%s3 + $0x208] sm:$0xff]
        %v1639 = vld [vmem:[%s3 + $0x210] sm:$0xff]
        %v1640 = vld [vmem:[%s3 + $0x218] sm:$0xff]
        %v1641 = vld [vmem:[%s3 + $0x220] sm:$0xff]
        %v1642 = vld [vmem:[%s3 + $0x228] sm:$0xff]
        %v1643 = vld [vmem:[%s3 + $0x230] sm:$0xff]
        %v1644 = vld [vmem:[%s3 + $0x238] sm:$0xff]
        %v1669 = vunpack.c.l.b16 %v1549
        %v1670 = vunpack.c.h.b16 %v1549
        %v1671 = vunpack.c.l.b16 %v1550
        %v1672 = vunpack.c.h.b16 %v1550
        %v1673 = vunpack.c.l.b16 %v1551
        %v1674 = vunpack.c.l.b16 %v1552
        %v1675 = vunpack.c.h.b16 %v1552
        %v1676 = vunpack.c.l.b16 %v1553
        %v1677 = vunpack.c.h.b16 %v1553
        %v1678 = vunpack.c.l.b16 %v1554
        %v1679 = vunpack.c.l.b16 %v1555
        %v1680 = vunpack.c.h.b16 %v1555
        %v1681 = vunpack.c.l.b16 %v1556
        %v1682 = vunpack.c.h.b16 %v1556
        %v1683 = vunpack.c.l.b16 %v1557
        %v1684 = vunpack.c.l.b16 %v1558
        %v1685 = vunpack.c.h.b16 %v1558
        %v1686 = vunpack.c.l.b16 %v1559
        %v1687 = vunpack.c.h.b16 %v1559
        %v1688 = vunpack.c.l.b16 %v1560
        %v1689 = vunpack.c.l.b16 %v1561
        %v1690 = vunpack.c.h.b16 %v1561
        %v1691 = vunpack.c.l.b16 %v1562
        %v1692 = vunpack.c.h.b16 %v1562
        %v1693 = vunpack.c.l.b16 %v1563
        %v1694 = vunpack.c.l.b16 %v1564
        %v1695 = vunpack.c.h.b16 %v1564
        %v1696 = vunpack.c.l.b16 %v1565
        %v1697 = vunpack.c.h.b16 %v1565
        %v1698 = vunpack.c.l.b16 %v1566
        %v1699 = vunpack.c.l.b16 %v1567
        %v1700 = vunpack.c.h.b16 %v1567
        %v1701 = vunpack.c.l.b16 %v1568
        %v1702 = vunpack.c.h.b16 %v1568
        %v1703 = vunpack.c.l.b16 %v1569
        %v1704 = vunpack.c.l.b16 %v1570
        %v1705 = vunpack.c.h.b16 %v1570
        %v1706 = vunpack.c.l.b16 %v1571
        %v1707 = vunpack.c.h.b16 %v1571
        %v1708 = vunpack.c.l.b16 %v1572
        %v1709 = vpack.c.b16 %v1674, %v1669
        %v1710 = vpack.c.b16 %v1675, %v1670
        %v1711 = vpack.c.b16 %v1676, %v1671
        %v1712 = vpack.c.b16 %v1677, %v1672
        %v1713 = vpack.c.b16 %v1678, %v1673
        %v1714 = vpack.c.b16 %v1684, %v1679
        %v1715 = vpack.c.b16 %v1685, %v1680
        %v1716 = vpack.c.b16 %v1686, %v1681
        %v1717 = vpack.c.b16 %v1687, %v1682
        %v1718 = vpack.c.b16 %v1688, %v1683
        %v1719 = vpack.c.b16 %v1694, %v1689
        %v1720 = vpack.c.b16 %v1695, %v1690
        %v1721 = vpack.c.b16 %v1696, %v1691
        %v1722 = vpack.c.b16 %v1697, %v1692
        %v1723 = vpack.c.b16 %v1698, %v1693
        %v1724 = vpack.c.b16 %v1704, %v1699
        %v1725 = vpack.c.b16 %v1705, %v1700
        %v1726 = vpack.c.b16 %v1706, %v1701
        %v1727 = vpack.c.b16 %v1707, %v1702
        %v1728 = vpack.c.b16 %v1708, %v1703
        %v1817 = vunpack.c.l.b16 %v1573
        %v1818 = vunpack.c.h.b16 %v1573
        %v1819 = vunpack.c.l.b16 %v1574
        %v1820 = vunpack.c.h.b16 %v1574
        %v1821 = vunpack.c.l.b16 %v1575
        %v1822 = vunpack.c.h.b16 %v1575
        %v1823 = vunpack.c.l.b16 %v1576
        %v1824 = vunpack.c.h.b16 %v1576
        %v1825 = vunpack.c.l.b16 %v1577
        %v1826 = vunpack.c.h.b16 %v1577
        %v1827 = vunpack.c.l.b16 %v1578
        %v1828 = vunpack.c.h.b16 %v1578
        %v1829 = vunpack.c.l.b16 %v1579
        %v1830 = vunpack.c.h.b16 %v1579
        %v1831 = vunpack.c.l.b16 %v1580
        %v1832 = vunpack.c.h.b16 %v1580
        %v1833 = vunpack.c.l.b16 %v1581
        %v1834 = vunpack.c.h.b16 %v1581
        %v1835 = vunpack.c.l.b16 %v1582
        %v1836 = vunpack.c.h.b16 %v1582
        %v1837 = vunpack.c.l.b16 %v1583
        %v1838 = vunpack.c.h.b16 %v1583
        %v1839 = vunpack.c.l.b16 %v1584
        %v1840 = vunpack.c.h.b16 %v1584
        %v1841 = vunpack.c.l.b16 %v1585
        %v1842 = vunpack.c.h.b16 %v1585
        %v1843 = vunpack.c.l.b16 %v1586
        %v1844 = vunpack.c.h.b16 %v1586
        %v1845 = vunpack.c.l.b16 %v1587
        %v1846 = vunpack.c.h.b16 %v1587
        %v1847 = vunpack.c.l.b16 %v1588
        %v1848 = vunpack.c.h.b16 %v1588
        %v1849 = vunpack.c.l.b16 %v1589
        %v1850 = vunpack.c.h.b16 %v1589
        %v1851 = vunpack.c.l.b16 %v1590
        %v1852 = vunpack.c.h.b16 %v1590
        %v1853 = vunpack.c.l.b16 %v1591
        %v1854 = vunpack.c.h.b16 %v1591
        %v1855 = vunpack.c.l.b16 %v1592
        %v1856 = vunpack.c.h.b16 %v1592
        %v1857 = vunpack.c.l.b16 %v1593
        %v1858 = vunpack.c.h.b16 %v1593
        %v1859 = vunpack.c.l.b16 %v1594
        %v1860 = vunpack.c.h.b16 %v1594
        %v1861 = vunpack.c.l.b16 %v1595
        %v1862 = vunpack.c.h.b16 %v1595
        %v1863 = vunpack.c.l.b16 %v1596
        %v1864 = vunpack.c.h.b16 %v1596
        %v1865 = vunpack.c.l.b16 %v1597
        %v1866 = vunpack.c.h.b16 %v1597
        %v1867 = vunpack.c.l.b16 %v1598
        %v1868 = vunpack.c.h.b16 %v1598
        %v1869 = vunpack.c.l.b16 %v1599
        %v1870 = vunpack.c.h.b16 %v1599
        %v1871 = vunpack.c.l.b16 %v1600
        %v1872 = vunpack.c.h.b16 %v1600
        %v1873 = vunpack.c.l.b16 %v1601
        %v1874 = vunpack.c.h.b16 %v1601
        %v1875 = vunpack.c.l.b16 %v1602
        %v1876 = vunpack.c.h.b16 %v1602
        %v1877 = vunpack.c.l.b16 %v1603
        %v1878 = vunpack.c.h.b16 %v1603
        %v1879 = vunpack.c.l.b16 %v1604
        %v1880 = vunpack.c.h.b16 %v1604
        %v1881 = vunpack.c.l.b16 %v1605
        %v1882 = vunpack.c.h.b16 %v1605
        %v1883 = vunpack.c.l.b16 %v1606
        %v1884 = vunpack.c.h.b16 %v1606
        %v1885 = vunpack.c.l.b16 %v1607
        %v1886 = vunpack.c.h.b16 %v1607
        %v1887 = vunpack.c.l.b16 %v1608
        %v1888 = vunpack.c.h.b16 %v1608
        %v1889 = vunpack.c.l.b16 %v1609
        %v1890 = vunpack.c.h.b16 %v1609
        %v1891 = vunpack.c.l.b16 %v1610
        %v1892 = vunpack.c.h.b16 %v1610
        %v1893 = vunpack.c.l.b16 %v1611
        %v1894 = vunpack.c.h.b16 %v1611
        %v1895 = vunpack.c.l.b16 %v1612
        %v1896 = vunpack.c.h.b16 %v1612
        %v1897 = vunpack.c.l.b16 %v1613
        %v1898 = vunpack.c.h.b16 %v1613
        %v1899 = vunpack.c.l.b16 %v1614
        %v1900 = vunpack.c.h.b16 %v1614
        %v1901 = vunpack.c.l.b16 %v1615
        %v1902 = vunpack.c.h.b16 %v1615
        %v1903 = vunpack.c.l.b16 %v1616
        %v1904 = vunpack.c.h.b16 %v1616
        %v1905 = vunpack.c.l.b16 %v1617
        %v1906 = vunpack.c.h.b16 %v1617
        %v1907 = vunpack.c.l.b16 %v1618
        %v1908 = vunpack.c.h.b16 %v1618
        %v1909 = vunpack.c.l.b16 %v1619
        %v1910 = vunpack.c.h.b16 %v1619
        %v1911 = vunpack.c.l.b16 %v1620
        %v1912 = vunpack.c.h.b16 %v1620
        %v1913 = vunpack.c.l.b16 %v1621
        %v1914 = vunpack.c.h.b16 %v1621
        %v1915 = vunpack.c.l.b16 %v1622
        %v1916 = vunpack.c.h.b16 %v1622
        %v1917 = vunpack.c.l.b16 %v1623
        %v1918 = vunpack.c.h.b16 %v1623
        %v1919 = vunpack.c.l.b16 %v1624
        %v1920 = vunpack.c.h.b16 %v1624
        %v1921 = vunpack.c.l.b16 %v1625
        %v1922 = vunpack.c.h.b16 %v1625
        %v1923 = vunpack.c.l.b16 %v1626
        %v1924 = vunpack.c.h.b16 %v1626
        %v1925 = vunpack.c.l.b16 %v1627
        %v1926 = vunpack.c.h.b16 %v1627
        %v1927 = vunpack.c.l.b16 %v1628
        %v1928 = vunpack.c.h.b16 %v1628
        %v1929 = vunpack.c.l.b16 %v1629
        %v1930 = vunpack.c.h.b16 %v1629
        %v1931 = vunpack.c.l.b16 %v1630
        %v1932 = vunpack.c.h.b16 %v1630
        %v1933 = vunpack.c.l.b16 %v1631
        %v1934 = vunpack.c.h.b16 %v1631
        %v1935 = vunpack.c.l.b16 %v1632
        %v1936 = vunpack.c.h.b16 %v1632
        %v1937 = vunpack.c.l.b16 %v1633
        %v1938 = vunpack.c.h.b16 %v1633
        %v1939 = vunpack.c.l.b16 %v1634
        %v1940 = vunpack.c.h.b16 %v1634
        %v1941 = vunpack.c.l.b16 %v1635
        %v1942 = vunpack.c.h.b16 %v1635
        %v1943 = vunpack.c.l.b16 %v1636
        %v1944 = vunpack.c.h.b16 %v1636
        %v1945 = vunpack.c.l.b16 %v1637
        %v1946 = vunpack.c.h.b16 %v1637
        %v1947 = vunpack.c.l.b16 %v1638
        %v1948 = vunpack.c.h.b16 %v1638
        %v1949 = vunpack.c.l.b16 %v1639
        %v1950 = vunpack.c.h.b16 %v1639
        %v1951 = vunpack.c.l.b16 %v1640
        %v1952 = vunpack.c.h.b16 %v1640
        %v1953 = vunpack.c.l.b16 %v1641
        %v1954 = vunpack.c.h.b16 %v1641
        %v1955 = vunpack.c.l.b16 %v1642
        %v1956 = vunpack.c.h.b16 %v1642
        %v1957 = vunpack.c.l.b16 %v1643
        %v1958 = vunpack.c.h.b16 %v1643
        %v1959 = vunpack.c.l.b16 %v1644
        %v1960 = vunpack.c.h.b16 %v1644
        %v1961 = vpack.c.b16 %v1819, %v1817
        %v1962 = vpack.c.b16 %v1820, %v1818
        %v1963 = vpack.c.b16 %v1823, %v1821
        %v1964 = vpack.c.b16 %v1824, %v1822
        %v1965 = vpack.c.b16 %v1827, %v1825
        %v1966 = vpack.c.b16 %v1828, %v1826
        %v1967 = vpack.c.b16 %v1831, %v1829
        %v1968 = vpack.c.b16 %v1832, %v1830
        %v1969 = vpack.c.b16 %v1835, %v1833
        %v1970 = vpack.c.b16 %v1836, %v1834
        %v1971 = vpack.c.b16 %v1839, %v1837
        %v1972 = vpack.c.b16 %v1840, %v1838
        %v1973 = vpack.c.b16 %v1843, %v1841
        %v1974 = vpack.c.b16 %v1844, %v1842
        %v1975 = vpack.c.b16 %v1847, %v1845
        %v1976 = vpack.c.b16 %v1848, %v1846
        %v1977 = vpack.c.b16 %v1851, %v1849
        %v1978 = vpack.c.b16 %v1852, %v1850
        %v1979 = vpack.c.b16 %v1855, %v1853
        %v1980 = vpack.c.b16 %v1856, %v1854
        %v1981 = vpack.c.b16 %v1859, %v1857
        %v1982 = vpack.c.b16 %v1860, %v1858
        %v1983 = vpack.c.b16 %v1863, %v1861
        %v1984 = vpack.c.b16 %v1864, %v1862
        %v1985 = vpack.c.b16 %v1867, %v1865
        %v1986 = vpack.c.b16 %v1868, %v1866
        %v1987 = vpack.c.b16 %v1871, %v1869
        %v1988 = vpack.c.b16 %v1872, %v1870
        %v1989 = vpack.c.b16 %v1875, %v1873
        %v1990 = vpack.c.b16 %v1876, %v1874
        %v1991 = vpack.c.b16 %v1879, %v1877
        %v1992 = vpack.c.b16 %v1880, %v1878
        %v1993 = vpack.c.b16 %v1883, %v1881
        %v1994 = vpack.c.b16 %v1884, %v1882
        %v1995 = vpack.c.b16 %v1887, %v1885
        %v1996 = vpack.c.b16 %v1888, %v1886
        %v1997 = vpack.c.b16 %v1891, %v1889
        %v1998 = vpack.c.b16 %v1892, %v1890
        %v1999 = vpack.c.b16 %v1895, %v1893
        %v2000 = vpack.c.b16 %v1896, %v1894
        %v2001 = vpack.c.b16 %v1899, %v1897
        %v2002 = vpack.c.b16 %v1900, %v1898
        %v2003 = vpack.c.b16 %v1903, %v1901
        %v2004 = vpack.c.b16 %v1904, %v1902
        %v2005 = vpack.c.b16 %v1907, %v1905
        %v2006 = vpack.c.b16 %v1908, %v1906
        %v2007 = vpack.c.b16 %v1911, %v1909
        %v2008 = vpack.c.b16 %v1912, %v1910
        %v2009 = vpack.c.b16 %v1915, %v1913
        %v2010 = vpack.c.b16 %v1916, %v1914
        %v2011 = vpack.c.b16 %v1919, %v1917
        %v2012 = vpack.c.b16 %v1920, %v1918
        %v2013 = vpack.c.b16 %v1923, %v1921
        %v2014 = vpack.c.b16 %v1924, %v1922
        %v2015 = vpack.c.b16 %v1927, %v1925
        %v2016 = vpack.c.b16 %v1928, %v1926
        %v2017 = vpack.c.b16 %v1931, %v1929
        %v2018 = vpack.c.b16 %v1932, %v1930
        %v2019 = vpack.c.b16 %v1935, %v1933
        %v2020 = vpack.c.b16 %v1936, %v1934
        %v2021 = vpack.c.b16 %v1939, %v1937
        %v2022 = vpack.c.b16 %v1940, %v1938
        %v2023 = vpack.c.b16 %v1943, %v1941
        %v2024 = vpack.c.b16 %v1944, %v1942
        %v2025 = vpack.c.b16 %v1947, %v1945
        %v2026 = vpack.c.b16 %v1948, %v1946
        %v2027 = vpack.c.b16 %v1951, %v1949
        %v2028 = vpack.c.b16 %v1952, %v1950
        %v2029 = vpack.c.b16 %v1955, %v1953
        %v2030 = vpack.c.b16 %v1956, %v1954
        %v2031 = vpack.c.b16 %v1959, %v1957
        %v2032 = vpack.c.b16 %v1960, %v1958
        %vm2105 = vcmask 523264
        %v2107 = vsel %vm2105, %v1713, 0
        %v2110 = vsel %vm2105, %v1718, 0
        %v2113 = vsel %vm2105, %v1723, 0
        %v2116 = vsel %vm2105, %v1728, 0
        %2118 = vmatpush.bf16.msra.mxu0 %v1975
        %2119 = vmatpush.bf16.msra.mxu0 %v1973
        %2120 = vmatpush.bf16.msra.mxu0 %v1971
        %2121 = vmatpush.bf16.msra.mxu0 %v1969
        %2122 = vmatpush.bf16.msra.mxu0 %v1967
        %2123 = vmatpush.bf16.msra.mxu0 %v1965
        %2124 = vmatpush.bf16.msra.mxu0 %v1963
        %2125 = vmatpush.bf16.msra.mxu0 %v1961
        %2126 = vmatmul.bf16.gmra.mxu0 %v1709
        %v2127 = vpop.f32.mrf.mxu0
        %v2128 = vadd.f32 0.0, %v2127
        %v2129 = vpop.f32.mrf.mxu0
        %v2130 = vadd.f32 0.0, %v2129
        %2131 = vmatmul.bf16.gmra.mxu0 %v1714
        %v2132 = vpop.f32.mrf.mxu0
        %v2133 = vadd.f32 0.0, %v2132
        %v2134 = vpop.f32.mrf.mxu0
        %v2135 = vadd.f32 0.0, %v2134
        %2136 = vmatmul.bf16.gmra.mxu0 %v1719
        %v2137 = vpop.f32.mrf.mxu0
        %v2138 = vadd.f32 0.0, %v2137
        %v2139 = vpop.f32.mrf.mxu0
        %v2140 = vadd.f32 0.0, %v2139
        %2141 = vmatmul.bf16.gmra.mxu0 %v1724
        %v2142 = vpop.f32.mrf.mxu0
        %v2143 = vadd.f32 0.0, %v2142
        %v2144 = vpop.f32.mrf.mxu0
        %v2145 = vadd.f32 0.0, %v2144
        %2146 = vdwg.mxu0
        %2147 = vmatpush.bf16.msra.mxu0 %v1991
        %2148 = vmatpush.bf16.msra.mxu0 %v1989
        %2149 = vmatpush.bf16.msra.mxu0 %v1987
        %2150 = vmatpush.bf16.msra.mxu0 %v1985
        %2151 = vmatpush.bf16.msra.mxu0 %v1983
        %2152 = vmatpush.bf16.msra.mxu0 %v1981
        %2153 = vmatpush.bf16.msra.mxu0 %v1979
        %2154 = vmatpush.bf16.msra.mxu0 %v1977
        %2155 = vmatmul.bf16.gmra.mxu0 %v1710
        %v2156 = vpop.f32.mrf.mxu0
        %v2157 = vadd.f32 %v2128, %v2156
        %v2158 = vpop.f32.mrf.mxu0
        %v2159 = vadd.f32 %v2130, %v2158
        %2160 = vmatmul.bf16.gmra.mxu0 %v1715
        %v2161 = vpop.f32.mrf.mxu0
        %v2162 = vadd.f32 %v2133, %v2161
        %v2163 = vpop.f32.mrf.mxu0
        %v2164 = vadd.f32 %v2135, %v2163
        %2165 = vmatmul.bf16.gmra.mxu0 %v1720
        %v2166 = vpop.f32.mrf.mxu0
        %v2167 = vadd.f32 %v2138, %v2166
        %v2168 = vpop.f32.mrf.mxu0
        %v2169 = vadd.f32 %v2140, %v2168
        %2170 = vmatmul.bf16.gmra.mxu0 %v1725
        %v2171 = vpop.f32.mrf.mxu0
        %v2172 = vadd.f32 %v2143, %v2171
        %v2173 = vpop.f32.mrf.mxu0
        %v2174 = vadd.f32 %v2145, %v2173
        %2175 = vdwg.mxu0
        %2176 = vmatpush.bf16.msra.mxu0 %v2007
        %2177 = vmatpush.bf16.msra.mxu0 %v2005
        %2178 = vmatpush.bf16.msra.mxu0 %v2003
        %2179 = vmatpush.bf16.msra.mxu0 %v2001
        %2180 = vmatpush.bf16.msra.mxu0 %v1999
        %2181 = vmatpush.bf16.msra.mxu0 %v1997
        %2182 = vmatpush.bf16.msra.mxu0 %v1995
        %2183 = vmatpush.bf16.msra.mxu0 %v1993
        %2184 = vmatmul.bf16.gmra.mxu0 %v1711
        %v2185 = vpop.f32.mrf.mxu0
        %v2186 = vadd.f32 %v2157, %v2185
        %v2187 = vpop.f32.mrf.mxu0
        %v2188 = vadd.f32 %v2159, %v2187
        %2189 = vmatmul.bf16.gmra.mxu0 %v1716
        %v2190 = vpop.f32.mrf.mxu0
        %v2191 = vadd.f32 %v2162, %v2190
        %v2192 = vpop.f32.mrf.mxu0
        %v2193 = vadd.f32 %v2164, %v2192
        %2194 = vmatmul.bf16.gmra.mxu0 %v1721
        %v2195 = vpop.f32.mrf.mxu0
        %v2196 = vadd.f32 %v2167, %v2195
        %v2197 = vpop.f32.mrf.mxu0
        %v2198 = vadd.f32 %v2169, %v2197
        %2199 = vmatmul.bf16.gmra.mxu0 %v1726
        %v2200 = vpop.f32.mrf.mxu0
        %v2201 = vadd.f32 %v2172, %v2200
        %v2202 = vpop.f32.mrf.mxu0
        %v2203 = vadd.f32 %v2174, %v2202
        %2204 = vdwg.mxu0
        %2205 = vmatpush.bf16.msra.mxu0 %v2023
        %2206 = vmatpush.bf16.msra.mxu0 %v2021
        %2207 = vmatpush.bf16.msra.mxu0 %v2019
        %2208 = vmatpush.bf16.msra.mxu0 %v2017
        %2209 = vmatpush.bf16.msra.mxu0 %v2015
        %2210 = vmatpush.bf16.msra.mxu0 %v2013
        %2211 = vmatpush.bf16.msra.mxu0 %v2011
        %2212 = vmatpush.bf16.msra.mxu0 %v2009
        %2213 = vmatmul.bf16.gmra.mxu0 %v1712
        %v2214 = vpop.f32.mrf.mxu0
        %v2215 = vadd.f32 %v2186, %v2214
        %v2216 = vpop.f32.mrf.mxu0
        %v2217 = vadd.f32 %v2188, %v2216
        %2218 = vmatmul.bf16.gmra.mxu0 %v1717
        %v2219 = vpop.f32.mrf.mxu0
        %v2220 = vadd.f32 %v2191, %v2219
        %v2221 = vpop.f32.mrf.mxu0
        %v2222 = vadd.f32 %v2193, %v2221
        %2223 = vmatmul.bf16.gmra.mxu0 %v1722
        %v2224 = vpop.f32.mrf.mxu0
        %v2225 = vadd.f32 %v2196, %v2224
        %v2226 = vpop.f32.mrf.mxu0
        %v2227 = vadd.f32 %v2198, %v2226
        %2228 = vmatmul.bf16.gmra.mxu0 %v1727
        %v2229 = vpop.f32.mrf.mxu0
        %v2230 = vadd.f32 %v2201, %v2229
        %v2231 = vpop.f32.mrf.mxu0
        %v2232 = vadd.f32 %v2203, %v2231
        %2233 = vdwg.mxu0
        %2234 = vmatpush.bf16.msra.mxu0 0
        %2235 = vmatpush.bf16.msra.mxu0 0
        %2236 = vmatpush.bf16.msra.mxu0 0
        %2237 = vmatpush.bf16.msra.mxu0 0
        %2238 = vmatpush.bf16.msra.mxu0 %v2031
        %2239 = vmatpush.bf16.msra.mxu0 %v2029
        %2240 = vmatpush.bf16.msra.mxu0 %v2027
        %2241 = vmatpush.bf16.msra.mxu0 %v2025
        %2242 = vmatmul.bf16.gmra.mxu0 %v2107
        %v2243 = vpop.f32.mrf.mxu0
        %v2244 = vadd.f32 %v2215, %v2243
        %v2245 = vpop.f32.mrf.mxu0
        %v2246 = vadd.f32 %v2217, %v2245
        %2247 = vmatmul.bf16.gmra.mxu0 %v2110
        %v2248 = vpop.f32.mrf.mxu0
        %v2249 = vadd.f32 %v2220, %v2248
        %v2250 = vpop.f32.mrf.mxu0
        %v2251 = vadd.f32 %v2222, %v2250
        %2252 = vmatmul.bf16.gmra.mxu0 %v2113
        %v2253 = vpop.f32.mrf.mxu0
        %v2254 = vadd.f32 %v2225, %v2253
        %v2255 = vpop.f32.mrf.mxu0
        %v2256 = vadd.f32 %v2227, %v2255
        %2257 = vmatmul.bf16.gmra.mxu0 %v2116
        %v2258 = vpop.f32.mrf.mxu0
        %v2259 = vadd.f32 %v2230, %v2258
        %v2260 = vpop.f32.mrf.mxu0
        %v2261 = vadd.f32 %v2232, %v2260
        %2262 = vdwg.mxu0
        %2263 = vmatpush.bf16.msra.mxu0 %v1976
        %2264 = vmatpush.bf16.msra.mxu0 %v1974
        %2265 = vmatpush.bf16.msra.mxu0 %v1972
        %2266 = vmatpush.bf16.msra.mxu0 %v1970
        %2267 = vmatpush.bf16.msra.mxu0 %v1968
        %2268 = vmatpush.bf16.msra.mxu0 %v1966
        %2269 = vmatpush.bf16.msra.mxu0 %v1964
        %2270 = vmatpush.bf16.msra.mxu0 %v1962
        %2271 = vmatmul.bf16.gmra.mxu0 %v1709
        %v2272 = vpop.f32.mrf.mxu0
        %v2273 = vadd.f32 0.0, %v2272
        %v2274 = vpop.f32.mrf.mxu0
        %v2275 = vadd.f32 0.0, %v2274
        %2276 = vmatmul.bf16.gmra.mxu0 %v1714
        %v2277 = vpop.f32.mrf.mxu0
        %v2278 = vadd.f32 0.0, %v2277
        %v2279 = vpop.f32.mrf.mxu0
        %v2280 = vadd.f32 0.0, %v2279
        %2281 = vmatmul.bf16.gmra.mxu0 %v1719
        %v2282 = vpop.f32.mrf.mxu0
        %v2283 = vadd.f32 0.0, %v2282
        %v2284 = vpop.f32.mrf.mxu0
        %v2285 = vadd.f32 0.0, %v2284
        %2286 = vmatmul.bf16.gmra.mxu0 %v1724
        %v2287 = vpop.f32.mrf.mxu0
        %v2288 = vadd.f32 0.0, %v2287
        %v2289 = vpop.f32.mrf.mxu0
        %v2290 = vadd.f32 0.0, %v2289
        %2291 = vdwg.mxu0
        %2292 = vmatpush.bf16.msra.mxu0 %v1992
        %2293 = vmatpush.bf16.msra.mxu0 %v1990
        %2294 = vmatpush.bf16.msra.mxu0 %v1988
        %2295 = vmatpush.bf16.msra.mxu0 %v1986
        %2296 = vmatpush.bf16.msra.mxu0 %v1984
        %2297 = vmatpush.bf16.msra.mxu0 %v1982
        %2298 = vmatpush.bf16.msra.mxu0 %v1980
        %2299 = vmatpush.bf16.msra.mxu0 %v1978
        %2300 = vmatmul.bf16.gmra.mxu0 %v1710
        %v2301 = vpop.f32.mrf.mxu0
        %v2302 = vadd.f32 %v2273, %v2301
        %v2303 = vpop.f32.mrf.mxu0
        %v2304 = vadd.f32 %v2275, %v2303
        %2305 = vmatmul.bf16.gmra.mxu0 %v1715
        %v2306 = vpop.f32.mrf.mxu0
        %v2307 = vadd.f32 %v2278, %v2306
        %v2308 = vpop.f32.mrf.mxu0
        %v2309 = vadd.f32 %v2280, %v2308
        %2310 = vmatmul.bf16.gmra.mxu0 %v1720
        %v2311 = vpop.f32.mrf.mxu0
        %v2312 = vadd.f32 %v2283, %v2311
        %v2313 = vpop.f32.mrf.mxu0
        %v2314 = vadd.f32 %v2285, %v2313
        %2315 = vmatmul.bf16.gmra.mxu0 %v1725
        %v2316 = vpop.f32.mrf.mxu0
        %v2317 = vadd.f32 %v2288, %v2316
        %v2318 = vpop.f32.mrf.mxu0
        %v2319 = vadd.f32 %v2290, %v2318
        %2320 = vdwg.mxu0
        %2321 = vmatpush.bf16.msra.mxu0 %v2008
        %2322 = vmatpush.bf16.msra.mxu0 %v2006
        %2323 = vmatpush.bf16.msra.mxu0 %v2004
        %2324 = vmatpush.bf16.msra.mxu0 %v2002
        %2325 = vmatpush.bf16.msra.mxu0 %v2000
        %2326 = vmatpush.bf16.msra.mxu0 %v1998
        %2327 = vmatpush.bf16.msra.mxu0 %v1996
        %2328 = vmatpush.bf16.msra.mxu0 %v1994
        %2329 = vmatmul.bf16.gmra.mxu0 %v1711
        %v2330 = vpop.f32.mrf.mxu0
        %v2331 = vadd.f32 %v2302, %v2330
        %v2332 = vpop.f32.mrf.mxu0
        %v2333 = vadd.f32 %v2304, %v2332
        %2334 = vmatmul.bf16.gmra.mxu0 %v1716
        %v2335 = vpop.f32.mrf.mxu0
        %v2336 = vadd.f32 %v2307, %v2335
        %v2337 = vpop.f32.mrf.mxu0
        %v2338 = vadd.f32 %v2309, %v2337
        %2339 = vmatmul.bf16.gmra.mxu0 %v1721
        %v2340 = vpop.f32.mrf.mxu0
        %v2341 = vadd.f32 %v2312, %v2340
        %v2342 = vpop.f32.mrf.mxu0
        %v2343 = vadd.f32 %v2314, %v2342
        %2344 = vmatmul.bf16.gmra.mxu0 %v1726
        %v2345 = vpop.f32.mrf.mxu0
        %v2346 = vadd.f32 %v2317, %v2345
        %v2347 = vpop.f32.mrf.mxu0
        %v2348 = vadd.f32 %v2319, %v2347
        %2349 = vdwg.mxu0
        %2350 = vmatpush.bf16.msra.mxu0 %v2024
        %2351 = vmatpush.bf16.msra.mxu0 %v2022
        %2352 = vmatpush.bf16.msra.mxu0 %v2020
        %2353 = vmatpush.bf16.msra.mxu0 %v2018
        %2354 = vmatpush.bf16.msra.mxu0 %v2016
        %2355 = vmatpush.bf16.msra.mxu0 %v2014
        %2356 = vmatpush.bf16.msra.mxu0 %v2012
        %2357 = vmatpush.bf16.msra.mxu0 %v2010
        %2358 = vmatmul.bf16.gmra.mxu0 %v1712
        %v2359 = vpop.f32.mrf.mxu0
        %v2360 = vadd.f32 %v2331, %v2359
        %v2361 = vpop.f32.mrf.mxu0
        %v2362 = vadd.f32 %v2333, %v2361
        %2363 = vmatmul.bf16.gmra.mxu0 %v1717
        %v2364 = vpop.f32.mrf.mxu0
        %v2365 = vadd.f32 %v2336, %v2364
        %v2366 = vpop.f32.mrf.mxu0
        %v2367 = vadd.f32 %v2338, %v2366
        %2368 = vmatmul.bf16.gmra.mxu0 %v1722
        %v2369 = vpop.f32.mrf.mxu0
        %v2370 = vadd.f32 %v2341, %v2369
        %v2371 = vpop.f32.mrf.mxu0
        %v2372 = vadd.f32 %v2343, %v2371
        %2373 = vmatmul.bf16.gmra.mxu0 %v1727
        %v2374 = vpop.f32.mrf.mxu0
        %v2375 = vadd.f32 %v2346, %v2374
        %v2376 = vpop.f32.mrf.mxu0
        %v2377 = vadd.f32 %v2348, %v2376
        %2378 = vdwg.mxu0
        %2379 = vmatpush.bf16.msra.mxu0 0
        %2380 = vmatpush.bf16.msra.mxu0 0
        %2381 = vmatpush.bf16.msra.mxu0 0
        %2382 = vmatpush.bf16.msra.mxu0 0
        %2383 = vmatpush.bf16.msra.mxu0 %v2032
        %2384 = vmatpush.bf16.msra.mxu0 %v2030
        %2385 = vmatpush.bf16.msra.mxu0 %v2028
        %2386 = vmatpush.bf16.msra.mxu0 %v2026
        %2387 = vmatmul.bf16.gmra.mxu0 %v2107
        %v2388 = vpop.f32.mrf.mxu0
        %v2389 = vadd.f32 %v2360, %v2388
        %v2390 = vpop.f32.mrf.mxu0
        %v2391 = vadd.f32 %v2362, %v2390
        %2392 = vmatmul.bf16.gmra.mxu0 %v2110
        %v2393 = vpop.f32.mrf.mxu0
        %v2394 = vadd.f32 %v2365, %v2393
        %v2395 = vpop.f32.mrf.mxu0
        %v2396 = vadd.f32 %v2367, %v2395
        %2397 = vmatmul.bf16.gmra.mxu0 %v2113
        %v2398 = vpop.f32.mrf.mxu0
        %v2399 = vadd.f32 %v2370, %v2398
        %v2400 = vpop.f32.mrf.mxu0
        %v2401 = vadd.f32 %v2372, %v2400
        %2402 = vmatmul.bf16.gmra.mxu0 %v2116
        %v2403 = vpop.f32.mrf.mxu0
        %v2404 = vadd.f32 %v2375, %v2403
        %v2405 = vpop.f32.mrf.mxu0
        %v2406 = vadd.f32 %v2377, %v2405
        %2407 = vdwg.mxu0
        %v2408 = vld [vmem:[%s4] sm:$0x1]
        %v2409 = vld [vmem:[%s5] sm:$0x1]
        %v2411 = vperm.slane %v2408, 0
        %v2413 = vmul.f32 %v2244, %v2411
        %v2414 = vmul.f32 %v2246, %v2411
        %v2415 = vmul.f32 %v2249, %v2411
        %v2416 = vmul.f32 %v2251, %v2411
        %v2417 = vmul.f32 %v2254, %v2411
        %v2418 = vmul.f32 %v2256, %v2411
        %v2419 = vmul.f32 %v2259, %v2411
        %v2420 = vmul.f32 %v2261, %v2411
        %v2422 = vperm.slane %v2409, 0
        %v2424 = vadd.f32 %v2413, %v2422
        %v2425 = vadd.f32 %v2414, %v2422
        %v2426 = vadd.f32 %v2415, %v2422
        %v2427 = vadd.f32 %v2416, %v2422
        %v2428 = vadd.f32 %v2417, %v2422
        %v2429 = vadd.f32 %v2418, %v2422
        %v2430 = vadd.f32 %v2419, %v2422
        %v2431 = vadd.f32 %v2420, %v2422
        %v2432 = vmax.f32 %v2424, 0.0
        %v2433 = vmax.f32 %v2425, 0.0
        %v2434 = vmax.f32 %v2426, 0.0
        %v2435 = vmax.f32 %v2427, 0.0
        %v2436 = vmax.f32 %v2428, 0.0
        %v2437 = vmax.f32 %v2429, 0.0
        %v2438 = vmax.f32 %v2430, 0.0
        %v2439 = vmax.f32 %v2431, 0.0
        %v2440 = vpack.c.bf16 %v2432, %v2432
        %v2441 = vpack.c.bf16 %v2433, %v2433
        %v2442 = vpack.c.bf16 %v2434, %v2434
        %v2443 = vpack.c.bf16 %v2435, %v2435
        %v2444 = vpack.c.bf16 %v2436, %v2436
        %v2445 = vpack.c.bf16 %v2437, %v2437
        %v2446 = vpack.c.bf16 %v2438, %v2438
        %v2447 = vpack.c.bf16 %v2439, %v2439
        %2448 = vst [vmem:[#allocation4] sm:$0xf] 0
        %2449 = vst [vmem:[#allocation4 + $0x4] sm:$0x1] 0
        %2450 = vst [vmem:[#allocation4 + $0x8] sm:$0xf] 0
        %2451 = vst [vmem:[#allocation4 + $0xc] sm:$0x1] 0
        %2452 = vst [vmem:[#allocation4 + $0x10] sm:$0xf] 0
        %2453 = vst [vmem:[#allocation4 + $0x14] sm:$0x1] 0
        %2454 = vst [vmem:[#allocation4 + $0x18] sm:$0xf] 0
        %2455 = vst [vmem:[#allocation4 + $0x1c] sm:$0x1] 0
        %2456 = vst [vmem:[#allocation4 + $0x20] sm:$0xf] 0
        %2457 = vst [vmem:[#allocation4 + $0x24] sm:$0x1] 0
        %2458 = vst [vmem:[#allocation4 + $0x28] sm:$0xf] 0
        %2459 = vst [vmem:[#allocation4 + $0x2c] sm:$0x1] 0
        %2460 = vst [vmem:[#allocation4 + $0x30] sm:$0xf] 0
        %2461 = vst [vmem:[#allocation4 + $0x34] sm:$0x1] 0
        %2462 = vst [vmem:[#allocation4 + $0x38] sm:$0xf] 0
        %2463 = vst [vmem:[#allocation4 + $0x3c] sm:$0x1] 0
        %2464 = vst [vmem:[#allocation4 + $0x40] sm:$0xf] 0
        %2465 = vst [vmem:[#allocation4 + $0x44] sm:$0x1] 0
        %2466 = vst [vmem:[#allocation4 + $0x48] sm:$0xf] 0
        %2467 = vst [vmem:[#allocation4 + $0x4c] sm:$0x1] 0
        %v2469 = vshrl.u32 %v2440, 16
        %v2471 = vrot.slane %v2469, 7
        %v2472 = vshll.u32 %v2440, 16
        %v2474 = vor.u32 %v2471, %v2472
        %v2475 = vrot.slane %v2471, 4
        %v2477 = vshrl.u32 %v2441, 16
        %v2479 = vrot.slane %v2477, 7
        %v2480 = vshll.u32 %v2441, 16
        %v2482 = vor.u32 %v2479, %v2480
        %v2483 = vrot.slane %v2479, 4
        %v2485 = vshrl.u32 %v2442, 16
        %v2487 = vrot.slane %v2485, 7
        %v2488 = vshll.u32 %v2442, 16
        %v2490 = vor.u32 %v2487, %v2488
        %v2491 = vrot.slane %v2487, 4
        %v2493 = vshrl.u32 %v2443, 16
        %v2495 = vrot.slane %v2493, 7
        %v2496 = vshll.u32 %v2443, 16
        %v2498 = vor.u32 %v2495, %v2496
        %v2499 = vrot.slane %v2495, 4
        %v2501 = vshrl.u32 %v2444, 16
        %v2503 = vrot.slane %v2501, 7
        %v2504 = vshll.u32 %v2444, 16
        %v2506 = vor.u32 %v2503, %v2504
        %v2507 = vrot.slane %v2503, 4
        %v2509 = vshrl.u32 %v2445, 16
        %v2511 = vrot.slane %v2509, 7
        %v2512 = vshll.u32 %v2445, 16
        %v2514 = vor.u32 %v2511, %v2512
        %v2515 = vrot.slane %v2511, 4
        %v2517 = vshrl.u32 %v2446, 16
        %v2519 = vrot.slane %v2517, 7
        %v2520 = vshll.u32 %v2446, 16
        %v2522 = vor.u32 %v2519, %v2520
        %v2523 = vrot.slane %v2519, 4
        %v2525 = vshrl.u32 %v2447, 16
        %v2527 = vrot.slane %v2525, 7
        %v2528 = vshll.u32 %v2447, 16
        %v2530 = vor.u32 %v2527, %v2528
        %v2531 = vrot.slane %v2527, 4
        %s2548 = scalar_lea.vmem [#allocation4], 8
        %vm2549 = vcmask 1043456
        %vm2550 = vsmask.f32 7938
        %vm2551 = vmand %vm2549, %vm2550
        %v2552 = vld [vmem:[%s2548] sm:$0xf]
        %v2553 = vsel %vm2551, %v2474, %v2552
        %2554 = vst [vmem:[%s2548] sm:$0xf] %v2553
        %vm2555 = vcmask 1040384
        %vm2556 = vmand %vm2555, %vm414
        %v2557 = vld [vmem:[%s2548 + $0x4] sm:$0x1]
        %v2558 = vsel %vm2556, %v2475, %v2557
        %2559 = vst [vmem:[%s2548 + $0x4] sm:$0x1] %v2558
        %v2560 = vld [vmem:[%s2548 + $0x8] sm:$0xf]
        %v2561 = vsel %vm2551, %v2482, %v2560
        %2562 = vst [vmem:[%s2548 + $0x8] sm:$0xf] %v2561
        %v2563 = vld [vmem:[%s2548 + $0xc] sm:$0x1]
        %v2564 = vsel %vm2556, %v2483, %v2563
        %2565 = vst [vmem:[%s2548 + $0xc] sm:$0x1] %v2564
        %v2566 = vld [vmem:[%s2548 + $0x10] sm:$0xf]
        %v2567 = vsel %vm2551, %v2490, %v2566
        %2568 = vst [vmem:[%s2548 + $0x10] sm:$0xf] %v2567
        %v2569 = vld [vmem:[%s2548 + $0x14] sm:$0x1]
        %v2570 = vsel %vm2556, %v2491, %v2569
        %2571 = vst [vmem:[%s2548 + $0x14] sm:$0x1] %v2570
        %v2572 = vld [vmem:[%s2548 + $0x18] sm:$0xf]
        %v2573 = vsel %vm2551, %v2498, %v2572
        %2574 = vst [vmem:[%s2548 + $0x18] sm:$0xf] %v2573
        %v2575 = vld [vmem:[%s2548 + $0x1c] sm:$0x1]
        %v2576 = vsel %vm2556, %v2499, %v2575
        %2577 = vst [vmem:[%s2548 + $0x1c] sm:$0x1] %v2576
        %v2578 = vld [vmem:[%s2548 + $0x20] sm:$0xf]
        %v2579 = vsel %vm2551, %v2506, %v2578
        %2580 = vst [vmem:[%s2548 + $0x20] sm:$0xf] %v2579
        %v2581 = vld [vmem:[%s2548 + $0x24] sm:$0x1]
        %v2582 = vsel %vm2556, %v2507, %v2581
        %2583 = vst [vmem:[%s2548 + $0x24] sm:$0x1] %v2582
        %v2584 = vld [vmem:[%s2548 + $0x28] sm:$0xf]
        %v2585 = vsel %vm2551, %v2514, %v2584
        %2586 = vst [vmem:[%s2548 + $0x28] sm:$0xf] %v2585
        %v2587 = vld [vmem:[%s2548 + $0x2c] sm:$0x1]
        %v2588 = vsel %vm2556, %v2515, %v2587
        %2589 = vst [vmem:[%s2548 + $0x2c] sm:$0x1] %v2588
        %v2590 = vld [vmem:[%s2548 + $0x30] sm:$0xf]
        %v2591 = vsel %vm2551, %v2522, %v2590
        %2592 = vst [vmem:[%s2548 + $0x30] sm:$0xf] %v2591
        %v2593 = vld [vmem:[%s2548 + $0x34] sm:$0x1]
        %v2594 = vsel %vm2556, %v2523, %v2593
        %2595 = vst [vmem:[%s2548 + $0x34] sm:$0x1] %v2594
        %v2596 = vld [vmem:[%s2548 + $0x38] sm:$0xf]
        %v2597 = vsel %vm2551, %v2530, %v2596
        %2598 = vst [vmem:[%s2548 + $0x38] sm:$0xf] %v2597
        %v2599 = vld [vmem:[%s2548 + $0x3c] sm:$0x1]
        %v2600 = vsel %vm2556, %v2531, %v2599
        %2601 = vst [vmem:[%s2548 + $0x3c] sm:$0x1] %v2600
        %v2602 = vld [vmem:[#allocation4] sm:$0xf]
        %v2603 = vld [vmem:[#allocation4 + $0x8] sm:$0xf]
        %v2604 = vld [vmem:[#allocation4 + $0x10] sm:$0xf]
        %v2605 = vld [vmem:[#allocation4 + $0x18] sm:$0xf]
        %v2606 = vld [vmem:[#allocation4 + $0x20] sm:$0xf]
        %v2607 = vld [vmem:[#allocation4 + $0x28] sm:$0xf]
        %v2608 = vld [vmem:[#allocation4 + $0x30] sm:$0xf]
        %v2609 = vld [vmem:[#allocation4 + $0x38] sm:$0xf]
        %2610 = vst [vmem:[#allocation5] sm:$0xf] %v2602
        %2611 = vst [vmem:[#allocation5 + $0x24] sm:$0xf] %v2603
        %2612 = vst [vmem:[#allocation5 + $0x48] sm:$0xf] %v2604
        %2613 = vst [vmem:[#allocation5 + $0x6c] sm:$0xf] %v2605
        %2614 = vst [vmem:[#allocation5 + $0x90] sm:$0xf] %v2606
        %2615 = vst [vmem:[#allocation5 + $0xb4] sm:$0xf] %v2607
        %2616 = vst [vmem:[#allocation5 + $0xd8] sm:$0xf] %v2608
        %2617 = vst [vmem:[#allocation5 + $0xfc] sm:$0xf] %v2609
        %v2618 = vld [vmem:[#allocation4] sm:$0xf]
        %v2619 = vld [vmem:[#allocation4 + $0x4] sm:$0x1]
        %v2620 = vld [vmem:[#allocation4 + $0x8] sm:$0xf]
        %v2621 = vld [vmem:[#allocation4 + $0xc] sm:$0x1]
        %v2622 = vld [vmem:[#allocation4 + $0x10] sm:$0xf]
        %v2623 = vld [vmem:[#allocation4 + $0x14] sm:$0x1]
        %v2624 = vld [vmem:[#allocation4 + $0x18] sm:$0xf]
        %v2625 = vld [vmem:[#allocation4 + $0x1c] sm:$0x1]
        %v2626 = vld [vmem:[#allocation4 + $0x20] sm:$0xf]
        %v2627 = vld [vmem:[#allocation4 + $0x24] sm:$0x1]
        %v2628 = vld [vmem:[#allocation4 + $0x28] sm:$0xf]
        %v2629 = vld [vmem:[#allocation4 + $0x2c] sm:$0x1]
        %v2630 = vld [vmem:[#allocation4 + $0x30] sm:$0xf]
        %v2631 = vld [vmem:[#allocation4 + $0x34] sm:$0x1]
        %v2632 = vld [vmem:[#allocation4 + $0x38] sm:$0xf]
        %v2633 = vld [vmem:[#allocation4 + $0x3c] sm:$0x1]
        %v2635 = vshrl.u32 %v2618, 16
        %v2637 = vrot.slane %v2635, 4
        %v2638 = vshll.u32 %v2618, 16
        %v2640 = vrot.slane %v2638, 5
        %v2641 = vor.u32 %v2637, %v2640
        %v2642 = vrot.slane %v2641, 4
        %v2644 = vshll.u32 %v2619, 16
        %v2646 = vrot.slane %v2644, 5
        %v2647 = vsel %vm986, %v2642, %v2646
        %v2649 = vshrl.u32 %v2620, 16
        %v2651 = vrot.slane %v2649, 4
        %v2652 = vshll.u32 %v2620, 16
        %v2654 = vrot.slane %v2652, 5
        %v2655 = vor.u32 %v2651, %v2654
        %v2656 = vrot.slane %v2655, 4
        %v2658 = vshll.u32 %v2621, 16
        %v2660 = vrot.slane %v2658, 5
        %v2661 = vsel %vm986, %v2656, %v2660
        %v2663 = vshrl.u32 %v2622, 16
        %v2665 = vrot.slane %v2663, 4
        %v2666 = vshll.u32 %v2622, 16
        %v2668 = vrot.slane %v2666, 5
        %v2669 = vor.u32 %v2665, %v2668
        %v2670 = vrot.slane %v2669, 4
        %v2672 = vshll.u32 %v2623, 16
        %v2674 = vrot.slane %v2672, 5
        %v2675 = vsel %vm986, %v2670, %v2674
        %v2677 = vshrl.u32 %v2624, 16
        %v2679 = vrot.slane %v2677, 4
        %v2680 = vshll.u32 %v2624, 16
        %v2682 = vrot.slane %v2680, 5
        %v2683 = vor.u32 %v2679, %v2682
        %v2684 = vrot.slane %v2683, 4
        %v2686 = vshll.u32 %v2625, 16
        %v2688 = vrot.slane %v2686, 5
        %v2689 = vsel %vm986, %v2684, %v2688
        %v2691 = vshrl.u32 %v2626, 16
        %v2693 = vrot.slane %v2691, 4
        %v2694 = vshll.u32 %v2626, 16
        %v2696 = vrot.slane %v2694, 5
        %v2697 = vor.u32 %v2693, %v2696
        %v2698 = vrot.slane %v2697, 4
        %v2700 = vshll.u32 %v2627, 16
        %v2702 = vrot.slane %v2700, 5
        %v2703 = vsel %vm986, %v2698, %v2702
        %v2705 = vshrl.u32 %v2628, 16
        %v2707 = vrot.slane %v2705, 4
        %v2708 = vshll.u32 %v2628, 16
        %v2710 = vrot.slane %v2708, 5
        %v2711 = vor.u32 %v2707, %v2710
        %v2712 = vrot.slane %v2711, 4
        %v2714 = vshll.u32 %v2629, 16
        %v2716 = vrot.slane %v2714, 5
        %v2717 = vsel %vm986, %v2712, %v2716
        %v2719 = vshrl.u32 %v2630, 16
        %v2721 = vrot.slane %v2719, 4
        %v2722 = vshll.u32 %v2630, 16
        %v2724 = vrot.slane %v2722, 5
        %v2725 = vor.u32 %v2721, %v2724
        %v2726 = vrot.slane %v2725, 4
        %v2728 = vshll.u32 %v2631, 16
        %v2730 = vrot.slane %v2728, 5
        %v2731 = vsel %vm986, %v2726, %v2730
        %v2733 = vshrl.u32 %v2632, 16
        %v2735 = vrot.slane %v2733, 4
        %v2736 = vshll.u32 %v2632, 16
        %v2738 = vrot.slane %v2736, 5
        %v2739 = vor.u32 %v2735, %v2738
        %v2740 = vrot.slane %v2739, 4
        %v2742 = vshll.u32 %v2633, 16
        %v2744 = vrot.slane %v2742, 5
        %v2745 = vsel %vm986, %v2740, %v2744
        %2754 = vst [vmem:[#allocation5 + $0x4] sm:$0xf] %v2647
        %2755 = vst [vmem:[#allocation5 + $0x28] sm:$0xf] %v2661
        %2756 = vst [vmem:[#allocation5 + $0x4c] sm:$0xf] %v2675
        %2757 = vst [vmem:[#allocation5 + $0x70] sm:$0xf] %v2689
        %2758 = vst [vmem:[#allocation5 + $0x94] sm:$0xf] %v2703
        %2759 = vst [vmem:[#allocation5 + $0xb8] sm:$0xf] %v2717
        %2760 = vst [vmem:[#allocation5 + $0xdc] sm:$0xf] %v2731
        %2761 = vst [vmem:[#allocation5 + $0x100] sm:$0xf] %v2745
        %v2762 = vld [vmem:[#allocation4] sm:$0xe]
        %v2763 = vld [vmem:[#allocation4 + $0x4] sm:$0x1]
        %v2764 = vld [vmem:[#allocation4 + $0x8] sm:$0xe]
        %v2765 = vld [vmem:[#allocation4 + $0xc] sm:$0x1]
        %v2766 = vld [vmem:[#allocation4 + $0x10] sm:$0xe]
        %v2767 = vld [vmem:[#allocation4 + $0x14] sm:$0x1]
        %v2768 = vld [vmem:[#allocation4 + $0x18] sm:$0xe]
        %v2769 = vld [vmem:[#allocation4 + $0x1c] sm:$0x1]
        %v2770 = vld [vmem:[#allocation4 + $0x20] sm:$0xe]
        %v2771 = vld [vmem:[#allocation4 + $0x24] sm:$0x1]
        %v2772 = vld [vmem:[#allocation4 + $0x28] sm:$0xe]
        %v2773 = vld [vmem:[#allocation4 + $0x2c] sm:$0x1]
        %v2774 = vld [vmem:[#allocation4 + $0x30] sm:$0xe]
        %v2775 = vld [vmem:[#allocation4 + $0x34] sm:$0x1]
        %v2776 = vld [vmem:[#allocation4 + $0x38] sm:$0xe]
        %v2777 = vld [vmem:[#allocation4 + $0x3c] sm:$0x1]
        %vm2794 = vcmask 1042432
        %vm2795 = vcmask 1046532
        %vm2796 = vmor %vm2794, %vm2795
        %v2797 = vrot.slane %v2762, 5
        %v2798 = vrot.slane %v2797, 4
        %v2799 = vrot.slane %v2763, 5
        %v2800 = vsel %vm2796, %v2798, %v2799
        %v2801 = vrot.slane %v2764, 5
        %v2802 = vrot.slane %v2801, 4
        %v2803 = vrot.slane %v2765, 5
        %v2804 = vsel %vm2796, %v2802, %v2803
        %v2805 = vrot.slane %v2766, 5
        %v2806 = vrot.slane %v2805, 4
        %v2807 = vrot.slane %v2767, 5
        %v2808 = vsel %vm2796, %v2806, %v2807
        %v2809 = vrot.slane %v2768, 5
        %v2810 = vrot.slane %v2809, 4
        %v2811 = vrot.slane %v2769, 5
        %v2812 = vsel %vm2796, %v2810, %v2811
        %v2813 = vrot.slane %v2770, 5
        %v2814 = vrot.slane %v2813, 4
        %v2815 = vrot.slane %v2771, 5
        %v2816 = vsel %vm2796, %v2814, %v2815
        %v2817 = vrot.slane %v2772, 5
        %v2818 = vrot.slane %v2817, 4
        %v2819 = vrot.slane %v2773, 5
        %v2820 = vsel %vm2796, %v2818, %v2819
        %v2821 = vrot.slane %v2774, 5
        %v2822 = vrot.slane %v2821, 4
        %v2823 = vrot.slane %v2775, 5
        %v2824 = vsel %vm2796, %v2822, %v2823
        %v2825 = vrot.slane %v2776, 5
        %v2826 = vrot.slane %v2825, 4
        %v2827 = vrot.slane %v2777, 5
        %v2828 = vsel %vm2796, %v2826, %v2827
        %2837 = vst [vmem:[#allocation5 + $0x8] sm:$0xf] %v2800
        %2838 = vst [vmem:[#allocation5 + $0x2c] sm:$0xf] %v2804
        %2839 = vst [vmem:[#allocation5 + $0x50] sm:$0xf] %v2808
        %2840 = vst [vmem:[#allocation5 + $0x74] sm:$0xf] %v2812
        %2841 = vst [vmem:[#allocation5 + $0x98] sm:$0xf] %v2816
        %2842 = vst [vmem:[#allocation5 + $0xbc] sm:$0xf] %v2820
        %2843 = vst [vmem:[#allocation5 + $0xe0] sm:$0xf] %v2824
        %2844 = vst [vmem:[#allocation5 + $0x104] sm:$0xf] %v2828
        %v2845 = vld [vmem:[%s2548] sm:$0xf]
        %v2846 = vld [vmem:[%s2548 + $0x8] sm:$0xf]
        %v2847 = vld [vmem:[%s2548 + $0x10] sm:$0xf]
        %v2848 = vld [vmem:[%s2548 + $0x18] sm:$0xf]
        %v2849 = vld [vmem:[%s2548 + $0x20] sm:$0xf]
        %v2850 = vld [vmem:[%s2548 + $0x28] sm:$0xf]
        %v2851 = vld [vmem:[%s2548 + $0x30] sm:$0xf]
        %v2852 = vld [vmem:[%s2548 + $0x38] sm:$0xf]
        %2853 = vst [vmem:[#allocation5 + $0xc] sm:$0xf] %v2845
        %2854 = vst [vmem:[#allocation5 + $0x30] sm:$0xf] %v2846
        %2855 = vst [vmem:[#allocation5 + $0x54] sm:$0xf] %v2847
        %2856 = vst [vmem:[#allocation5 + $0x78] sm:$0xf] %v2848
        %2857 = vst [vmem:[#allocation5 + $0x9c] sm:$0xf] %v2849
        %2858 = vst [vmem:[#allocation5 + $0xc0] sm:$0xf] %v2850
        %2859 = vst [vmem:[#allocation5 + $0xe4] sm:$0xf] %v2851
        %2860 = vst [vmem:[#allocation5 + $0x108] sm:$0xf] %v2852
        %v2861 = vld [vmem:[%s2548] sm:$0xf]
        %v2862 = vld [vmem:[%s2548 + $0x4] sm:$0x1]
        %v2863 = vld [vmem:[%s2548 + $0x8] sm:$0xf]
        %v2864 = vld [vmem:[%s2548 + $0xc] sm:$0x1]
        %v2865 = vld [vmem:[%s2548 + $0x10] sm:$0xf]
        %v2866 = vld [vmem:[%s2548 + $0x14] sm:$0x1]
        %v2867 = vld [vmem:[%s2548 + $0x18] sm:$0xf]
        %v2868 = vld [vmem:[%s2548 + $0x1c] sm:$0x1]
        %v2869 = vld [vmem:[%s2548 + $0x20] sm:$0xf]
        %v2870 = vld [vmem:[%s2548 + $0x24] sm:$0x1]
        %v2871 = vld [vmem:[%s2548 + $0x28] sm:$0xf]
        %v2872 = vld [vmem:[%s2548 + $0x2c] sm:$0x1]
        %v2873 = vld [vmem:[%s2548 + $0x30] sm:$0xf]
        %v2874 = vld [vmem:[%s2548 + $0x34] sm:$0x1]
        %v2875 = vld [vmem:[%s2548 + $0x38] sm:$0xf]
        %v2876 = vld [vmem:[%s2548 + $0x3c] sm:$0x1]
        %v2878 = vshrl.u32 %v2861, 16
        %v2880 = vrot.slane %v2878, 4
        %v2881 = vshll.u32 %v2861, 16
        %v2883 = vrot.slane %v2881, 5
        %v2884 = vor.u32 %v2880, %v2883
        %v2885 = vrot.slane %v2884, 4
        %v2887 = vshll.u32 %v2862, 16
        %v2889 = vrot.slane %v2887, 5
        %v2890 = vsel %vm986, %v2885, %v2889
        %v2892 = vshrl.u32 %v2863, 16
        %v2894 = vrot.slane %v2892, 4
        %v2895 = vshll.u32 %v2863, 16
        %v2897 = vrot.slane %v2895, 5
        %v2898 = vor.u32 %v2894, %v2897
        %v2899 = vrot.slane %v2898, 4
        %v2901 = vshll.u32 %v2864, 16
        %v2903 = vrot.slane %v2901, 5
        %v2904 = vsel %vm986, %v2899, %v2903
        %v2906 = vshrl.u32 %v2865, 16
        %v2908 = vrot.slane %v2906, 4
        %v2909 = vshll.u32 %v2865, 16
        %v2911 = vrot.slane %v2909, 5
        %v2912 = vor.u32 %v2908, %v2911
        %v2913 = vrot.slane %v2912, 4
        %v2915 = vshll.u32 %v2866, 16
        %v2917 = vrot.slane %v2915, 5
        %v2918 = vsel %vm986, %v2913, %v2917
        %v2920 = vshrl.u32 %v2867, 16
        %v2922 = vrot.slane %v2920, 4
        %v2923 = vshll.u32 %v2867, 16
        %v2925 = vrot.slane %v2923, 5
        %v2926 = vor.u32 %v2922, %v2925
        %v2927 = vrot.slane %v2926, 4
        %v2929 = vshll.u32 %v2868, 16
        %v2931 = vrot.slane %v2929, 5
        %v2932 = vsel %vm986, %v2927, %v2931
        %v2934 = vshrl.u32 %v2869, 16
        %v2936 = vrot.slane %v2934, 4
        %v2937 = vshll.u32 %v2869, 16
        %v2939 = vrot.slane %v2937, 5
        %v2940 = vor.u32 %v2936, %v2939
        %v2941 = vrot.slane %v2940, 4
        %v2943 = vshll.u32 %v2870, 16
        %v2945 = vrot.slane %v2943, 5
        %v2946 = vsel %vm986, %v2941, %v2945
        %v2948 = vshrl.u32 %v2871, 16
        %v2950 = vrot.slane %v2948, 4
        %v2951 = vshll.u32 %v2871, 16
        %v2953 = vrot.slane %v2951, 5
        %v2954 = vor.u32 %v2950, %v2953
        %v2955 = vrot.slane %v2954, 4
        %v2957 = vshll.u32 %v2872, 16
        %v2959 = vrot.slane %v2957, 5
        %v2960 = vsel %vm986, %v2955, %v2959
        %v2962 = vshrl.u32 %v2873, 16
        %v2964 = vrot.slane %v2962, 4
        %v2965 = vshll.u32 %v2873, 16
        %v2967 = vrot.slane %v2965, 5
        %v2968 = vor.u32 %v2964, %v2967
        %v2969 = vrot.slane %v2968, 4
        %v2971 = vshll.u32 %v2874, 16
        %v2973 = vrot.slane %v2971, 5
        %v2974 = vsel %vm986, %v2969, %v2973
        %v2976 = vshrl.u32 %v2875, 16
        %v2978 = vrot.slane %v2976, 4
        %v2979 = vshll.u32 %v2875, 16
        %v2981 = vrot.slane %v2979, 5
        %v2982 = vor.u32 %v2978, %v2981
        %v2983 = vrot.slane %v2982, 4
        %v2985 = vshll.u32 %v2876, 16
        %v2987 = vrot.slane %v2985, 5
        %v2988 = vsel %vm986, %v2983, %v2987
        %2997 = vst [vmem:[#allocation5 + $0x10] sm:$0xf] %v2890
        %2998 = vst [vmem:[#allocation5 + $0x34] sm:$0xf] %v2904
        %2999 = vst [vmem:[#allocation5 + $0x58] sm:$0xf] %v2918
        %3000 = vst [vmem:[#allocation5 + $0x7c] sm:$0xf] %v2932
        %3001 = vst [vmem:[#allocation5 + $0xa0] sm:$0xf] %v2946
        %3002 = vst [vmem:[#allocation5 + $0xc4] sm:$0xf] %v2960
        %3003 = vst [vmem:[#allocation5 + $0xe8] sm:$0xf] %v2974
        %3004 = vst [vmem:[#allocation5 + $0x10c] sm:$0xf] %v2988
        %v3005 = vld [vmem:[%s2548] sm:$0xe]
        %v3006 = vld [vmem:[%s2548 + $0x4] sm:$0x1]
        %v3007 = vld [vmem:[%s2548 + $0x8] sm:$0xe]
        %v3008 = vld [vmem:[%s2548 + $0xc] sm:$0x1]
        %v3009 = vld [vmem:[%s2548 + $0x10] sm:$0xe]
        %v3010 = vld [vmem:[%s2548 + $0x14] sm:$0x1]
        %v3011 = vld [vmem:[%s2548 + $0x18] sm:$0xe]
        %v3012 = vld [vmem:[%s2548 + $0x1c] sm:$0x1]
        %v3013 = vld [vmem:[%s2548 + $0x20] sm:$0xe]
        %v3014 = vld [vmem:[%s2548 + $0x24] sm:$0x1]
        %v3015 = vld [vmem:[%s2548 + $0x28] sm:$0xe]
        %v3016 = vld [vmem:[%s2548 + $0x2c] sm:$0x1]
        %v3017 = vld [vmem:[%s2548 + $0x30] sm:$0xe]
        %v3018 = vld [vmem:[%s2548 + $0x34] sm:$0x1]
        %v3019 = vld [vmem:[%s2548 + $0x38] sm:$0xe]
        %v3020 = vld [vmem:[%s2548 + $0x3c] sm:$0x1]
        %v3037 = vrot.slane %v3005, 5
        %v3038 = vrot.slane %v3037, 4
        %v3039 = vrot.slane %v3006, 5
        %v3040 = vsel %vm2796, %v3038, %v3039
        %v3041 = vrot.slane %v3007, 5
        %v3042 = vrot.slane %v3041, 4
        %v3043 = vrot.slane %v3008, 5
        %v3044 = vsel %vm2796, %v3042, %v3043
        %v3045 = vrot.slane %v3009, 5
        %v3046 = vrot.slane %v3045, 4
        %v3047 = vrot.slane %v3010, 5
        %v3048 = vsel %vm2796, %v3046, %v3047
        %v3049 = vrot.slane %v3011, 5
        %v3050 = vrot.slane %v3049, 4
        %v3051 = vrot.slane %v3012, 5
        %v3052 = vsel %vm2796, %v3050, %v3051
        %v3053 = vrot.slane %v3013, 5
        %v3054 = vrot.slane %v3053, 4
        %v3055 = vrot.slane %v3014, 5
        %v3056 = vsel %vm2796, %v3054, %v3055
        %v3057 = vrot.slane %v3015, 5
        %v3058 = vrot.slane %v3057, 4
        %v3059 = vrot.slane %v3016, 5
        %v3060 = vsel %vm2796, %v3058, %v3059
        %v3061 = vrot.slane %v3017, 5
        %v3062 = vrot.slane %v3061, 4
        %v3063 = vrot.slane %v3018, 5
        %v3064 = vsel %vm2796, %v3062, %v3063
        %v3065 = vrot.slane %v3019, 5
        %v3066 = vrot.slane %v3065, 4
        %v3067 = vrot.slane %v3020, 5
        %v3068 = vsel %vm2796, %v3066, %v3067
        %3077 = vst [vmem:[#allocation5 + $0x14] sm:$0xf] %v3040
        %3078 = vst [vmem:[#allocation5 + $0x38] sm:$0xf] %v3044
        %3079 = vst [vmem:[#allocation5 + $0x5c] sm:$0xf] %v3048
        %3080 = vst [vmem:[#allocation5 + $0x80] sm:$0xf] %v3052
        %3081 = vst [vmem:[#allocation5 + $0xa4] sm:$0xf] %v3056
        %3082 = vst [vmem:[#allocation5 + $0xc8] sm:$0xf] %v3060
        %3083 = vst [vmem:[#allocation5 + $0xec] sm:$0xf] %v3064
        %3084 = vst [vmem:[#allocation5 + $0x110] sm:$0xf] %v3068
        %s3085 = scalar_lea.vmem [#allocation4], 16
        %v3086 = vld [vmem:[%s3085] sm:$0xf]
        %v3087 = vld [vmem:[%s3085 + $0x8] sm:$0xf]
        %v3088 = vld [vmem:[%s3085 + $0x10] sm:$0xf]
        %v3089 = vld [vmem:[%s3085 + $0x18] sm:$0xf]
        %v3090 = vld [vmem:[%s3085 + $0x20] sm:$0xf]
        %v3091 = vld [vmem:[%s3085 + $0x28] sm:$0xf]
        %v3092 = vld [vmem:[%s3085 + $0x30] sm:$0xf]
        %v3093 = vld [vmem:[%s3085 + $0x38] sm:$0xf]
        %3094 = vst [vmem:[#allocation5 + $0x18] sm:$0xf] %v3086
        %3095 = vst [vmem:[#allocation5 + $0x3c] sm:$0xf] %v3087
        %3096 = vst [vmem:[#allocation5 + $0x60] sm:$0xf] %v3088
        %3097 = vst [vmem:[#allocation5 + $0x84] sm:$0xf] %v3089
        %3098 = vst [vmem:[#allocation5 + $0xa8] sm:$0xf] %v3090
        %3099 = vst [vmem:[#allocation5 + $0xcc] sm:$0xf] %v3091
        %3100 = vst [vmem:[#allocation5 + $0xf0] sm:$0xf] %v3092
        %3101 = vst [vmem:[#allocation5 + $0x114] sm:$0xf] %v3093
        %v3102 = vld [vmem:[%s3085] sm:$0xf]
        %v3103 = vld [vmem:[%s3085 + $0x4] sm:$0x1]
        %v3104 = vld [vmem:[%s3085 + $0x8] sm:$0xf]
        %v3105 = vld [vmem:[%s3085 + $0xc] sm:$0x1]
        %v3106 = vld [vmem:[%s3085 + $0x10] sm:$0xf]
        %v3107 = vld [vmem:[%s3085 + $0x14] sm:$0x1]
        %v3108 = vld [vmem:[%s3085 + $0x18] sm:$0xf]
        %v3109 = vld [vmem:[%s3085 + $0x1c] sm:$0x1]
        %v3110 = vld [vmem:[%s3085 + $0x20] sm:$0xf]
        %v3111 = vld [vmem:[%s3085 + $0x24] sm:$0x1]
        %v3112 = vld [vmem:[%s3085 + $0x28] sm:$0xf]
        %v3113 = vld [vmem:[%s3085 + $0x2c] sm:$0x1]
        %v3114 = vld [vmem:[%s3085 + $0x30] sm:$0xf]
        %v3115 = vld [vmem:[%s3085 + $0x34] sm:$0x1]
        %v3116 = vld [vmem:[%s3085 + $0x38] sm:$0xf]
        %v3117 = vld [vmem:[%s3085 + $0x3c] sm:$0x1]
        %v3119 = vshrl.u32 %v3102, 16
        %v3121 = vrot.slane %v3119, 4
        %v3122 = vshll.u32 %v3102, 16
        %v3124 = vrot.slane %v3122, 5
        %v3125 = vor.u32 %v3121, %v3124
        %v3126 = vrot.slane %v3125, 4
        %v3128 = vshll.u32 %v3103, 16
        %v3130 = vrot.slane %v3128, 5
        %v3131 = vsel %vm986, %v3126, %v3130
        %v3133 = vshrl.u32 %v3104, 16
        %v3135 = vrot.slane %v3133, 4
        %v3136 = vshll.u32 %v3104, 16
        %v3138 = vrot.slane %v3136, 5
        %v3139 = vor.u32 %v3135, %v3138
        %v3140 = vrot.slane %v3139, 4
        %v3142 = vshll.u32 %v3105, 16
        %v3144 = vrot.slane %v3142, 5
        %v3145 = vsel %vm986, %v3140, %v3144
        %v3147 = vshrl.u32 %v3106, 16
        %v3149 = vrot.slane %v3147, 4
        %v3150 = vshll.u32 %v3106, 16
        %v3152 = vrot.slane %v3150, 5
        %v3153 = vor.u32 %v3149, %v3152
        %v3154 = vrot.slane %v3153, 4
        %v3156 = vshll.u32 %v3107, 16
        %v3158 = vrot.slane %v3156, 5
        %v3159 = vsel %vm986, %v3154, %v3158
        %v3161 = vshrl.u32 %v3108, 16
        %v3163 = vrot.slane %v3161, 4
        %v3164 = vshll.u32 %v3108, 16
        %v3166 = vrot.slane %v3164, 5
        %v3167 = vor.u32 %v3163, %v3166
        %v3168 = vrot.slane %v3167, 4
        %v3170 = vshll.u32 %v3109, 16
        %v3172 = vrot.slane %v3170, 5
        %v3173 = vsel %vm986, %v3168, %v3172
        %v3175 = vshrl.u32 %v3110, 16
        %v3177 = vrot.slane %v3175, 4
        %v3178 = vshll.u32 %v3110, 16
        %v3180 = vrot.slane %v3178, 5
        %v3181 = vor.u32 %v3177, %v3180
        %v3182 = vrot.slane %v3181, 4
        %v3184 = vshll.u32 %v3111, 16
        %v3186 = vrot.slane %v3184, 5
        %v3187 = vsel %vm986, %v3182, %v3186
        %v3189 = vshrl.u32 %v3112, 16
        %v3191 = vrot.slane %v3189, 4
        %v3192 = vshll.u32 %v3112, 16
        %v3194 = vrot.slane %v3192, 5
        %v3195 = vor.u32 %v3191, %v3194
        %v3196 = vrot.slane %v3195, 4
        %v3198 = vshll.u32 %v3113, 16
        %v3200 = vrot.slane %v3198, 5
        %v3201 = vsel %vm986, %v3196, %v3200
        %v3203 = vshrl.u32 %v3114, 16
        %v3205 = vrot.slane %v3203, 4
        %v3206 = vshll.u32 %v3114, 16
        %v3208 = vrot.slane %v3206, 5
        %v3209 = vor.u32 %v3205, %v3208
        %v3210 = vrot.slane %v3209, 4
        %v3212 = vshll.u32 %v3115, 16
        %v3214 = vrot.slane %v3212, 5
        %v3215 = vsel %vm986, %v3210, %v3214
        %v3217 = vshrl.u32 %v3116, 16
        %v3219 = vrot.slane %v3217, 4
        %v3220 = vshll.u32 %v3116, 16
        %v3222 = vrot.slane %v3220, 5
        %v3223 = vor.u32 %v3219, %v3222
        %v3224 = vrot.slane %v3223, 4
        %v3226 = vshll.u32 %v3117, 16
        %v3228 = vrot.slane %v3226, 5
        %v3229 = vsel %vm986, %v3224, %v3228
        %3238 = vst [vmem:[#allocation5 + $0x1c] sm:$0xf] %v3131
        %3239 = vst [vmem:[#allocation5 + $0x40] sm:$0xf] %v3145
        %3240 = vst [vmem:[#allocation5 + $0x64] sm:$0xf] %v3159
        %3241 = vst [vmem:[#allocation5 + $0x88] sm:$0xf] %v3173
        %3242 = vst [vmem:[#allocation5 + $0xac] sm:$0xf] %v3187
        %3243 = vst [vmem:[#allocation5 + $0xd0] sm:$0xf] %v3201
        %3244 = vst [vmem:[#allocation5 + $0xf4] sm:$0xf] %v3215
        %3245 = vst [vmem:[#allocation5 + $0x118] sm:$0xf] %v3229
        %v3246 = vld [vmem:[%s3085] sm:$0xe]
        %v3247 = vld [vmem:[%s3085 + $0x4] sm:$0x1]
        %v3248 = vld [vmem:[%s3085 + $0x8] sm:$0xe]
        %v3249 = vld [vmem:[%s3085 + $0xc] sm:$0x1]
        %v3250 = vld [vmem:[%s3085 + $0x10] sm:$0xe]
        %v3251 = vld [vmem:[%s3085 + $0x14] sm:$0x1]
        %v3252 = vld [vmem:[%s3085 + $0x18] sm:$0xe]
        %v3253 = vld [vmem:[%s3085 + $0x1c] sm:$0x1]
        %v3254 = vld [vmem:[%s3085 + $0x20] sm:$0xe]
        %v3255 = vld [vmem:[%s3085 + $0x24] sm:$0x1]
        %v3256 = vld [vmem:[%s3085 + $0x28] sm:$0xe]
        %v3257 = vld [vmem:[%s3085 + $0x2c] sm:$0x1]
        %v3258 = vld [vmem:[%s3085 + $0x30] sm:$0xe]
        %v3259 = vld [vmem:[%s3085 + $0x34] sm:$0x1]
        %v3260 = vld [vmem:[%s3085 + $0x38] sm:$0xe]
        %v3261 = vld [vmem:[%s3085 + $0x3c] sm:$0x1]
        %v3278 = vrot.slane %v3246, 5
        %v3279 = vrot.slane %v3278, 4
        %v3280 = vrot.slane %v3247, 5
        %v3281 = vsel %vm2796, %v3279, %v3280
        %v3282 = vrot.slane %v3248, 5
        %v3283 = vrot.slane %v3282, 4
        %v3284 = vrot.slane %v3249, 5
        %v3285 = vsel %vm2796, %v3283, %v3284
        %v3286 = vrot.slane %v3250, 5
        %v3287 = vrot.slane %v3286, 4
        %v3288 = vrot.slane %v3251, 5
        %v3289 = vsel %vm2796, %v3287, %v3288
        %v3290 = vrot.slane %v3252, 5
        %v3291 = vrot.slane %v3290, 4
        %v3292 = vrot.slane %v3253, 5
        %v3293 = vsel %vm2796, %v3291, %v3292
        %v3294 = vrot.slane %v3254, 5
        %v3295 = vrot.slane %v3294, 4
        %v3296 = vrot.slane %v3255, 5
        %v3297 = vsel %vm2796, %v3295, %v3296
        %v3298 = vrot.slane %v3256, 5
        %v3299 = vrot.slane %v3298, 4
        %v3300 = vrot.slane %v3257, 5
        %v3301 = vsel %vm2796, %v3299, %v3300
        %v3302 = vrot.slane %v3258, 5
        %v3303 = vrot.slane %v3302, 4
        %v3304 = vrot.slane %v3259, 5
        %v3305 = vsel %vm2796, %v3303, %v3304
        %v3306 = vrot.slane %v3260, 5
        %v3307 = vrot.slane %v3306, 4
        %v3308 = vrot.slane %v3261, 5
        %v3309 = vsel %vm2796, %v3307, %v3308
        %3318 = vst [vmem:[#allocation5 + $0x20] sm:$0xf] %v3281
        %3319 = vst [vmem:[#allocation5 + $0x44] sm:$0xf] %v3285
        %3320 = vst [vmem:[#allocation5 + $0x68] sm:$0xf] %v3289
        %3321 = vst [vmem:[#allocation5 + $0x8c] sm:$0xf] %v3293
        %3322 = vst [vmem:[#allocation5 + $0xb0] sm:$0xf] %v3297
        %3323 = vst [vmem:[#allocation5 + $0xd4] sm:$0xf] %v3301
        %3324 = vst [vmem:[#allocation5 + $0xf8] sm:$0xf] %v3305
        %3325 = vst [vmem:[#allocation5 + $0x11c] sm:$0xf] %v3309
        %v3326 = vld [vmem:[#allocation5] sm:$0xff]
        %v3327 = vld [vmem:[#allocation5 + $0x8] sm:$0xff]
        %v3328 = vld [vmem:[#allocation5 + $0x10] sm:$0xff]
        %v3329 = vld [vmem:[#allocation5 + $0x18] sm:$0xff]
        %v3330 = vld [vmem:[#allocation5 + $0x20] sm:$0xf]
        %v3331 = vld [vmem:[#allocation5 + $0x24] sm:$0xff]
        %v3332 = vld [vmem:[#allocation5 + $0x2c] sm:$0xff]
        %v3333 = vld [vmem:[#allocation5 + $0x34] sm:$0xff]
        %v3334 = vld [vmem:[#allocation5 + $0x3c] sm:$0xff]
        %v3335 = vld [vmem:[#allocation5 + $0x44] sm:$0xf]
        %v3336 = vld [vmem:[#allocation5 + $0x48] sm:$0xff]
        %v3337 = vld [vmem:[#allocation5 + $0x50] sm:$0xff]
        %v3338 = vld [vmem:[#allocation5 + $0x58] sm:$0xff]
        %v3339 = vld [vmem:[#allocation5 + $0x60] sm:$0xff]
        %v3340 = vld [vmem:[#allocation5 + $0x68] sm:$0xf]
        %v3341 = vld [vmem:[#allocation5 + $0x6c] sm:$0xff]
        %v3342 = vld [vmem:[#allocation5 + $0x74] sm:$0xff]
        %v3343 = vld [vmem:[#allocation5 + $0x7c] sm:$0xff]
        %v3344 = vld [vmem:[#allocation5 + $0x84] sm:$0xff]
        %v3345 = vld [vmem:[#allocation5 + $0x8c] sm:$0xf]
        %v3346 = vld [vmem:[#allocation5 + $0x90] sm:$0xff]
        %v3347 = vld [vmem:[#allocation5 + $0x98] sm:$0xff]
        %v3348 = vld [vmem:[#allocation5 + $0xa0] sm:$0xff]
        %v3349 = vld [vmem:[#allocation5 + $0xa8] sm:$0xff]
        %v3350 = vld [vmem:[#allocation5 + $0xb0] sm:$0xf]
        %v3351 = vld [vmem:[#allocation5 + $0xb4] sm:$0xff]
        %v3352 = vld [vmem:[#allocation5 + $0xbc] sm:$0xff]
        %v3353 = vld [vmem:[#allocation5 + $0xc4] sm:$0xff]
        %v3354 = vld [vmem:[#allocation5 + $0xcc] sm:$0xff]
        %v3355 = vld [vmem:[#allocation5 + $0xd4] sm:$0xf]
        %v3356 = vld [vmem:[#allocation5 + $0xd8] sm:$0xff]
        %v3357 = vld [vmem:[#allocation5 + $0xe0] sm:$0xff]
        %v3358 = vld [vmem:[#allocation5 + $0xe8] sm:$0xff]
        %v3359 = vld [vmem:[#allocation5 + $0xf0] sm:$0xff]
        %v3360 = vld [vmem:[#allocation5 + $0xf8] sm:$0xf]
        %v3361 = vld [vmem:[#allocation5 + $0xfc] sm:$0xff]
        %v3362 = vld [vmem:[#allocation5 + $0x104] sm:$0xff]
        %v3363 = vld [vmem:[#allocation5 + $0x10c] sm:$0xff]
        %v3364 = vld [vmem:[#allocation5 + $0x114] sm:$0xff]
        %v3365 = vld [vmem:[#allocation5 + $0x11c] sm:$0xf]
        %v3366 = vld [vmem:[%s6] sm:$0xf]
        %v3367 = vld [vmem:[%s6 + $0x4] sm:$0xf]
        %v3368 = vld [vmem:[%s6 + $0x8] sm:$0xf]
        %v3369 = vld [vmem:[%s6 + $0xc] sm:$0xf]
        %v3370 = vld [vmem:[%s6 + $0x10] sm:$0xf]
        %v3371 = vld [vmem:[%s6 + $0x14] sm:$0xf]
        %v3372 = vld [vmem:[%s6 + $0x18] sm:$0xf]
        %v3373 = vld [vmem:[%s6 + $0x1c] sm:$0xf]
        %v3374 = vld [vmem:[%s6 + $0x20] sm:$0xf]
        %v3375 = vld [vmem:[%s6 + $0x24] sm:$0xf]
        %v3376 = vld [vmem:[%s6 + $0x28] sm:$0xf]
        %v3377 = vld [vmem:[%s6 + $0x2c] sm:$0xf]
        %v3378 = vld [vmem:[%s6 + $0x30] sm:$0xf]
        %v3379 = vld [vmem:[%s6 + $0x34] sm:$0xf]
        %v3380 = vld [vmem:[%s6 + $0x38] sm:$0xf]
        %v3381 = vld [vmem:[%s6 + $0x3c] sm:$0xf]
        %v3382 = vld [vmem:[%s6 + $0x40] sm:$0xf]
        %v3383 = vld [vmem:[%s6 + $0x44] sm:$0xf]
        %v3384 = vld [vmem:[%s6 + $0x48] sm:$0xf]
        %v3385 = vld [vmem:[%s6 + $0x4c] sm:$0xf]
        %v3386 = vld [vmem:[%s6 + $0x50] sm:$0xf]
        %v3387 = vld [vmem:[%s6 + $0x54] sm:$0xf]
        %v3388 = vld [vmem:[%s6 + $0x58] sm:$0xf]
        %v3389 = vld [vmem:[%s6 + $0x5c] sm:$0xf]
        %v3390 = vld [vmem:[%s6 + $0x60] sm:$0xf]
        %v3391 = vld [vmem:[%s6 + $0x64] sm:$0xf]
        %v3392 = vld [vmem:[%s6 + $0x68] sm:$0xf]
        %v3393 = vld [vmem:[%s6 + $0x6c] sm:$0xf]
        %v3394 = vld [vmem:[%s6 + $0x70] sm:$0xf]
        %v3395 = vld [vmem:[%s6 + $0x74] sm:$0xf]
        %v3396 = vld [vmem:[%s6 + $0x78] sm:$0xf]
        %v3397 = vld [vmem:[%s6 + $0x7c] sm:$0xf]
        %v3398 = vld [vmem:[%s6 + $0x80] sm:$0xf]
        %v3399 = vld [vmem:[%s6 + $0x84] sm:$0xf]
        %v3400 = vld [vmem:[%s6 + $0x88] sm:$0xf]
        %v3401 = vld [vmem:[%s6 + $0x8c] sm:$0xf]
        %v3402 = vld [vmem:[%s6 + $0x90] sm:$0xf]
        %v3403 = vld [vmem:[%s6 + $0x94] sm:$0xf]
        %v3404 = vld [vmem:[%s6 + $0x98] sm:$0xf]
        %v3405 = vld [vmem:[%s6 + $0x9c] sm:$0xf]
        %v3406 = vld [vmem:[%s6 + $0xa0] sm:$0xf]
        %v3407 = vld [vmem:[%s6 + $0xa4] sm:$0xf]
        %v3408 = vld [vmem:[%s6 + $0xa8] sm:$0xf]
        %v3409 = vld [vmem:[%s6 + $0xac] sm:$0xf]
        %v3410 = vld [vmem:[%s6 + $0xb0] sm:$0xf]
        %v3411 = vld [vmem:[%s6 + $0xb4] sm:$0xf]
        %v3412 = vld [vmem:[%s6 + $0xb8] sm:$0xf]
        %v3413 = vld [vmem:[%s6 + $0xbc] sm:$0xf]
        %v3414 = vld [vmem:[%s6 + $0xc0] sm:$0xf]
        %v3415 = vld [vmem:[%s6 + $0xc4] sm:$0xf]
        %v3416 = vld [vmem:[%s6 + $0xc8] sm:$0xf]
        %v3417 = vld [vmem:[%s6 + $0xcc] sm:$0xf]
        %v3418 = vld [vmem:[%s6 + $0xd0] sm:$0xf]
        %v3419 = vld [vmem:[%s6 + $0xd4] sm:$0xf]
        %v3420 = vld [vmem:[%s6 + $0xd8] sm:$0xf]
        %v3421 = vld [vmem:[%s6 + $0xdc] sm:$0xf]
        %v3422 = vld [vmem:[%s6 + $0xe0] sm:$0xf]
        %v3423 = vld [vmem:[%s6 + $0xe4] sm:$0xf]
        %v3424 = vld [vmem:[%s6 + $0xe8] sm:$0xf]
        %v3425 = vld [vmem:[%s6 + $0xec] sm:$0xf]
        %v3426 = vld [vmem:[%s6 + $0xf0] sm:$0xf]
        %v3427 = vld [vmem:[%s6 + $0xf4] sm:$0xf]
        %v3428 = vld [vmem:[%s6 + $0xf8] sm:$0xf]
        %v3429 = vld [vmem:[%s6 + $0xfc] sm:$0xf]
        %v3430 = vld [vmem:[%s6 + $0x100] sm:$0xf]
        %v3431 = vld [vmem:[%s6 + $0x104] sm:$0xf]
        %v3432 = vld [vmem:[%s6 + $0x108] sm:$0xf]
        %v3433 = vld [vmem:[%s6 + $0x10c] sm:$0xf]
        %v3434 = vld [vmem:[%s6 + $0x110] sm:$0xf]
        %v3435 = vld [vmem:[%s6 + $0x114] sm:$0xf]
        %v3436 = vld [vmem:[%s6 + $0x118] sm:$0xf]
        %v3437 = vld [vmem:[%s6 + $0x11c] sm:$0xf]
        %v3438 = vld [vmem:[%s6 + $0x120] sm:$0xf]
        %v3439 = vld [vmem:[%s6 + $0x124] sm:$0xf]
        %v3440 = vld [vmem:[%s6 + $0x128] sm:$0xf]
        %v3441 = vld [vmem:[%s6 + $0x12c] sm:$0xf]
        %v3442 = vld [vmem:[%s6 + $0x130] sm:$0xf]
        %v3443 = vld [vmem:[%s6 + $0x134] sm:$0xf]
        %v3444 = vld [vmem:[%s6 + $0x138] sm:$0xf]
        %v3445 = vld [vmem:[%s6 + $0x13c] sm:$0xf]
        %v3446 = vld [vmem:[%s6 + $0x140] sm:$0xf]
        %v3447 = vld [vmem:[%s6 + $0x144] sm:$0xf]
        %v3448 = vld [vmem:[%s6 + $0x148] sm:$0xf]
        %v3449 = vld [vmem:[%s6 + $0x14c] sm:$0xf]
        %v3450 = vld [vmem:[%s6 + $0x150] sm:$0xf]
        %v3451 = vld [vmem:[%s6 + $0x154] sm:$0xf]
        %v3452 = vld [vmem:[%s6 + $0x158] sm:$0xf]
        %v3453 = vld [vmem:[%s6 + $0x15c] sm:$0xf]
        %v3454 = vld [vmem:[%s6 + $0x160] sm:$0xf]
        %v3455 = vld [vmem:[%s6 + $0x164] sm:$0xf]
        %v3456 = vld [vmem:[%s6 + $0x168] sm:$0xf]
        %v3457 = vld [vmem:[%s6 + $0x16c] sm:$0xf]
        %v3458 = vld [vmem:[%s6 + $0x170] sm:$0xf]
        %v3459 = vld [vmem:[%s6 + $0x174] sm:$0xf]
        %v3460 = vld [vmem:[%s6 + $0x178] sm:$0xf]
        %v3461 = vld [vmem:[%s6 + $0x17c] sm:$0xf]
        %v3462 = vld [vmem:[%s6 + $0x180] sm:$0xf]
        %v3463 = vld [vmem:[%s6 + $0x184] sm:$0xf]
        %v3464 = vld [vmem:[%s6 + $0x188] sm:$0xf]
        %v3465 = vld [vmem:[%s6 + $0x18c] sm:$0xf]
        %v3466 = vld [vmem:[%s6 + $0x190] sm:$0xf]
        %v3467 = vld [vmem:[%s6 + $0x194] sm:$0xf]
        %v3468 = vld [vmem:[%s6 + $0x198] sm:$0xf]
        %v3469 = vld [vmem:[%s6 + $0x19c] sm:$0xf]
        %v3470 = vld [vmem:[%s6 + $0x1a0] sm:$0xf]
        %v3471 = vld [vmem:[%s6 + $0x1a4] sm:$0xf]
        %v3472 = vld [vmem:[%s6 + $0x1a8] sm:$0xf]
        %v3473 = vld [vmem:[%s6 + $0x1ac] sm:$0xf]
        %v3474 = vld [vmem:[%s6 + $0x1b0] sm:$0xf]
        %v3475 = vld [vmem:[%s6 + $0x1b4] sm:$0xf]
        %v3476 = vld [vmem:[%s6 + $0x1b8] sm:$0xf]
        %v3477 = vld [vmem:[%s6 + $0x1bc] sm:$0xf]
        %v3478 = vld [vmem:[%s6 + $0x1c0] sm:$0xf]
        %v3479 = vld [vmem:[%s6 + $0x1c4] sm:$0xf]
        %v3480 = vld [vmem:[%s6 + $0x1c8] sm:$0xf]
        %v3481 = vld [vmem:[%s6 + $0x1cc] sm:$0xf]
        %v3482 = vld [vmem:[%s6 + $0x1d0] sm:$0xf]
        %v3483 = vld [vmem:[%s6 + $0x1d4] sm:$0xf]
        %v3484 = vld [vmem:[%s6 + $0x1d8] sm:$0xf]
        %v3485 = vld [vmem:[%s6 + $0x1dc] sm:$0xf]
        %v3486 = vld [vmem:[%s6 + $0x1e0] sm:$0xf]
        %v3487 = vld [vmem:[%s6 + $0x1e4] sm:$0xf]
        %v3488 = vld [vmem:[%s6 + $0x1e8] sm:$0xf]
        %v3489 = vld [vmem:[%s6 + $0x1ec] sm:$0xf]
        %v3490 = vld [vmem:[%s6 + $0x1f0] sm:$0xf]
        %v3491 = vld [vmem:[%s6 + $0x1f4] sm:$0xf]
        %v3492 = vld [vmem:[%s6 + $0x1f8] sm:$0xf]
        %v3493 = vld [vmem:[%s6 + $0x1fc] sm:$0xf]
        %v3494 = vld [vmem:[%s6 + $0x200] sm:$0xf]
        %v3495 = vld [vmem:[%s6 + $0x204] sm:$0xf]
        %v3496 = vld [vmem:[%s6 + $0x208] sm:$0xf]
        %v3497 = vld [vmem:[%s6 + $0x20c] sm:$0xf]
        %v3498 = vld [vmem:[%s6 + $0x210] sm:$0xf]
        %v3499 = vld [vmem:[%s6 + $0x214] sm:$0xf]
        %v3500 = vld [vmem:[%s6 + $0x218] sm:$0xf]
        %v3501 = vld [vmem:[%s6 + $0x21c] sm:$0xf]
        %v3502 = vld [vmem:[%s6 + $0x220] sm:$0xf]
        %v3503 = vld [vmem:[%s6 + $0x224] sm:$0xf]
        %v3504 = vld [vmem:[%s6 + $0x228] sm:$0xf]
        %v3505 = vld [vmem:[%s6 + $0x22c] sm:$0xf]
        %v3506 = vld [vmem:[%s6 + $0x230] sm:$0xf]
        %v3507 = vld [vmem:[%s6 + $0x234] sm:$0xf]
        %v3508 = vld [vmem:[%s6 + $0x238] sm:$0xf]
        %v3509 = vld [vmem:[%s6 + $0x23c] sm:$0xf]
        %v3550 = vunpack.c.l.b16 %v3326
        %v3551 = vunpack.c.h.b16 %v3326
        %v3552 = vunpack.c.l.b16 %v3327
        %v3553 = vunpack.c.h.b16 %v3327
        %v3554 = vunpack.c.l.b16 %v3328
        %v3555 = vunpack.c.h.b16 %v3328
        %v3556 = vunpack.c.l.b16 %v3329
        %v3557 = vunpack.c.h.b16 %v3329
        %v3558 = vunpack.c.l.b16 %v3330
        %v3559 = vunpack.c.l.b16 %v3331
        %v3560 = vunpack.c.h.b16 %v3331
        %v3561 = vunpack.c.l.b16 %v3332
        %v3562 = vunpack.c.h.b16 %v3332
        %v3563 = vunpack.c.l.b16 %v3333
        %v3564 = vunpack.c.h.b16 %v3333
        %v3565 = vunpack.c.l.b16 %v3334
        %v3566 = vunpack.c.h.b16 %v3334
        %v3567 = vunpack.c.l.b16 %v3335
        %v3568 = vunpack.c.l.b16 %v3336
        %v3569 = vunpack.c.h.b16 %v3336
        %v3570 = vunpack.c.l.b16 %v3337
        %v3571 = vunpack.c.h.b16 %v3337
        %v3572 = vunpack.c.l.b16 %v3338
        %v3573 = vunpack.c.h.b16 %v3338
        %v3574 = vunpack.c.l.b16 %v3339
        %v3575 = vunpack.c.h.b16 %v3339
        %v3576 = vunpack.c.l.b16 %v3340
        %v3577 = vunpack.c.l.b16 %v3341
        %v3578 = vunpack.c.h.b16 %v3341
        %v3579 = vunpack.c.l.b16 %v3342
        %v3580 = vunpack.c.h.b16 %v3342
        %v3581 = vunpack.c.l.b16 %v3343
        %v3582 = vunpack.c.h.b16 %v3343
        %v3583 = vunpack.c.l.b16 %v3344
        %v3584 = vunpack.c.h.b16 %v3344
        %v3585 = vunpack.c.l.b16 %v3345
        %v3586 = vunpack.c.l.b16 %v3346
        %v3587 = vunpack.c.h.b16 %v3346
        %v3588 = vunpack.c.l.b16 %v3347
        %v3589 = vunpack.c.h.b16 %v3347
        %v3590 = vunpack.c.l.b16 %v3348
        %v3591 = vunpack.c.h.b16 %v3348
        %v3592 = vunpack.c.l.b16 %v3349
        %v3593 = vunpack.c.h.b16 %v3349
        %v3594 = vunpack.c.l.b16 %v3350
        %v3595 = vunpack.c.l.b16 %v3351
        %v3596 = vunpack.c.h.b16 %v3351
        %v3597 = vunpack.c.l.b16 %v3352
        %v3598 = vunpack.c.h.b16 %v3352
        %v3599 = vunpack.c.l.b16 %v3353
        %v3600 = vunpack.c.h.b16 %v3353
        %v3601 = vunpack.c.l.b16 %v3354
        %v3602 = vunpack.c.h.b16 %v3354
        %v3603 = vunpack.c.l.b16 %v3355
        %v3604 = vunpack.c.l.b16 %v3356
        %v3605 = vunpack.c.h.b16 %v3356
        %v3606 = vunpack.c.l.b16 %v3357
        %v3607 = vunpack.c.h.b16 %v3357
        %v3608 = vunpack.c.l.b16 %v3358
        %v3609 = vunpack.c.h.b16 %v3358
        %v3610 = vunpack.c.l.b16 %v3359
        %v3611 = vunpack.c.h.b16 %v3359
        %v3612 = vunpack.c.l.b16 %v3360
        %v3613 = vunpack.c.l.b16 %v3361
        %v3614 = vunpack.c.h.b16 %v3361
        %v3615 = vunpack.c.l.b16 %v3362
        %v3616 = vunpack.c.h.b16 %v3362
        %v3617 = vunpack.c.l.b16 %v3363
        %v3618 = vunpack.c.h.b16 %v3363
        %v3619 = vunpack.c.l.b16 %v3364
        %v3620 = vunpack.c.h.b16 %v3364
        %v3621 = vunpack.c.l.b16 %v3365
        %v3622 = vpack.c.b16 %v3559, %v3550
        %v3623 = vpack.c.b16 %v3560, %v3551
        %v3624 = vpack.c.b16 %v3561, %v3552
        %v3625 = vpack.c.b16 %v3562, %v3553
        %v3626 = vpack.c.b16 %v3563, %v3554
        %v3627 = vpack.c.b16 %v3564, %v3555
        %v3628 = vpack.c.b16 %v3565, %v3556
        %v3629 = vpack.c.b16 %v3566, %v3557
        %v3630 = vpack.c.b16 %v3567, %v3558
        %v3631 = vpack.c.b16 %v3577, %v3568
        %v3632 = vpack.c.b16 %v3578, %v3569
        %v3633 = vpack.c.b16 %v3579, %v3570
        %v3634 = vpack.c.b16 %v3580, %v3571
        %v3635 = vpack.c.b16 %v3581, %v3572
        %v3636 = vpack.c.b16 %v3582, %v3573
        %v3637 = vpack.c.b16 %v3583, %v3574
        %v3638 = vpack.c.b16 %v3584, %v3575
        %v3639 = vpack.c.b16 %v3585, %v3576
        %v3640 = vpack.c.b16 %v3595, %v3586
        %v3641 = vpack.c.b16 %v3596, %v3587
        %v3642 = vpack.c.b16 %v3597, %v3588
        %v3643 = vpack.c.b16 %v3598, %v3589
        %v3644 = vpack.c.b16 %v3599, %v3590
        %v3645 = vpack.c.b16 %v3600, %v3591
        %v3646 = vpack.c.b16 %v3601, %v3592
        %v3647 = vpack.c.b16 %v3602, %v3593
        %v3648 = vpack.c.b16 %v3603, %v3594
        %v3649 = vpack.c.b16 %v3613, %v3604
        %v3650 = vpack.c.b16 %v3614, %v3605
        %v3651 = vpack.c.b16 %v3615, %v3606
        %v3652 = vpack.c.b16 %v3616, %v3607
        %v3653 = vpack.c.b16 %v3617, %v3608
        %v3654 = vpack.c.b16 %v3618, %v3609
        %v3655 = vpack.c.b16 %v3619, %v3610
        %v3656 = vpack.c.b16 %v3620, %v3611
        %v3657 = vpack.c.b16 %v3621, %v3612
        %v3838 = vunpack.c.l.b16 %v3366
        %v3839 = vunpack.c.l.b16 %v3367
        %v3840 = vunpack.c.l.b16 %v3368
        %v3841 = vunpack.c.l.b16 %v3369
        %v3842 = vunpack.c.l.b16 %v3370
        %v3843 = vunpack.c.l.b16 %v3371
        %v3844 = vunpack.c.l.b16 %v3372
        %v3845 = vunpack.c.l.b16 %v3373
        %v3846 = vunpack.c.l.b16 %v3374
        %v3847 = vunpack.c.l.b16 %v3375
        %v3848 = vunpack.c.l.b16 %v3376
        %v3849 = vunpack.c.l.b16 %v3377
        %v3850 = vunpack.c.l.b16 %v3378
        %v3851 = vunpack.c.l.b16 %v3379
        %v3852 = vunpack.c.l.b16 %v3380
        %v3853 = vunpack.c.l.b16 %v3381
        %v3854 = vunpack.c.l.b16 %v3382
        %v3855 = vunpack.c.l.b16 %v3383
        %v3856 = vunpack.c.l.b16 %v3384
        %v3857 = vunpack.c.l.b16 %v3385
        %v3858 = vunpack.c.l.b16 %v3386
        %v3859 = vunpack.c.l.b16 %v3387
        %v3860 = vunpack.c.l.b16 %v3388
        %v3861 = vunpack.c.l.b16 %v3389
        %v3862 = vunpack.c.l.b16 %v3390
        %v3863 = vunpack.c.l.b16 %v3391
        %v3864 = vunpack.c.l.b16 %v3392
        %v3865 = vunpack.c.l.b16 %v3393
        %v3866 = vunpack.c.l.b16 %v3394
        %v3867 = vunpack.c.l.b16 %v3395
        %v3868 = vunpack.c.l.b16 %v3396
        %v3869 = vunpack.c.l.b16 %v3397
        %v3870 = vunpack.c.l.b16 %v3398
        %v3871 = vunpack.c.l.b16 %v3399
        %v3872 = vunpack.c.l.b16 %v3400
        %v3873 = vunpack.c.l.b16 %v3401
        %v3874 = vunpack.c.l.b16 %v3402
        %v3875 = vunpack.c.l.b16 %v3403
        %v3876 = vunpack.c.l.b16 %v3404
        %v3877 = vunpack.c.l.b16 %v3405
        %v3878 = vunpack.c.l.b16 %v3406
        %v3879 = vunpack.c.l.b16 %v3407
        %v3880 = vunpack.c.l.b16 %v3408
        %v3881 = vunpack.c.l.b16 %v3409
        %v3882 = vunpack.c.l.b16 %v3410
        %v3883 = vunpack.c.l.b16 %v3411
        %v3884 = vunpack.c.l.b16 %v3412
        %v3885 = vunpack.c.l.b16 %v3413
        %v3886 = vunpack.c.l.b16 %v3414
        %v3887 = vunpack.c.l.b16 %v3415
        %v3888 = vunpack.c.l.b16 %v3416
        %v3889 = vunpack.c.l.b16 %v3417
        %v3890 = vunpack.c.l.b16 %v3418
        %v3891 = vunpack.c.l.b16 %v3419
        %v3892 = vunpack.c.l.b16 %v3420
        %v3893 = vunpack.c.l.b16 %v3421
        %v3894 = vunpack.c.l.b16 %v3422
        %v3895 = vunpack.c.l.b16 %v3423
        %v3896 = vunpack.c.l.b16 %v3424
        %v3897 = vunpack.c.l.b16 %v3425
        %v3898 = vunpack.c.l.b16 %v3426
        %v3899 = vunpack.c.l.b16 %v3427
        %v3900 = vunpack.c.l.b16 %v3428
        %v3901 = vunpack.c.l.b16 %v3429
        %v3902 = vunpack.c.l.b16 %v3430
        %v3903 = vunpack.c.l.b16 %v3431
        %v3904 = vunpack.c.l.b16 %v3432
        %v3905 = vunpack.c.l.b16 %v3433
        %v3906 = vunpack.c.l.b16 %v3434
        %v3907 = vunpack.c.l.b16 %v3435
        %v3908 = vunpack.c.l.b16 %v3436
        %v3909 = vunpack.c.l.b16 %v3437
        %v3910 = vunpack.c.l.b16 %v3438
        %v3911 = vunpack.c.l.b16 %v3439
        %v3912 = vunpack.c.l.b16 %v3440
        %v3913 = vunpack.c.l.b16 %v3441
        %v3914 = vunpack.c.l.b16 %v3442
        %v3915 = vunpack.c.l.b16 %v3443
        %v3916 = vunpack.c.l.b16 %v3444
        %v3917 = vunpack.c.l.b16 %v3445
        %v3918 = vunpack.c.l.b16 %v3446
        %v3919 = vunpack.c.l.b16 %v3447
        %v3920 = vunpack.c.l.b16 %v3448
        %v3921 = vunpack.c.l.b16 %v3449
        %v3922 = vunpack.c.l.b16 %v3450
        %v3923 = vunpack.c.l.b16 %v3451
        %v3924 = vunpack.c.l.b16 %v3452
        %v3925 = vunpack.c.l.b16 %v3453
        %v3926 = vunpack.c.l.b16 %v3454
        %v3927 = vunpack.c.l.b16 %v3455
        %v3928 = vunpack.c.l.b16 %v3456
        %v3929 = vunpack.c.l.b16 %v3457
        %v3930 = vunpack.c.l.b16 %v3458
        %v3931 = vunpack.c.l.b16 %v3459
        %v3932 = vunpack.c.l.b16 %v3460
        %v3933 = vunpack.c.l.b16 %v3461
        %v3934 = vunpack.c.l.b16 %v3462
        %v3935 = vunpack.c.l.b16 %v3463
        %v3936 = vunpack.c.l.b16 %v3464
        %v3937 = vunpack.c.l.b16 %v3465
        %v3938 = vunpack.c.l.b16 %v3466
        %v3939 = vunpack.c.l.b16 %v3467
        %v3940 = vunpack.c.l.b16 %v3468
        %v3941 = vunpack.c.l.b16 %v3469
        %v3942 = vunpack.c.l.b16 %v3470
        %v3943 = vunpack.c.l.b16 %v3471
        %v3944 = vunpack.c.l.b16 %v3472
        %v3945 = vunpack.c.l.b16 %v3473
        %v3946 = vunpack.c.l.b16 %v3474
        %v3947 = vunpack.c.l.b16 %v3475
        %v3948 = vunpack.c.l.b16 %v3476
        %v3949 = vunpack.c.l.b16 %v3477
        %v3950 = vunpack.c.l.b16 %v3478
        %v3951 = vunpack.c.l.b16 %v3479
        %v3952 = vunpack.c.l.b16 %v3480
        %v3953 = vunpack.c.l.b16 %v3481
        %v3954 = vunpack.c.l.b16 %v3482
        %v3955 = vunpack.c.l.b16 %v3483
        %v3956 = vunpack.c.l.b16 %v3484
        %v3957 = vunpack.c.l.b16 %v3485
        %v3958 = vunpack.c.l.b16 %v3486
        %v3959 = vunpack.c.l.b16 %v3487
        %v3960 = vunpack.c.l.b16 %v3488
        %v3961 = vunpack.c.l.b16 %v3489
        %v3962 = vunpack.c.l.b16 %v3490
        %v3963 = vunpack.c.l.b16 %v3491
        %v3964 = vunpack.c.l.b16 %v3492
        %v3965 = vunpack.c.l.b16 %v3493
        %v3966 = vunpack.c.l.b16 %v3494
        %v3967 = vunpack.c.l.b16 %v3495
        %v3968 = vunpack.c.l.b16 %v3496
        %v3969 = vunpack.c.l.b16 %v3497
        %v3970 = vunpack.c.l.b16 %v3498
        %v3971 = vunpack.c.l.b16 %v3499
        %v3972 = vunpack.c.l.b16 %v3500
        %v3973 = vunpack.c.l.b16 %v3501
        %v3974 = vunpack.c.l.b16 %v3502
        %v3975 = vunpack.c.l.b16 %v3503
        %v3976 = vunpack.c.l.b16 %v3504
        %v3977 = vunpack.c.l.b16 %v3505
        %v3978 = vunpack.c.l.b16 %v3506
        %v3979 = vunpack.c.l.b16 %v3507
        %v3980 = vunpack.c.l.b16 %v3508
        %v3981 = vunpack.c.l.b16 %v3509
        %v3982 = vpack.c.b16 %v3839, %v3838
        %v3983 = vpack.c.b16 %v3841, %v3840
        %v3984 = vpack.c.b16 %v3843, %v3842
        %v3985 = vpack.c.b16 %v3845, %v3844
        %v3986 = vpack.c.b16 %v3847, %v3846
        %v3987 = vpack.c.b16 %v3849, %v3848
        %v3988 = vpack.c.b16 %v3851, %v3850
        %v3989 = vpack.c.b16 %v3853, %v3852
        %v3990 = vpack.c.b16 %v3855, %v3854
        %v3991 = vpack.c.b16 %v3857, %v3856
        %v3992 = vpack.c.b16 %v3859, %v3858
        %v3993 = vpack.c.b16 %v3861, %v3860
        %v3994 = vpack.c.b16 %v3863, %v3862
        %v3995 = vpack.c.b16 %v3865, %v3864
        %v3996 = vpack.c.b16 %v3867, %v3866
        %v3997 = vpack.c.b16 %v3869, %v3868
        %v3998 = vpack.c.b16 %v3871, %v3870
        %v3999 = vpack.c.b16 %v3873, %v3872
        %v4000 = vpack.c.b16 %v3875, %v3874
        %v4001 = vpack.c.b16 %v3877, %v3876
        %v4002 = vpack.c.b16 %v3879, %v3878
        %v4003 = vpack.c.b16 %v3881, %v3880
        %v4004 = vpack.c.b16 %v3883, %v3882
        %v4005 = vpack.c.b16 %v3885, %v3884
        %v4006 = vpack.c.b16 %v3887, %v3886
        %v4007 = vpack.c.b16 %v3889, %v3888
        %v4008 = vpack.c.b16 %v3891, %v3890
        %v4009 = vpack.c.b16 %v3893, %v3892
        %v4010 = vpack.c.b16 %v3895, %v3894
        %v4011 = vpack.c.b16 %v3897, %v3896
        %v4012 = vpack.c.b16 %v3899, %v3898
        %v4013 = vpack.c.b16 %v3901, %v3900
        %v4014 = vpack.c.b16 %v3903, %v3902
        %v4015 = vpack.c.b16 %v3905, %v3904
        %v4016 = vpack.c.b16 %v3907, %v3906
        %v4017 = vpack.c.b16 %v3909, %v3908
        %v4018 = vpack.c.b16 %v3911, %v3910
        %v4019 = vpack.c.b16 %v3913, %v3912
        %v4020 = vpack.c.b16 %v3915, %v3914
        %v4021 = vpack.c.b16 %v3917, %v3916
        %v4022 = vpack.c.b16 %v3919, %v3918
        %v4023 = vpack.c.b16 %v3921, %v3920
        %v4024 = vpack.c.b16 %v3923, %v3922
        %v4025 = vpack.c.b16 %v3925, %v3924
        %v4026 = vpack.c.b16 %v3927, %v3926
        %v4027 = vpack.c.b16 %v3929, %v3928
        %v4028 = vpack.c.b16 %v3931, %v3930
        %v4029 = vpack.c.b16 %v3933, %v3932
        %v4030 = vpack.c.b16 %v3935, %v3934
        %v4031 = vpack.c.b16 %v3937, %v3936
        %v4032 = vpack.c.b16 %v3939, %v3938
        %v4033 = vpack.c.b16 %v3941, %v3940
        %v4034 = vpack.c.b16 %v3943, %v3942
        %v4035 = vpack.c.b16 %v3945, %v3944
        %v4036 = vpack.c.b16 %v3947, %v3946
        %v4037 = vpack.c.b16 %v3949, %v3948
        %v4038 = vpack.c.b16 %v3951, %v3950
        %v4039 = vpack.c.b16 %v3953, %v3952
        %v4040 = vpack.c.b16 %v3955, %v3954
        %v4041 = vpack.c.b16 %v3957, %v3956
        %v4042 = vpack.c.b16 %v3959, %v3958
        %v4043 = vpack.c.b16 %v3961, %v3960
        %v4044 = vpack.c.b16 %v3963, %v3962
        %v4045 = vpack.c.b16 %v3965, %v3964
        %v4046 = vpack.c.b16 %v3967, %v3966
        %v4047 = vpack.c.b16 %v3969, %v3968
        %v4048 = vpack.c.b16 %v3971, %v3970
        %v4049 = vpack.c.b16 %v3973, %v3972
        %v4050 = vpack.c.b16 %v3975, %v3974
        %v4051 = vpack.c.b16 %v3977, %v3976
        %v4052 = vpack.c.b16 %v3979, %v3978
        %v4053 = vpack.c.b16 %v3981, %v3980
        %4126 = vmatpush.bf16.msra.mxu0 %v3989
        %4127 = vmatpush.bf16.msra.mxu0 %v3988
        %4128 = vmatpush.bf16.msra.mxu0 %v3987
        %4129 = vmatpush.bf16.msra.mxu0 %v3986
        %4130 = vmatpush.bf16.msra.mxu0 %v3985
        %4131 = vmatpush.bf16.msra.mxu0 %v3984
        %4132 = vmatpush.bf16.msra.mxu0 %v3983
        %4133 = vmatpush.bf16.msra.mxu0 %v3982
        %4134 = vmatmul.bf16.gmra.mxu0 %v3622
        %v4135 = vpop.f32.mrf.mxu0
        %v4136 = vadd.f32 %v2389, %v4135
        %v4137 = vpop.f32.mrf.mxu0
        %v4138 = vadd.f32 %v2391, %v4137
        %4139 = vmatmul.bf16.gmra.mxu0 %v3631
        %v4140 = vpop.f32.mrf.mxu0
        %v4141 = vadd.f32 %v2394, %v4140
        %v4142 = vpop.f32.mrf.mxu0
        %v4143 = vadd.f32 %v2396, %v4142
        %4144 = vmatmul.bf16.gmra.mxu0 %v3640
        %v4145 = vpop.f32.mrf.mxu0
        %v4146 = vadd.f32 %v2399, %v4145
        %v4147 = vpop.f32.mrf.mxu0
        %v4148 = vadd.f32 %v2401, %v4147
        %4149 = vmatmul.bf16.gmra.mxu0 %v3649
        %v4150 = vpop.f32.mrf.mxu0
        %v4151 = vadd.f32 %v2404, %v4150
        %v4152 = vpop.f32.mrf.mxu0
        %v4153 = vadd.f32 %v2406, %v4152
        %4154 = vdwg.mxu0
        %4155 = vmatpush.bf16.msra.mxu0 %v3997
        %4156 = vmatpush.bf16.msra.mxu0 %v3996
        %4157 = vmatpush.bf16.msra.mxu0 %v3995
        %4158 = vmatpush.bf16.msra.mxu0 %v3994
        %4159 = vmatpush.bf16.msra.mxu0 %v3993
        %4160 = vmatpush.bf16.msra.mxu0 %v3992
        %4161 = vmatpush.bf16.msra.mxu0 %v3991
        %4162 = vmatpush.bf16.msra.mxu0 %v3990
        %4163 = vmatmul.bf16.gmra.mxu0 %v3623
        %v4164 = vpop.f32.mrf.mxu0
        %v4165 = vadd.f32 %v4136, %v4164
        %v4166 = vpop.f32.mrf.mxu0
        %v4167 = vadd.f32 %v4138, %v4166
        %4168 = vmatmul.bf16.gmra.mxu0 %v3632
        %v4169 = vpop.f32.mrf.mxu0
        %v4170 = vadd.f32 %v4141, %v4169
        %v4171 = vpop.f32.mrf.mxu0
        %v4172 = vadd.f32 %v4143, %v4171
        %4173 = vmatmul.bf16.gmra.mxu0 %v3641
        %v4174 = vpop.f32.mrf.mxu0
        %v4175 = vadd.f32 %v4146, %v4174
        %v4176 = vpop.f32.mrf.mxu0
        %v4177 = vadd.f32 %v4148, %v4176
        %4178 = vmatmul.bf16.gmra.mxu0 %v3650
        %v4179 = vpop.f32.mrf.mxu0
        %v4180 = vadd.f32 %v4151, %v4179
        %v4181 = vpop.f32.mrf.mxu0
        %v4182 = vadd.f32 %v4153, %v4181
        %4183 = vdwg.mxu0
        %4184 = vmatpush.bf16.msra.mxu0 %v4005
        %4185 = vmatpush.bf16.msra.mxu0 %v4004
        %4186 = vmatpush.bf16.msra.mxu0 %v4003
        %4187 = vmatpush.bf16.msra.mxu0 %v4002
        %4188 = vmatpush.bf16.msra.mxu0 %v4001
        %4189 = vmatpush.bf16.msra.mxu0 %v4000
        %4190 = vmatpush.bf16.msra.mxu0 %v3999
        %4191 = vmatpush.bf16.msra.mxu0 %v3998
        %4192 = vmatmul.bf16.gmra.mxu0 %v3624
        %v4193 = vpop.f32.mrf.mxu0
        %v4194 = vadd.f32 %v4165, %v4193
        %v4195 = vpop.f32.mrf.mxu0
        %v4196 = vadd.f32 %v4167, %v4195
        %4197 = vmatmul.bf16.gmra.mxu0 %v3633
        %v4198 = vpop.f32.mrf.mxu0
        %v4199 = vadd.f32 %v4170, %v4198
        %v4200 = vpop.f32.mrf.mxu0
        %v4201 = vadd.f32 %v4172, %v4200
        %4202 = vmatmul.bf16.gmra.mxu0 %v3642
        %v4203 = vpop.f32.mrf.mxu0
        %v4204 = vadd.f32 %v4175, %v4203
        %v4205 = vpop.f32.mrf.mxu0
        %v4206 = vadd.f32 %v4177, %v4205
        %4207 = vmatmul.bf16.gmra.mxu0 %v3651
        %v4208 = vpop.f32.mrf.mxu0
        %v4209 = vadd.f32 %v4180, %v4208
        %v4210 = vpop.f32.mrf.mxu0
        %v4211 = vadd.f32 %v4182, %v4210
        %4212 = vdwg.mxu0
        %4213 = vmatpush.bf16.msra.mxu0 %v4013
        %4214 = vmatpush.bf16.msra.mxu0 %v4012
        %4215 = vmatpush.bf16.msra.mxu0 %v4011
        %4216 = vmatpush.bf16.msra.mxu0 %v4010
        %4217 = vmatpush.bf16.msra.mxu0 %v4009
        %4218 = vmatpush.bf16.msra.mxu0 %v4008
        %4219 = vmatpush.bf16.msra.mxu0 %v4007
        %4220 = vmatpush.bf16.msra.mxu0 %v4006
        %4221 = vmatmul.bf16.gmra.mxu0 %v3625
        %v4222 = vpop.f32.mrf.mxu0
        %v4223 = vadd.f32 %v4194, %v4222
        %v4224 = vpop.f32.mrf.mxu0
        %v4225 = vadd.f32 %v4196, %v4224
        %4226 = vmatmul.bf16.gmra.mxu0 %v3634
        %v4227 = vpop.f32.mrf.mxu0
        %v4228 = vadd.f32 %v4199, %v4227
        %v4229 = vpop.f32.mrf.mxu0
        %v4230 = vadd.f32 %v4201, %v4229
        %4231 = vmatmul.bf16.gmra.mxu0 %v3643
        %v4232 = vpop.f32.mrf.mxu0
        %v4233 = vadd.f32 %v4204, %v4232
        %v4234 = vpop.f32.mrf.mxu0
        %v4235 = vadd.f32 %v4206, %v4234
        %4236 = vmatmul.bf16.gmra.mxu0 %v3652
        %v4237 = vpop.f32.mrf.mxu0
        %v4238 = vadd.f32 %v4209, %v4237
        %v4239 = vpop.f32.mrf.mxu0
        %v4240 = vadd.f32 %v4211, %v4239
        %4241 = vdwg.mxu0
        %4242 = vmatpush.bf16.msra.mxu0 %v4021
        %4243 = vmatpush.bf16.msra.mxu0 %v4020
        %4244 = vmatpush.bf16.msra.mxu0 %v4019
        %4245 = vmatpush.bf16.msra.mxu0 %v4018
        %4246 = vmatpush.bf16.msra.mxu0 %v4017
        %4247 = vmatpush.bf16.msra.mxu0 %v4016
        %4248 = vmatpush.bf16.msra.mxu0 %v4015
        %4249 = vmatpush.bf16.msra.mxu0 %v4014
        %4250 = vmatmul.bf16.gmra.mxu0 %v3626
        %v4251 = vpop.f32.mrf.mxu0
        %v4252 = vadd.f32 %v4223, %v4251
        %v4253 = vpop.f32.mrf.mxu0
        %v4254 = vadd.f32 %v4225, %v4253
        %4255 = vmatmul.bf16.gmra.mxu0 %v3635
        %v4256 = vpop.f32.mrf.mxu0
        %v4257 = vadd.f32 %v4228, %v4256
        %v4258 = vpop.f32.mrf.mxu0
        %v4259 = vadd.f32 %v4230, %v4258
        %4260 = vmatmul.bf16.gmra.mxu0 %v3644
        %v4261 = vpop.f32.mrf.mxu0
        %v4262 = vadd.f32 %v4233, %v4261
        %v4263 = vpop.f32.mrf.mxu0
        %v4264 = vadd.f32 %v4235, %v4263
        %4265 = vmatmul.bf16.gmra.mxu0 %v3653
        %v4266 = vpop.f32.mrf.mxu0
        %v4267 = vadd.f32 %v4238, %v4266
        %v4268 = vpop.f32.mrf.mxu0
        %v4269 = vadd.f32 %v4240, %v4268
        %4270 = vdwg.mxu0
        %4271 = vmatpush.bf16.msra.mxu0 %v4029
        %4272 = vmatpush.bf16.msra.mxu0 %v4028
        %4273 = vmatpush.bf16.msra.mxu0 %v4027
        %4274 = vmatpush.bf16.msra.mxu0 %v4026
        %4275 = vmatpush.bf16.msra.mxu0 %v4025
        %4276 = vmatpush.bf16.msra.mxu0 %v4024
        %4277 = vmatpush.bf16.msra.mxu0 %v4023
        %4278 = vmatpush.bf16.msra.mxu0 %v4022
        %4279 = vmatmul.bf16.gmra.mxu0 %v3627
        %v4280 = vpop.f32.mrf.mxu0
        %v4281 = vadd.f32 %v4252, %v4280
        %v4282 = vpop.f32.mrf.mxu0
        %v4283 = vadd.f32 %v4254, %v4282
        %4284 = vmatmul.bf16.gmra.mxu0 %v3636
        %v4285 = vpop.f32.mrf.mxu0
        %v4286 = vadd.f32 %v4257, %v4285
        %v4287 = vpop.f32.mrf.mxu0
        %v4288 = vadd.f32 %v4259, %v4287
        %4289 = vmatmul.bf16.gmra.mxu0 %v3645
        %v4290 = vpop.f32.mrf.mxu0
        %v4291 = vadd.f32 %v4262, %v4290
        %v4292 = vpop.f32.mrf.mxu0
        %v4293 = vadd.f32 %v4264, %v4292
        %4294 = vmatmul.bf16.gmra.mxu0 %v3654
        %v4295 = vpop.f32.mrf.mxu0
        %v4296 = vadd.f32 %v4267, %v4295
        %v4297 = vpop.f32.mrf.mxu0
        %v4298 = vadd.f32 %v4269, %v4297
        %4299 = vdwg.mxu0
        %4300 = vmatpush.bf16.msra.mxu0 %v4037
        %4301 = vmatpush.bf16.msra.mxu0 %v4036
        %4302 = vmatpush.bf16.msra.mxu0 %v4035
        %4303 = vmatpush.bf16.msra.mxu0 %v4034
        %4304 = vmatpush.bf16.msra.mxu0 %v4033
        %4305 = vmatpush.bf16.msra.mxu0 %v4032
        %4306 = vmatpush.bf16.msra.mxu0 %v4031
        %4307 = vmatpush.bf16.msra.mxu0 %v4030
        %4308 = vmatmul.bf16.gmra.mxu0 %v3628
        %v4309 = vpop.f32.mrf.mxu0
        %v4310 = vadd.f32 %v4281, %v4309
        %v4311 = vpop.f32.mrf.mxu0
        %v4312 = vadd.f32 %v4283, %v4311
        %4313 = vmatmul.bf16.gmra.mxu0 %v3637
        %v4314 = vpop.f32.mrf.mxu0
        %v4315 = vadd.f32 %v4286, %v4314
        %v4316 = vpop.f32.mrf.mxu0
        %v4317 = vadd.f32 %v4288, %v4316
        %4318 = vmatmul.bf16.gmra.mxu0 %v3646
        %v4319 = vpop.f32.mrf.mxu0
        %v4320 = vadd.f32 %v4291, %v4319
        %v4321 = vpop.f32.mrf.mxu0
        %v4322 = vadd.f32 %v4293, %v4321
        %4323 = vmatmul.bf16.gmra.mxu0 %v3655
        %v4324 = vpop.f32.mrf.mxu0
        %v4325 = vadd.f32 %v4296, %v4324
        %v4326 = vpop.f32.mrf.mxu0
        %v4327 = vadd.f32 %v4298, %v4326
        %4328 = vdwg.mxu0
        %4329 = vmatpush.bf16.msra.mxu0 %v4045
        %4330 = vmatpush.bf16.msra.mxu0 %v4044
        %4331 = vmatpush.bf16.msra.mxu0 %v4043
        %4332 = vmatpush.bf16.msra.mxu0 %v4042
        %4333 = vmatpush.bf16.msra.mxu0 %v4041
        %4334 = vmatpush.bf16.msra.mxu0 %v4040
        %4335 = vmatpush.bf16.msra.mxu0 %v4039
        %4336 = vmatpush.bf16.msra.mxu0 %v4038
        %4337 = vmatmul.bf16.gmra.mxu0 %v3629
        %v4338 = vpop.f32.mrf.mxu0
        %v4339 = vadd.f32 %v4310, %v4338
        %v4340 = vpop.f32.mrf.mxu0
        %v4341 = vadd.f32 %v4312, %v4340
        %4342 = vmatmul.bf16.gmra.mxu0 %v3638
        %v4343 = vpop.f32.mrf.mxu0
        %v4344 = vadd.f32 %v4315, %v4343
        %v4345 = vpop.f32.mrf.mxu0
        %v4346 = vadd.f32 %v4317, %v4345
        %4347 = vmatmul.bf16.gmra.mxu0 %v3647
        %v4348 = vpop.f32.mrf.mxu0
        %v4349 = vadd.f32 %v4320, %v4348
        %v4350 = vpop.f32.mrf.mxu0
        %v4351 = vadd.f32 %v4322, %v4350
        %4352 = vmatmul.bf16.gmra.mxu0 %v3656
        %v4353 = vpop.f32.mrf.mxu0
        %v4354 = vadd.f32 %v4325, %v4353
        %v4355 = vpop.f32.mrf.mxu0
        %v4356 = vadd.f32 %v4327, %v4355
        %4357 = vdwg.mxu0
        %4358 = vmatpush.bf16.msra.mxu0 %v4053
        %4359 = vmatpush.bf16.msra.mxu0 %v4052
        %4360 = vmatpush.bf16.msra.mxu0 %v4051
        %4361 = vmatpush.bf16.msra.mxu0 %v4050
        %4362 = vmatpush.bf16.msra.mxu0 %v4049
        %4363 = vmatpush.bf16.msra.mxu0 %v4048
        %4364 = vmatpush.bf16.msra.mxu0 %v4047
        %4365 = vmatpush.bf16.msra.mxu0 %v4046
        %4366 = vmatmul.bf16.gmra.mxu0 %v3630
        %v4367 = vpop.f32.mrf.mxu0
        %v4368 = vadd.f32 %v4339, %v4367
        %v4369 = vpop.f32.mrf.mxu0
        %v4370 = vadd.f32 %v4341, %v4369
        %4371 = vmatmul.bf16.gmra.mxu0 %v3639
        %v4372 = vpop.f32.mrf.mxu0
        %v4373 = vadd.f32 %v4344, %v4372
        %v4374 = vpop.f32.mrf.mxu0
        %v4375 = vadd.f32 %v4346, %v4374
        %4376 = vmatmul.bf16.gmra.mxu0 %v3648
        %v4377 = vpop.f32.mrf.mxu0
        %v4378 = vadd.f32 %v4349, %v4377
        %v4379 = vpop.f32.mrf.mxu0
        %v4380 = vadd.f32 %v4351, %v4379
        %4381 = vmatmul.bf16.gmra.mxu0 %v3657
        %v4382 = vpop.f32.mrf.mxu0
        %v4383 = vadd.f32 %v4354, %v4382
        %v4384 = vpop.f32.mrf.mxu0
        %v4385 = vadd.f32 %v4356, %v4384
        %4386 = vdwg.mxu0
        %4387 = vst [vmem:[%s271] sm:$0xff] %v4368
        %4388 = vst [vmem:[%s271 + $0x8] sm:$0xff] %v4370
        %4389 = vst [vmem:[%s271 + $0x10] sm:$0xff] %v4373
        %4390 = vst [vmem:[%s271 + $0x18] sm:$0xff] %v4375
        %4391 = vst [vmem:[%s271 + $0x20] sm:$0xff] %v4378
        %4392 = vst [vmem:[%s271 + $0x28] sm:$0xff] %v4380
        %4393 = vst [vmem:[%s271 + $0x30] sm:$0xff] %v4383
        %4394 = vst [vmem:[%s271 + $0x38] sm:$0xff] %v4385
        %s4395 = sand.u32 %s181, 1
        %s4396 = scalar_lea.sflag [#allocation7], %s4395
        %s4397 = sand.u32 %s181, 1
        %s4398 = smul.addr %s4397, 64
        %s4399 = scalar_lea.vmem [#allocation6], %s4398
        // Predicated region
        $region49: #{preact_block_forward.1} parent=47 // pred_check
          %p4400 = pneg %p191
        $region50: #{preact_block_forward.1} parent=47 // pred_check_branch
          %4402 = sbr.rel (%p4400) target = $region52
        $region51: #{preact_block_forward.1} parent=47 // pred_region
          %4404 = vsyncadd %s4396, 0
          %s4405 = smul.addr %s21, 8
          %s4406 = smul.addr %s4405, 8
          %s4407 = scalar_lea.hbm %s7, %s4406
          %s4408 = sshll.u32 %s4399, 4
          %s4409 = int_to_ptr.vmem [resolvable:$true] %s4408
          %s4410 = sshll.u32 %s4407, 4
          %s4411 = int_to_ptr.hbm [resolvable:$true] %s4410
          %4416 = dma.vmem_to_hbm [thread:$0]  %s4409, 1024, %s4411, %s4396, 128, 128, 8
        $region52: #{preact_block_forward.1} parent=47 // pred_fallthru
          _
      $region48: #{preact_block_forward.1} parent=5 // pred_fallthru
        _
      %p4417 = scmp.le.s32.totalorder 2, %s16
      // Predicated region
      $region53: #{preact_block_forward.1} parent=5 // pred_check
        %p4418 = pneg %p4417
      $region54: #{preact_block_forward.1} parent=5 // pred_check_branch
        %4420 = sbr.rel (%p4418) target = $region56
      $region55: #{preact_block_forward.1} parent=5 // pred_region
        %s4421 = ssub.s32 %s16, 2
        // Predicated region
        $region57: #{preact_block_forward.1} parent=55 // pred_check
          %p4422 = pneg %p197
        $region58: #{preact_block_forward.1} parent=55 // pred_check_branch
          %4424 = sbr.rel (%p4422) target = $region60
        $region59: #{preact_block_forward.1} parent=55 // pred_region
          %s4425 = sand.u32 %s182, 1
          %s4426 = scalar_lea.sflag [#allocation7], %s4425
          %s4427 = sand.u32 %s182, 1
          %s4428 = smul.addr %s4427, 64
          %s4429 = scalar_lea.vmem [#allocation6], %s4428
          %4431 = dma.done %s4426, 1024
        $region60: #{preact_block_forward.1} parent=55 // pred_fallthru
          _
      $region56: #{preact_block_forward.1} parent=5 // pred_fallthru
        _
    $region6: #{preact_block_forward.1} parent=1 // loop_footer
      %s20 = sadd.s32 1, %s16
    $region7: #{preact_block_forward.1} parent=1 // loop_footer_branch
      %15 = sbr.rel target = $region3
    $region8: #{preact_block_forward.1} parent=1 // loop_exit
      _
    %4432 = vsyncpa [#allocation7], 1
    %s4433 = scalar_lea.sflag [#allocation7], 1
    %4434 = vsyncpa %s4433, 1

</llo_original>
